<compile_context>
chip_gen: v7x
topology: tpu7x:2x2x1
jax: 0.10.0
libtpu: 0.0.40
codegen_flags: <defaults>
</compile_context>

<pallas_src>
import jax
import jax.numpy as jnp
from jax import lax
from jax.experimental import pallas as pl
from jax.experimental.pallas import tpu as pltpu

FEAT_IN = 14 * 14 * 1    # 196  (enc1 input,  HWC flat)
FEAT_E1 = 14 * 14 * 5    # 980  (enc1 output)
FEAT_E2 = 7 * 7 * 10     # 490  (enc2 output / dec1 input)
FEAT_D1 = 13 * 13 * 5    # 845  (dec1 output)
FEAT_OUT = 14 * 14 * 1   # 196  (dec2 output)


def _round_up(x, m):
    return (x + m - 1) // m * m


# ----------------------------- fused Pallas kernel -------------------------- #

def _vae_forward_kernel(x_ref, n_ref,
                        we1, be1, we2, be2,
                        wf1, bf1, wmu, bmu, wlv, blv,
                        wdi, bdi, wd1, bd1, wd2, bd2,
                        o_ref):
    """One batch tile of the whole VAE forward.  8 MXU matmuls back-to-back;
    all intermediates stay in vregs/VMEM, single HBM write of the output."""
    cdt = we1.dtype                                   # bf16 MXU operand dtype

    def mm(a, w_ref, b_ref):                          # bf16 x bf16 -> f32 + f32 bias
        return jnp.dot(a, w_ref[...], preferred_element_type=jnp.float32) + b_ref[...]

    def sigmoid(a):
        # f32 epilogue: exp on the EUP + approx reciprocal on the EUP
        # (keeps the activation off the VALU, which matters on v5e).
        return pl.reciprocal(1.0 + jnp.exp(-a), approx=True)

    h = sigmoid(mm(x_ref[...], we1, be1))             # enc1 -> [TB, 980]
    h = sigmoid(mm(h.astype(cdt), we2, be2))          # enc2 -> [TB, 490]
    h1 = mm(h.astype(cdt), wf1, bf1)                  # fc1  -> [TB, 50]   (no act)
    h1c = h1.astype(cdt)
    mu = mm(h1c, wmu, bmu)                            # [TB, 5]
    log_var = mm(h1c, wlv, blv)                       # [TB, 5]
    z = mu + jnp.exp(log_var) * n_ref[...]            # reparam exactly as the module
    h = mm(z.astype(cdt), wdi, bdi)                   # fc2·fc3 folded -> [TB, 490]
    h = sigmoid(mm(h.astype(cdt), wd1, bd1))          # dec1 -> [TB, 845]
    h = sigmoid(mm(h.astype(cdt), wd2, bd2))          # dec2 -> [TB, 196]
    o_ref[...] = h.astype(o_ref.dtype)                # bf16, lane-dense store


def net_forward(pk, x, noise_key, *, tb=512):
    """x: [B,1,14,14] NCHW (like PyTorch) -> [B,1,14,14] (bf16)."""
    B = x.shape[0]
    xf = x.reshape(B, FEAT_IN).astype(jnp.bfloat16)          # C=1: CHW flat == HWC flat
    noise = jax.random.normal(noise_key, (B, 5), jnp.float32)  # torch.randn_like

    tb = _round_up(min(tb, _round_up(B, 16)), 16)            # bf16 sublane tile = 16
    Bp = _round_up(B, tb)
    if Bp != B:
        xf = jnp.pad(xf, ((0, Bp - B), (0, 0)))
        noise = jnp.pad(noise, ((0, Bp - B), (0, 0)))

    wargs = (pk["enc1_w"], pk["enc1_b"], pk["enc2_w"], pk["enc2_b"],
             pk["fc1_w"], pk["fc1_b"], pk["mu_w"], pk["mu_b"],
             pk["lv_w"], pk["lv_b"], pk["dec_in_w"], pk["dec_in_b"],
             pk["dec1_w"], pk["dec1_b"], pk["dec2_w"], pk["dec2_b"])

    tile = lambda i: (i, 0)
    fixed = lambda i: (0, 0)                                  # weights stay VMEM-resident
    in_specs = ([pl.BlockSpec((tb, FEAT_IN), tile),
                 pl.BlockSpec((tb, 5), tile)]
                + [pl.BlockSpec(w.shape, fixed) for w in wargs])

    out = pl.pallas_call(
        _vae_forward_kernel,
        out_shape=jax.ShapeDtypeStruct((Bp, FEAT_OUT), jnp.bfloat16),
        grid=(Bp // tb,),
        in_specs=in_specs,
        out_specs=pl.BlockSpec((tb, FEAT_OUT), tile),
        compiler_params=pltpu.CompilerParams(
            dimension_semantics=("parallel",),
            vmem_limit_bytes=48 * 1024 * 1024),               # < 64 MiB v7x physical
    )(xf, noise, *wargs)

    out = out[:B] if Bp != B else out
    return out.reshape(B, 1, 14, 14)                          # C=1: HWC flat == CHW flat


# ------------------------------- Parameters -------------------------------- #

def init_params(key):
    """PyTorch-layout parameters with PyTorch-default uniform init."""
    def uni(k, shape, fan_in):
        bound = 1.0 / jnp.sqrt(float(fan_in))
        return jax.random.uniform(k, shape, jnp.float32, -bound, bound)

    ks = jax.random.split(key, 18)
    p = {}
    p["enc1_w"] = uni(ks[0], (5, 1, 3, 3), 1 * 3 * 3)        # Conv2d [Cout,Cin,kh,kw]
    p["enc1_b"] = uni(ks[1], (5,), 1 * 3 * 3)
    p["enc2_w"] = uni(ks[2], (10, 5, 2, 2), 5 * 2 * 2)
    p["enc2_b"] = uni(ks[3], (10,), 5 * 2 * 2)
    p["fc1_w"] = uni(ks[4], (490, 50), 490)                  # Linear stored [in,out], CHW rows
    p["fc1_b"] = uni(ks[5], (50,), 490)
    p["mu_w"] = uni(ks[6], (50, 5), 50)
    p["mu_b"] = uni(ks[7], (5,), 50)
    p["lv_w"] = uni(ks[8], (50, 5), 50)
    p["lv_b"] = uni(ks[9], (5,), 50)
    p["fc2_w"] = uni(ks[10], (5, 50), 5)
    p["fc2_b"] = uni(ks[11], (50,), 5)
    p["fc3_w"] = uni(ks[12], (50, 490), 50)                  # CHW cols
    p["fc3_b"] = uni(ks[13], (490,), 50)
    p["dec1_w"] = uni(ks[14], (10, 5, 3, 3), 5 * 3 * 3)      # ConvT [Cin,Cout,kh,kw]
    p["dec1_b"] = uni(ks[15], (5,), 5 * 3 * 3)
    p["dec2_w"] = uni(ks[16], (5, 1, 2, 2), 1 * 2 * 2)
    p["dec2_b"] = uni(ks[17], (1,), 1 * 2 * 2)
    return p


def _conv_dense(w_oihw, H, W, stride, pad):
    """Conv2d -> exact dense matrix [H*W*Cin, Ho*Wo*Cout], HWC flat both sides.
    Built once at pack time by pushing an identity basis through lax.conv."""
    _, cin, _, _ = w_oihw.shape
    eye = jnp.eye(H * W * cin, dtype=jnp.float32).reshape(-1, H, W, cin)
    out = lax.conv_general_dilated(
        eye, w_oihw.astype(jnp.float32),
        window_strides=(stride, stride), padding=((pad, pad), (pad, pad)),
        dimension_numbers=("NHWC", "OIHW", "NHWC"))
    n, Ho, Wo, co = out.shape
    return out.reshape(n, Ho * Wo * co)


def _convT_dense(w_iohw, H, W, stride, pad):
    """ConvTranspose2d -> dense matrix.  Standard equivalence: interior-dilate
    input by (stride-1), flip kernel spatially, swap in/out channels, pad k-1-p."""
    cin, cout, kh, kw = w_iohw.shape
    w_conv = jnp.flip(w_iohw, axis=(2, 3)).transpose(1, 0, 2, 3)   # [Cout,Cin,kh,kw]
    eye = jnp.eye(H * W * cin, dtype=jnp.float32).reshape(-1, H, W, cin)
    out = lax.conv_general_dilated(
        eye, w_conv.astype(jnp.float32),
        window_strides=(1, 1),
        padding=((kh - 1 - pad, kh - 1 - pad), (kw - 1 - pad, kw - 1 - pad)),
        lhs_dilation=(stride, stride),
        dimension_numbers=("NHWC", "OIHW", "NHWC"))
    n, Ho, Wo, co = out.shape
    return out.reshape(n, Ho * Wo * co)


def _conv_dense_bias(b, Ho, Wo):
    return jnp.tile(b, Ho * Wo)            # HWC-flat per-position bias


def pack_params(p):
    """One-time relayout: dense conv matrices, torch-CHW <-> HWC permutations,
    fc2·fc3 fold (no activation between them), bf16 weights, [1,N] f32 biases."""
    # PyTorch flattens enc2 output as (C,H,W); the dense-conv pipeline is (H,W,C).
    perm = jnp.arange(FEAT_E2).reshape(10, 7, 7).transpose(1, 2, 0).reshape(-1)
    row = lambda v: v.reshape(1, -1).astype(jnp.float32)
    bf = lambda m: m.astype(jnp.bfloat16)

    we1 = _conv_dense(p["enc1_w"], 14, 14, 1, 1)       # [196, 980]
    we2 = _conv_dense(p["enc2_w"], 14, 14, 2, 0)       # [980, 490]
    wd1 = _convT_dense(p["dec1_w"], 7, 7, 2, 1)        # [490, 845]
    wd2 = _convT_dense(p["dec2_w"], 13, 13, 1, 0)      # [845, 196]

    # fc3 columns permuted to HWC, then fc2·fc3 folded in f32 (forward-only fold).
    w3p = p["fc3_w"][:, perm]
    b3p = p["fc3_b"][perm]
    wdi = p["fc2_w"] @ w3p                              # [5, 490]
    bdi = p["fc2_b"] @ w3p + b3p                        # [490]

    return {
        "enc1_w": bf(we1), "enc1_b": row(_conv_dense_bias(p["enc1_b"], 14, 14)),
        "enc2_w": bf(we2), "enc2_b": row(_conv_dense_bias(p["enc2_b"], 7, 7)),
        "fc1_w": bf(p["fc1_w"][perm, :]), "fc1_b": row(p["fc1_b"]),
        "mu_w": bf(p["mu_w"]), "mu_b": row(p["mu_b"]),
        "lv_w": bf(p["lv_w"]), "lv_b": row(p["lv_b"]),
        "dec_in_w": bf(wdi), "dec_in_b": row(bdi),
        "dec1_w": bf(wd1), "dec1_b": row(_conv_dense_bias(p["dec1_b"], 13, 13)),
        "dec2_w": bf(wd2), "dec2_b": row(_conv_dense_bias(p["dec2_b"], 14, 14)),
    }


# ------------------------ pure-JAX f32 reference (check) -------------------- #

def net_forward_ref(p, x, noise_key):
    dn = ("NCHW", "OIHW", "NCHW")

    def conv(h, w, b, stride, pad):
        o = lax.conv_general_dilated(h, w, (stride, stride),
                                     ((pad, pad), (pad, pad)), dimension_numbers=dn)
        return o + b.reshape(1, -1, 1, 1)

    def convT(h, w_iohw, b, stride, pad):
        k = w_iohw.shape[2]
        w_conv = jnp.flip(w_iohw, axis=(2, 3)).transpose(1, 0, 2, 3)
        o = lax.conv_general_dilated(h, w_conv, (1, 1),
                                     ((k - 1 - pad, k - 1 - pad),) * 2,
                                     lhs_dilation=(stride, stride),
                                     dimension_numbers=dn)
        return o + b.reshape(1, -1, 1, 1)

    B = x.shape[0]
    h = jax.nn.sigmoid(conv(x, p["enc1_w"], p["enc1_b"], 1, 1))
    h = jax.nn.sigmoid(conv(h, p["enc2_w"], p["enc2_b"], 2, 0))
    h = h.reshape(B, -1)                                # torch CHW flatten
    h = h @ p["fc1_w"] + p["fc1_b"]
    mu = h @ p["mu_w"] + p["mu_b"]
    lv = h @ p["lv_w"] + p["lv_b"]
    noise = jax.random.normal(noise_key, (B, 5), jnp.float32)
    z = mu + jnp.exp(lv) * noise
    h = z @ p["fc2_w"] + p["fc2_b"]
    h = h @ p["fc3_w"] + p["fc3_b"]
    h = h.reshape(B, 10, 7, 7)
    h = jax.nn.sigmoid(convT(h, p["dec1_w"], p["dec1_b"], 2, 1))
    h = jax.nn.sigmoid(convT(h, p["dec2_w"], p["dec2_b"], 1, 0))
    return h


if __name__ == "__main__":
    key = jax.random.PRNGKey(0)
    pkey, xkey, nkey = jax.random.split(key, 3)
    params = init_params(pkey)
    packed = pack_params(params)                       # one-time weight relayout

    x = jax.random.uniform(xkey, (2, 1, 14, 14), jnp.float32)   # NCHW, 14x14 input
    fwd = jax.jit(net_forward)
    out = jax.block_until_ready(fwd(packed, x, nkey))
    assert out.shape == (2, 1, 14, 14), out.shape

    out_f32 = out.astype(jnp.float32)
    assert bool(jnp.all(jnp.isfinite(out_f32)))
    ref = net_forward_ref(params, x, nkey)             # f32 reference, same noise
    err = float(jnp.max(jnp.abs(out_f32 - ref)))
    assert err < 5e-2, f"max abs err vs reference = {err}"
    print("KERNEL_OK")
</pallas_src>

<mosaic_0001>
module attributes {stable_mosaic.version = 11 : i64} {
  func.func @_vae_forward_kernel(%arg0: i32, %arg1: memref<16x196xbf16, #tpu.memory_space<vmem>>, %arg2: memref<16x5xf32, #tpu.memory_space<vmem>>, %arg3: memref<196x980xbf16, #tpu.memory_space<vmem>>, %arg4: memref<1x980xf32, #tpu.memory_space<vmem>>, %arg5: memref<980x490xbf16, #tpu.memory_space<vmem>>, %arg6: memref<1x490xf32, #tpu.memory_space<vmem>>, %arg7: memref<490x50xbf16, #tpu.memory_space<vmem>>, %arg8: memref<1x50xf32, #tpu.memory_space<vmem>>, %arg9: memref<50x5xbf16, #tpu.memory_space<vmem>>, %arg10: memref<1x5xf32, #tpu.memory_space<vmem>>, %arg11: memref<50x5xbf16, #tpu.memory_space<vmem>>, %arg12: memref<1x5xf32, #tpu.memory_space<vmem>>, %arg13: memref<5x490xbf16, #tpu.memory_space<vmem>>, %arg14: memref<1x490xf32, #tpu.memory_space<vmem>>, %arg15: memref<490x845xbf16, #tpu.memory_space<vmem>>, %arg16: memref<1x845xf32, #tpu.memory_space<vmem>>, %arg17: memref<845x196xbf16, #tpu.memory_space<vmem>>, %arg18: memref<1x196xf32, #tpu.memory_space<vmem>>, %arg19: memref<16x196xbf16, #tpu.memory_space<vmem>>) attributes {dimension_semantics = [#tpu.dimension_semantics<parallel>], iteration_bounds = array<i64: 1>, scalar_prefetch = 0 : i64, scratch_operands = 0 : i64, tpu.core_type = #tpu.core_type<tc>, window_params = [{transform_indices = @transform_0, window_bounds = array<i64: 16, 196>}, {transform_indices = @transform_1, window_bounds = array<i64: 16, 5>}, {pipeline_mode = #tpu.pipeline_mode<synchronous>, transform_indices = @transform_2, window_bounds = array<i64: 196, 980>}, {pipeline_mode = #tpu.pipeline_mode<synchronous>, transform_indices = @transform_3, window_bounds = array<i64: 1, 980>}, {pipeline_mode = #tpu.pipeline_mode<synchronous>, transform_indices = @transform_4, window_bounds = array<i64: 980, 490>}, {pipeline_mode = #tpu.pipeline_mode<synchronous>, transform_indices = @transform_5, window_bounds = array<i64: 1, 490>}, {pipeline_mode = #tpu.pipeline_mode<synchronous>, transform_indices = @transform_6, window_bounds = array<i64: 490, 50>}, {pipeline_mode = #tpu.pipeline_mode<synchronous>, transform_indices = @transform_7, window_bounds = array<i64: 1, 50>}, {pipeline_mode = #tpu.pipeline_mode<synchronous>, transform_indices = @transform_8, window_bounds = array<i64: 50, 5>}, {pipeline_mode = #tpu.pipeline_mode<synchronous>, transform_indices = @transform_9, window_bounds = array<i64: 1, 5>}, {pipeline_mode = #tpu.pipeline_mode<synchronous>, transform_indices = @transform_10, window_bounds = array<i64: 50, 5>}, {pipeline_mode = #tpu.pipeline_mode<synchronous>, transform_indices = @transform_11, window_bounds = array<i64: 1, 5>}, {pipeline_mode = #tpu.pipeline_mode<synchronous>, transform_indices = @transform_12, window_bounds = array<i64: 5, 490>}, {pipeline_mode = #tpu.pipeline_mode<synchronous>, transform_indices = @transform_13, window_bounds = array<i64: 1, 490>}, {pipeline_mode = #tpu.pipeline_mode<synchronous>, transform_indices = @transform_14, window_bounds = array<i64: 490, 845>}, {pipeline_mode = #tpu.pipeline_mode<synchronous>, transform_indices = @transform_15, window_bounds = array<i64: 1, 845>}, {pipeline_mode = #tpu.pipeline_mode<synchronous>, transform_indices = @transform_16, window_bounds = array<i64: 845, 196>}, {pipeline_mode = #tpu.pipeline_mode<synchronous>, transform_indices = @transform_17, window_bounds = array<i64: 1, 196>}, {transform_indices = @transform_18, window_bounds = array<i64: 16, 196>}]} {
    %c0 = arith.constant 0 : index
    %c0_0 = arith.constant 0 : index
    %0 = vector.load %arg1[%c0, %c0_0] : memref<16x196xbf16, #tpu.memory_space<vmem>>, vector<16x196xbf16>
    %c0_1 = arith.constant 0 : index
    %c0_2 = arith.constant 0 : index
    %1 = vector.load %arg3[%c0_1, %c0_2] : memref<196x980xbf16, #tpu.memory_space<vmem>>, vector<196x980xbf16>
    %cst = arith.constant dense<0.000000e+00> : vector<16x980xf32>
    %2 = tpu.matmul %0, %1, %cst {dimension_numbers = #tpu.dot_dimension_numbers<[1], [0], [0], [1], [0, 0, 1, 1], [], []>} : vector<16x196xbf16>, vector<196x980xbf16>, vector<16x980xf32> -> vector<16x980xf32>
    %c0_3 = arith.constant 0 : index
    %c0_4 = arith.constant 0 : index
    %3 = vector.load %arg4[%c0_3, %c0_4] : memref<1x980xf32, #tpu.memory_space<vmem>>, vector<1x980xf32>
    %4 = vector.broadcast %3 : vector<1x980xf32> to vector<16x980xf32>
    %5 = arith.addf %2, %4 : vector<16x980xf32>
    %cst_5 = arith.constant 0.000000e+00 : f32
    %6 = vector.broadcast %cst_5 : f32 to vector<16x980xf32>
    %7 = arith.subf %6, %5 : vector<16x980xf32>
    %8 = math.exp %7 : vector<16x980xf32>
    %cst_6 = arith.constant 1.000000e+00 : f32
    %9 = vector.broadcast %cst_6 : f32 to vector<16x980xf32>
    %10 = arith.addf %9, %8 : vector<16x980xf32>
    %11 = tpu.reciprocal %10 {approx = true} : vector<16x980xf32> -> vector<16x980xf32>
    %12 = arith.truncf %11 : vector<16x980xf32> to vector<16x980xbf16>
    %c0_7 = arith.constant 0 : index
    %c0_8 = arith.constant 0 : index
    %13 = vector.load %arg5[%c0_7, %c0_8] : memref<980x490xbf16, #tpu.memory_space<vmem>>, vector<980x490xbf16>
    %cst_9 = arith.constant dense<0.000000e+00> : vector<16x490xf32>
    %14 = tpu.matmul %12, %13, %cst_9 {dimension_numbers = #tpu.dot_dimension_numbers<[1], [0], [0], [1], [0, 0, 1, 1], [], []>} : vector<16x980xbf16>, vector<980x490xbf16>, vector<16x490xf32> -> vector<16x490xf32>
    %c0_10 = arith.constant 0 : index
    %c0_11 = arith.constant 0 : index
    %15 = vector.load %arg6[%c0_10, %c0_11] : memref<1x490xf32, #tpu.memory_space<vmem>>, vector<1x490xf32>
    %16 = vector.broadcast %15 : vector<1x490xf32> to vector<16x490xf32>
    %17 = arith.addf %14, %16 : vector<16x490xf32>
    %cst_12 = arith.constant 0.000000e+00 : f32
    %18 = vector.broadcast %cst_12 : f32 to vector<16x490xf32>
    %19 = arith.subf %18, %17 : vector<16x490xf32>
    %20 = math.exp %19 : vector<16x490xf32>
    %cst_13 = arith.constant 1.000000e+00 : f32
    %21 = vector.broadcast %cst_13 : f32 to vector<16x490xf32>
    %22 = arith.addf %21, %20 : vector<16x490xf32>
    %23 = tpu.reciprocal %22 {approx = true} : vector<16x490xf32> -> vector<16x490xf32>
    %24 = arith.truncf %23 : vector<16x490xf32> to vector<16x490xbf16>
    %c0_14 = arith.constant 0 : index
    %c0_15 = arith.constant 0 : index
    %25 = vector.load %arg7[%c0_14, %c0_15] : memref<490x50xbf16, #tpu.memory_space<vmem>>, vector<490x50xbf16>
    %cst_16 = arith.constant dense<0.000000e+00> : vector<16x50xf32>
    %26 = tpu.matmul %24, %25, %cst_16 {dimension_numbers = #tpu.dot_dimension_numbers<[1], [0], [0], [1], [0, 0, 1, 1], [], []>} : vector<16x490xbf16>, vector<490x50xbf16>, vector<16x50xf32> -> vector<16x50xf32>
    %c0_17 = arith.constant 0 : index
    %c0_18 = arith.constant 0 : index
    %27 = vector.load %arg8[%c0_17, %c0_18] : memref<1x50xf32, #tpu.memory_space<vmem>>, vector<1x50xf32>
    %28 = vector.broadcast %27 : vector<1x50xf32> to vector<16x50xf32>
    %29 = arith.addf %26, %28 : vector<16x50xf32>
    %30 = arith.truncf %29 : vector<16x50xf32> to vector<16x50xbf16>
    %c0_19 = arith.constant 0 : index
    %c0_20 = arith.constant 0 : index
    %31 = vector.load %arg9[%c0_19, %c0_20] : memref<50x5xbf16, #tpu.memory_space<vmem>>, vector<50x5xbf16>
    %cst_21 = arith.constant dense<0.000000e+00> : vector<16x5xf32>
    %32 = tpu.matmul %30, %31, %cst_21 {dimension_numbers = #tpu.dot_dimension_numbers<[1], [0], [0], [1], [0, 0, 1, 1], [], []>} : vector<16x50xbf16>, vector<50x5xbf16>, vector<16x5xf32> -> vector<16x5xf32>
    %c0_22 = arith.constant 0 : index
    %c0_23 = arith.constant 0 : index
    %33 = vector.load %arg10[%c0_22, %c0_23] : memref<1x5xf32, #tpu.memory_space<vmem>>, vector<1x5xf32>
    %34 = vector.broadcast %33 : vector<1x5xf32> to vector<16x5xf32>
    %35 = arith.addf %32, %34 : vector<16x5xf32>
    %c0_24 = arith.constant 0 : index
    %c0_25 = arith.constant 0 : index
    %36 = vector.load %arg11[%c0_24, %c0_25] : memref<50x5xbf16, #tpu.memory_space<vmem>>, vector<50x5xbf16>
    %cst_26 = arith.constant dense<0.000000e+00> : vector<16x5xf32>
    %37 = tpu.matmul %30, %36, %cst_26 {dimension_numbers = #tpu.dot_dimension_numbers<[1], [0], [0], [1], [0, 0, 1, 1], [], []>} : vector<16x50xbf16>, vector<50x5xbf16>, vector<16x5xf32> -> vector<16x5xf32>
    %c0_27 = arith.constant 0 : index
    %c0_28 = arith.constant 0 : index
    %38 = vector.load %arg12[%c0_27, %c0_28] : memref<1x5xf32, #tpu.memory_space<vmem>>, vector<1x5xf32>
    %39 = vector.broadcast %38 : vector<1x5xf32> to vector<16x5xf32>
    %40 = arith.addf %37, %39 : vector<16x5xf32>
    %41 = math.exp %40 : vector<16x5xf32>
    %c0_29 = arith.constant 0 : index
    %c0_30 = arith.constant 0 : index
    %42 = vector.load %arg2[%c0_29, %c0_30] : memref<16x5xf32, #tpu.memory_space<vmem>>, vector<16x5xf32>
    %43 = arith.mulf %41, %42 : vector<16x5xf32>
    %44 = arith.addf %35, %43 : vector<16x5xf32>
    %45 = arith.truncf %44 : vector<16x5xf32> to vector<16x5xbf16>
    %c0_31 = arith.constant 0 : index
    %c0_32 = arith.constant 0 : index
    %46 = vector.load %arg13[%c0_31, %c0_32] : memref<5x490xbf16, #tpu.memory_space<vmem>>, vector<5x490xbf16>
    %cst_33 = arith.constant dense<0.000000e+00> : vector<16x490xf32>
    %47 = tpu.matmul %45, %46, %cst_33 {dimension_numbers = #tpu.dot_dimension_numbers<[1], [0], [0], [1], [0, 0, 1, 1], [], []>} : vector<16x5xbf16>, vector<5x490xbf16>, vector<16x490xf32> -> vector<16x490xf32>
    %c0_34 = arith.constant 0 : index
    %c0_35 = arith.constant 0 : index
    %48 = vector.load %arg14[%c0_34, %c0_35] : memref<1x490xf32, #tpu.memory_space<vmem>>, vector<1x490xf32>
    %49 = vector.broadcast %48 : vector<1x490xf32> to vector<16x490xf32>
    %50 = arith.addf %47, %49 : vector<16x490xf32>
    %51 = arith.truncf %50 : vector<16x490xf32> to vector<16x490xbf16>
    %c0_36 = arith.constant 0 : index
    %c0_37 = arith.constant 0 : index
    %52 = vector.load %arg15[%c0_36, %c0_37] : memref<490x845xbf16, #tpu.memory_space<vmem>>, vector<490x845xbf16>
    %cst_38 = arith.constant dense<0.000000e+00> : vector<16x845xf32>
    %53 = tpu.matmul %51, %52, %cst_38 {dimension_numbers = #tpu.dot_dimension_numbers<[1], [0], [0], [1], [0, 0, 1, 1], [], []>} : vector<16x490xbf16>, vector<490x845xbf16>, vector<16x845xf32> -> vector<16x845xf32>
    %c0_39 = arith.constant 0 : index
    %c0_40 = arith.constant 0 : index
    %54 = vector.load %arg16[%c0_39, %c0_40] : memref<1x845xf32, #tpu.memory_space<vmem>>, vector<1x845xf32>
    %55 = vector.broadcast %54 : vector<1x845xf32> to vector<16x845xf32>
    %56 = arith.addf %53, %55 : vector<16x845xf32>
    %cst_41 = arith.constant 0.000000e+00 : f32
    %57 = vector.broadcast %cst_41 : f32 to vector<16x845xf32>
    %58 = arith.subf %57, %56 : vector<16x845xf32>
    %59 = math.exp %58 : vector<16x845xf32>
    %cst_42 = arith.constant 1.000000e+00 : f32
    %60 = vector.broadcast %cst_42 : f32 to vector<16x845xf32>
    %61 = arith.addf %60, %59 : vector<16x845xf32>
    %62 = tpu.reciprocal %61 {approx = true} : vector<16x845xf32> -> vector<16x845xf32>
    %63 = arith.truncf %62 : vector<16x845xf32> to vector<16x845xbf16>
    %c0_43 = arith.constant 0 : index
    %c0_44 = arith.constant 0 : index
    %64 = vector.load %arg17[%c0_43, %c0_44] : memref<845x196xbf16, #tpu.memory_space<vmem>>, vector<845x196xbf16>
    %cst_45 = arith.constant dense<0.000000e+00> : vector<16x196xf32>
    %65 = tpu.matmul %63, %64, %cst_45 {dimension_numbers = #tpu.dot_dimension_numbers<[1], [0], [0], [1], [0, 0, 1, 1], [], []>} : vector<16x845xbf16>, vector<845x196xbf16>, vector<16x196xf32> -> vector<16x196xf32>
    %c0_46 = arith.constant 0 : index
    %c0_47 = arith.constant 0 : index
    %66 = vector.load %arg18[%c0_46, %c0_47] : memref<1x196xf32, #tpu.memory_space<vmem>>, vector<1x196xf32>
    %67 = vector.broadcast %66 : vector<1x196xf32> to vector<16x196xf32>
    %68 = arith.addf %65, %67 : vector<16x196xf32>
    %cst_48 = arith.constant 0.000000e+00 : f32
    %69 = vector.broadcast %cst_48 : f32 to vector<16x196xf32>
    %70 = arith.subf %69, %68 : vector<16x196xf32>
    %71 = math.exp %70 : vector<16x196xf32>
    %cst_49 = arith.constant 1.000000e+00 : f32
    %72 = vector.broadcast %cst_49 : f32 to vector<16x196xf32>
    %73 = arith.addf %72, %71 : vector<16x196xf32>
    %74 = tpu.reciprocal %73 {approx = true} : vector<16x196xf32> -> vector<16x196xf32>
    %75 = arith.truncf %74 : vector<16x196xf32> to vector<16x196xbf16>
    %c0_50 = arith.constant 0 : index
    %c0_51 = arith.constant 0 : index
    %76 = vector.load %arg19[%c0_50, %c0_51] : memref<16x196xbf16, #tpu.memory_space<vmem>>, vector<16x196xbf16>
    tpu.vector_store %arg19[%c0_50, %c0_51], %75 {strides = array<i32>} : memref<16x196xbf16, #tpu.memory_space<vmem>>, vector<16x196xbf16>,
    return
  }
  func.func @transform_0(%arg0: i32) -> (i32, i32) {
    %c0_i32 = arith.constant 0 : i32
    %c0_i32_0 = arith.constant 0 : i32
    return %arg0, %c0_i32 : i32, i32
  }
  func.func @transform_1(%arg0: i32) -> (i32, i32) {
    %c0_i32 = arith.constant 0 : i32
    %c0_i32_0 = arith.constant 0 : i32
    return %arg0, %c0_i32 : i32, i32
  }
  func.func @transform_2(%arg0: i32) -> (i32, i32) {
    %c0_i32 = arith.constant 0 : i32
    %c0_i32_0 = arith.constant 0 : i32
    %c0_i32_1 = arith.constant 0 : i32
    return %c0_i32, %c0_i32_0 : i32, i32
  }
  func.func @transform_3(%arg0: i32) -> (i32, i32) {
    %c0_i32 = arith.constant 0 : i32
    %c0_i32_0 = arith.constant 0 : i32
    %c0_i32_1 = arith.constant 0 : i32
    return %c0_i32, %c0_i32_0 : i32, i32
  }
  func.func @transform_4(%arg0: i32) -> (i32, i32) {
    %c0_i32 = arith.constant 0 : i32
    %c0_i32_0 = arith.constant 0 : i32
    %c0_i32_1 = arith.constant 0 : i32
    return %c0_i32, %c0_i32_0 : i32, i32
  }
  func.func @transform_5(%arg0: i32) -> (i32, i32) {
    %c0_i32 = arith.constant 0 : i32
    %c0_i32_0 = arith.constant 0 : i32
    %c0_i32_1 = arith.constant 0 : i32
    return %c0_i32, %c0_i32_0 : i32, i32
  }
  func.func @transform_6(%arg0: i32) -> (i32, i32) {
    %c0_i32 = arith.constant 0 : i32
    %c0_i32_0 = arith.constant 0 : i32
    %c0_i32_1 = arith.constant 0 : i32
    return %c0_i32, %c0_i32_0 : i32, i32
  }
  func.func @transform_7(%arg0: i32) -> (i32, i32) {
    %c0_i32 = arith.constant 0 : i32
    %c0_i32_0 = arith.constant 0 : i32
    %c0_i32_1 = arith.constant 0 : i32
    return %c0_i32, %c0_i32_0 : i32, i32
  }
  func.func @transform_8(%arg0: i32) -> (i32, i32) {
    %c0_i32 = arith.constant 0 : i32
    %c0_i32_0 = arith.constant 0 : i32
    %c0_i32_1 = arith.constant 0 : i32
    return %c0_i32, %c0_i32_0 : i32, i32
  }
  func.func @transform_9(%arg0: i32) -> (i32, i32) {
    %c0_i32 = arith.constant 0 : i32
    %c0_i32_0 = arith.constant 0 : i32
    %c0_i32_1 = arith.constant 0 : i32
    return %c0_i32, %c0_i32_0 : i32, i32
  }
  func.func @transform_10(%arg0: i32) -> (i32, i32) {
    %c0_i32 = arith.constant 0 : i32
    %c0_i32_0 = arith.constant 0 : i32
    %c0_i32_1 = arith.constant 0 : i32
    return %c0_i32, %c0_i32_0 : i32, i32
  }
  func.func @transform_11(%arg0: i32) -> (i32, i32) {
    %c0_i32 = arith.constant 0 : i32
    %c0_i32_0 = arith.constant 0 : i32
    %c0_i32_1 = arith.constant 0 : i32
    return %c0_i32, %c0_i32_0 : i32, i32
  }
  func.func @transform_12(%arg0: i32) -> (i32, i32) {
    %c0_i32 = arith.constant 0 : i32
    %c0_i32_0 = arith.constant 0 : i32
    %c0_i32_1 = arith.constant 0 : i32
    return %c0_i32, %c0_i32_0 : i32, i32
  }
  func.func @transform_13(%arg0: i32) -> (i32, i32) {
    %c0_i32 = arith.constant 0 : i32
    %c0_i32_0 = arith.constant 0 : i32
    %c0_i32_1 = arith.constant 0 : i32
    return %c0_i32, %c0_i32_0 : i32, i32
  }
  func.func @transform_14(%arg0: i32) -> (i32, i32) {
    %c0_i32 = arith.constant 0 : i32
    %c0_i32_0 = arith.constant 0 : i32
    %c0_i32_1 = arith.constant 0 : i32
    return %c0_i32, %c0_i32_0 : i32, i32
  }
  func.func @transform_15(%arg0: i32) -> (i32, i32) {
    %c0_i32 = arith.constant 0 : i32
    %c0_i32_0 = arith.constant 0 : i32
    %c0_i32_1 = arith.constant 0 : i32
    return %c0_i32, %c0_i32_0 : i32, i32
  }
  func.func @transform_16(%arg0: i32) -> (i32, i32) {
    %c0_i32 = arith.constant 0 : i32
    %c0_i32_0 = arith.constant 0 : i32
    %c0_i32_1 = arith.constant 0 : i32
    return %c0_i32, %c0_i32_0 : i32, i32
  }
  func.func @transform_17(%arg0: i32) -> (i32, i32) {
    %c0_i32 = arith.constant 0 : i32
    %c0_i32_0 = arith.constant 0 : i32
    %c0_i32_1 = arith.constant 0 : i32
    return %c0_i32, %c0_i32_0 : i32, i32
  }
  func.func @transform_18(%arg0: i32) -> (i32, i32) {
    %c0_i32 = arith.constant 0 : i32
    %c0_i32_0 = arith.constant 0 : i32
    return %arg0, %c0_i32 : i32, i32
  }
}

</mosaic_0001>

<llo_original>
// kernel: net_forward.1
$region0: #{net_forward.1}
  #allocation0 [shape = 'u32[]', space=smem, size = 0x4, offset = 0x4, fixed_abs, tag = 'smem constant byte address 0x4 - core index']
  #allocation1 [shape = 'u32[144,128]{1,0:T(1,128)}', space=vmem, size = 0x12000, scoped, tag = 'internal scratch']
  %s0 = inlined_call_operand.vmem [shape: bf16[16,196], index: 0, kind: input, shape index: {}]
  %s1 = inlined_call_operand.vmem [shape: f32[16,5], index: 1, kind: input, shape index: {}]
  %s2 = inlined_call_operand.vmem [shape: bf16[196,980], index: 2, kind: input, shape index: {}]
  %s3 = inlined_call_operand.vmem [shape: f32[1,980], index: 3, kind: input, shape index: {}]
  %s4 = inlined_call_operand.vmem [shape: bf16[980,490], index: 4, kind: input, shape index: {}]
  %s5 = inlined_call_operand.vmem [shape: f32[1,490], index: 5, kind: input, shape index: {}]
  %s6 = inlined_call_operand.vmem [shape: bf16[490,50], index: 6, kind: input, shape index: {}]
  %s7 = inlined_call_operand.vmem [shape: f32[1,50], index: 7, kind: input, shape index: {}]
  %s8 = inlined_call_operand.vmem [shape: bf16[50,5], index: 8, kind: input, shape index: {}]
  %s9 = inlined_call_operand.vmem [shape: f32[1,5], index: 9, kind: input, shape index: {}]
  %s10 = inlined_call_operand.vmem [shape: bf16[50,5], index: 10, kind: input, shape index: {}]
  %s11 = inlined_call_operand.vmem [shape: f32[1,5], index: 11, kind: input, shape index: {}]
  %s12 = inlined_call_operand.vmem [shape: bf16[5,490], index: 12, kind: input, shape index: {}]
  %s13 = inlined_call_operand.vmem [shape: f32[1,490], index: 13, kind: input, shape index: {}]
  %s14 = inlined_call_operand.vmem [shape: bf16[490,845], index: 14, kind: input, shape index: {}]
  %s15 = inlined_call_operand.vmem [shape: f32[1,845], index: 15, kind: input, shape index: {}]
  %s16 = inlined_call_operand.vmem [shape: bf16[845,196], index: 16, kind: input, shape index: {}]
  %s17 = inlined_call_operand.vmem [shape: f32[1,196], index: 17, kind: input, shape index: {}]
  %s18 = inlined_call_operand.vmem [shape: bf16[16,196], index: 18, kind: output, shape index: {}]
  %s19 = sld [smem:[#allocation0]]
  $region82: #{net_forward.1} parent=0
    _
  %s21 = ssub.s32 1, %s19
  %s22 = scalar_select 0, %s21, %s19
  // Predicated region
  $region2: #{net_forward.1} parent=0 // pred_check
    _
  $region3: #{net_forward.1} parent=0 // pred_check_branch
    %24 = sbr.rel (0) target = $region5
  $region4: #{net_forward.1} parent=0 // pred_region
    _
  $region5: #{net_forward.1} parent=0 // pred_fallthru
    _
  // Predicated region
  $region6: #{net_forward.1} parent=0 // pred_check
    _
  $region7: #{net_forward.1} parent=0 // pred_check_branch
    %26 = sbr.rel (0) target = $region9
  $region8: #{net_forward.1} parent=0 // pred_region
    _
  $region9: #{net_forward.1} parent=0 // pred_fallthru
    _
  // Predicated region
  $region10: #{net_forward.1} parent=0 // pred_check
    _
  $region11: #{net_forward.1} parent=0 // pred_check_branch
    %28 = sbr.rel (0) target = $region13
  $region12: #{net_forward.1} parent=0 // pred_region
    _
  $region13: #{net_forward.1} parent=0 // pred_fallthru
    _
  // Predicated region
  $region14: #{net_forward.1} parent=0 // pred_check
    _
  $region15: #{net_forward.1} parent=0 // pred_check_branch
    %30 = sbr.rel (0) target = $region17
  $region16: #{net_forward.1} parent=0 // pred_region
    _
  $region17: #{net_forward.1} parent=0 // pred_fallthru
    _
  // Predicated region
  $region18: #{net_forward.1} parent=0 // pred_check
    _
  $region19: #{net_forward.1} parent=0 // pred_check_branch
    %32 = sbr.rel (0) target = $region21
  $region20: #{net_forward.1} parent=0 // pred_region
    _
  $region21: #{net_forward.1} parent=0 // pred_fallthru
    _
  // Predicated region
  $region22: #{net_forward.1} parent=0 // pred_check
    _
  $region23: #{net_forward.1} parent=0 // pred_check_branch
    %34 = sbr.rel (0) target = $region25
  $region24: #{net_forward.1} parent=0 // pred_region
    _
  $region25: #{net_forward.1} parent=0 // pred_fallthru
    _
  // Predicated region
  $region26: #{net_forward.1} parent=0 // pred_check
    _
  $region27: #{net_forward.1} parent=0 // pred_check_branch
    %36 = sbr.rel (0) target = $region29
  $region28: #{net_forward.1} parent=0 // pred_region
    _
  $region29: #{net_forward.1} parent=0 // pred_fallthru
    _
  // Predicated region
  $region30: #{net_forward.1} parent=0 // pred_check
    _
  $region31: #{net_forward.1} parent=0 // pred_check_branch
    %38 = sbr.rel (0) target = $region33
  $region32: #{net_forward.1} parent=0 // pred_region
    _
  $region33: #{net_forward.1} parent=0 // pred_fallthru
    _
  // Predicated region
  $region34: #{net_forward.1} parent=0 // pred_check
    _
  $region35: #{net_forward.1} parent=0 // pred_check_branch
    %40 = sbr.rel (0) target = $region37
  $region36: #{net_forward.1} parent=0 // pred_region
    _
  $region37: #{net_forward.1} parent=0 // pred_fallthru
    _
  // Predicated region
  $region38: #{net_forward.1} parent=0 // pred_check
    _
  $region39: #{net_forward.1} parent=0 // pred_check_branch
    %42 = sbr.rel (0) target = $region41
  $region40: #{net_forward.1} parent=0 // pred_region
    _
  $region41: #{net_forward.1} parent=0 // pred_fallthru
    _
  // Predicated region
  $region42: #{net_forward.1} parent=0 // pred_check
    _
  $region43: #{net_forward.1} parent=0 // pred_check_branch
    %44 = sbr.rel (0) target = $region45
  $region44: #{net_forward.1} parent=0 // pred_region
    _
  $region45: #{net_forward.1} parent=0 // pred_fallthru
    _
  // Predicated region
  $region46: #{net_forward.1} parent=0 // pred_check
    _
  $region47: #{net_forward.1} parent=0 // pred_check_branch
    %46 = sbr.rel (0) target = $region49
  $region48: #{net_forward.1} parent=0 // pred_region
    _
  $region49: #{net_forward.1} parent=0 // pred_fallthru
    _
  // Predicated region
  $region50: #{net_forward.1} parent=0 // pred_check
    _
  $region51: #{net_forward.1} parent=0 // pred_check_branch
    %48 = sbr.rel (0) target = $region53
  $region52: #{net_forward.1} parent=0 // pred_region
    _
  $region53: #{net_forward.1} parent=0 // pred_fallthru
    _
  // Predicated region
  $region54: #{net_forward.1} parent=0 // pred_check
    _
  $region55: #{net_forward.1} parent=0 // pred_check_branch
    %50 = sbr.rel (0) target = $region57
  $region56: #{net_forward.1} parent=0 // pred_region
    _
  $region57: #{net_forward.1} parent=0 // pred_fallthru
    _
  // Predicated region
  $region58: #{net_forward.1} parent=0 // pred_check
    _
  $region59: #{net_forward.1} parent=0 // pred_check_branch
    %52 = sbr.rel (0) target = $region61
  $region60: #{net_forward.1} parent=0 // pred_region
    _
  $region61: #{net_forward.1} parent=0 // pred_fallthru
    _
  // Predicated region
  $region62: #{net_forward.1} parent=0 // pred_check
    _
  $region63: #{net_forward.1} parent=0 // pred_check_branch
    %54 = sbr.rel (0) target = $region65
  $region64: #{net_forward.1} parent=0 // pred_region
    _
  $region65: #{net_forward.1} parent=0 // pred_fallthru
    _
  // Predicated region
  $region66: #{net_forward.1} parent=0 // pred_check
    _
  $region67: #{net_forward.1} parent=0 // pred_check_branch
    %56 = sbr.rel (0) target = $region69
  $region68: #{net_forward.1} parent=0 // pred_region
    _
  $region69: #{net_forward.1} parent=0 // pred_fallthru
    _
  // Predicated region
  $region70: #{net_forward.1} parent=0 // pred_check
    _
  $region71: #{net_forward.1} parent=0 // pred_check_branch
    %58 = sbr.rel (0) target = $region73
  $region72: #{net_forward.1} parent=0 // pred_region
    _
  $region73: #{net_forward.1} parent=0 // pred_fallthru
    _
  %v60 = vld [vmem:[%s0] sm:$0xff]
  %v61 = vld [vmem:[%s0 + $0x8] sm:$0xff]
  %v62 = vld [vmem:[%s2] sm:$0xff]
  %v63 = vld [vmem:[%s2 + $0x8] sm:$0xff]
  %v64 = vld [vmem:[%s2 + $0x10] sm:$0xff]
  %v65 = vld [vmem:[%s2 + $0x18] sm:$0xff]
  %v66 = vld [vmem:[%s2 + $0x20] sm:$0xff]
  %v67 = vld [vmem:[%s2 + $0x28] sm:$0xff]
  %v68 = vld [vmem:[%s2 + $0x30] sm:$0xff]
  %v69 = vld [vmem:[%s2 + $0x38] sm:$0xff]
  %v70 = vld [vmem:[%s2 + $0x40] sm:$0xff]
  %v71 = vld [vmem:[%s2 + $0x48] sm:$0xff]
  %v72 = vld [vmem:[%s2 + $0x50] sm:$0xff]
  %v73 = vld [vmem:[%s2 + $0x58] sm:$0xff]
  %v74 = vld [vmem:[%s2 + $0x60] sm:$0xff]
  %v75 = vld [vmem:[%s2 + $0x68] sm:$0xff]
  %v76 = vld [vmem:[%s2 + $0x70] sm:$0xff]
  %v77 = vld [vmem:[%s2 + $0x78] sm:$0xff]
  %v78 = vld [vmem:[%s2 + $0x80] sm:$0xff]
  %v79 = vld [vmem:[%s2 + $0x88] sm:$0xff]
  %v80 = vld [vmem:[%s2 + $0x90] sm:$0xff]
  %v81 = vld [vmem:[%s2 + $0x98] sm:$0xff]
  %v82 = vld [vmem:[%s2 + $0xa0] sm:$0xff]
  %v83 = vld [vmem:[%s2 + $0xa8] sm:$0xff]
  %v84 = vld [vmem:[%s2 + $0xb0] sm:$0xff]
  %v85 = vld [vmem:[%s2 + $0xb8] sm:$0xff]
  %v86 = vld [vmem:[%s2 + $0xc0] sm:$0xff]
  %v87 = vld [vmem:[%s2 + $0xc8] sm:$0xff]
  %v88 = vld [vmem:[%s2 + $0xd0] sm:$0xff]
  %v89 = vld [vmem:[%s2 + $0xd8] sm:$0xff]
  %v90 = vld [vmem:[%s2 + $0xe0] sm:$0xff]
  %v91 = vld [vmem:[%s2 + $0xe8] sm:$0xff]
  %v92 = vld [vmem:[%s2 + $0xf0] sm:$0xff]
  %v93 = vld [vmem:[%s2 + $0xf8] sm:$0xff]
  %v94 = vld [vmem:[%s2 + $0x100] sm:$0xff]
  %v95 = vld [vmem:[%s2 + $0x108] sm:$0xff]
  %v96 = vld [vmem:[%s2 + $0x110] sm:$0xff]
  %v97 = vld [vmem:[%s2 + $0x118] sm:$0xff]
  %v98 = vld [vmem:[%s2 + $0x120] sm:$0xff]
  %v99 = vld [vmem:[%s2 + $0x128] sm:$0xff]
  %v100 = vld [vmem:[%s2 + $0x130] sm:$0xff]
  %v101 = vld [vmem:[%s2 + $0x138] sm:$0xff]
  %v102 = vld [vmem:[%s2 + $0x140] sm:$0xff]
  %v103 = vld [vmem:[%s2 + $0x148] sm:$0xff]
  %v104 = vld [vmem:[%s2 + $0x150] sm:$0xff]
  %v105 = vld [vmem:[%s2 + $0x158] sm:$0xff]
  %v106 = vld [vmem:[%s2 + $0x160] sm:$0xff]
  %v107 = vld [vmem:[%s2 + $0x168] sm:$0xff]
  %v108 = vld [vmem:[%s2 + $0x170] sm:$0xff]
  %v109 = vld [vmem:[%s2 + $0x178] sm:$0xff]
  %v110 = vld [vmem:[%s2 + $0x180] sm:$0xff]
  %v111 = vld [vmem:[%s2 + $0x188] sm:$0xff]
  %v112 = vld [vmem:[%s2 + $0x190] sm:$0xff]
  %v113 = vld [vmem:[%s2 + $0x198] sm:$0xff]
  %v114 = vld [vmem:[%s2 + $0x1a0] sm:$0xff]
  %v115 = vld [vmem:[%s2 + $0x1a8] sm:$0xff]
  %v116 = vld [vmem:[%s2 + $0x1b0] sm:$0xff]
  %v117 = vld [vmem:[%s2 + $0x1b8] sm:$0xff]
  %v118 = vld [vmem:[%s2 + $0x1c0] sm:$0xff]
  %v119 = vld [vmem:[%s2 + $0x1c8] sm:$0xff]
  %v120 = vld [vmem:[%s2 + $0x1d0] sm:$0xff]
  %v121 = vld [vmem:[%s2 + $0x1d8] sm:$0xff]
  %v122 = vld [vmem:[%s2 + $0x1e0] sm:$0xff]
  %v123 = vld [vmem:[%s2 + $0x1e8] sm:$0xff]
  %v124 = vld [vmem:[%s2 + $0x1f0] sm:$0xff]
  %v125 = vld [vmem:[%s2 + $0x1f8] sm:$0xff]
  %v126 = vld [vmem:[%s2 + $0x200] sm:$0xff]
  %v127 = vld [vmem:[%s2 + $0x208] sm:$0xff]
  %v128 = vld [vmem:[%s2 + $0x210] sm:$0xff]
  %v129 = vld [vmem:[%s2 + $0x218] sm:$0xff]
  %v130 = vld [vmem:[%s2 + $0x220] sm:$0xff]
  %v131 = vld [vmem:[%s2 + $0x228] sm:$0xff]
  %v132 = vld [vmem:[%s2 + $0x230] sm:$0xff]
  %v133 = vld [vmem:[%s2 + $0x238] sm:$0xff]
  %v134 = vld [vmem:[%s2 + $0x240] sm:$0xff]
  %v135 = vld [vmem:[%s2 + $0x248] sm:$0xff]
  %v136 = vld [vmem:[%s2 + $0x250] sm:$0xff]
  %v137 = vld [vmem:[%s2 + $0x258] sm:$0xff]
  %v138 = vld [vmem:[%s2 + $0x260] sm:$0xff]
  %v139 = vld [vmem:[%s2 + $0x268] sm:$0xff]
  %v140 = vld [vmem:[%s2 + $0x270] sm:$0xff]
  %v141 = vld [vmem:[%s2 + $0x278] sm:$0xff]
  %v142 = vld [vmem:[%s2 + $0x280] sm:$0xff]
  %v143 = vld [vmem:[%s2 + $0x288] sm:$0xff]
  %v144 = vld [vmem:[%s2 + $0x290] sm:$0xff]
  %v145 = vld [vmem:[%s2 + $0x298] sm:$0xff]
  %v146 = vld [vmem:[%s2 + $0x2a0] sm:$0xff]
  %v147 = vld [vmem:[%s2 + $0x2a8] sm:$0xff]
  %v148 = vld [vmem:[%s2 + $0x2b0] sm:$0xff]
  %v149 = vld [vmem:[%s2 + $0x2b8] sm:$0xff]
  %v150 = vld [vmem:[%s2 + $0x2c0] sm:$0xff]
  %v151 = vld [vmem:[%s2 + $0x2c8] sm:$0xff]
  %v152 = vld [vmem:[%s2 + $0x2d0] sm:$0xff]
  %v153 = vld [vmem:[%s2 + $0x2d8] sm:$0xff]
  %v154 = vld [vmem:[%s2 + $0x2e0] sm:$0xff]
  %v155 = vld [vmem:[%s2 + $0x2e8] sm:$0xff]
  %v156 = vld [vmem:[%s2 + $0x2f0] sm:$0xff]
  %v157 = vld [vmem:[%s2 + $0x2f8] sm:$0xff]
  %v158 = vld [vmem:[%s2 + $0x300] sm:$0x33]
  %v159 = vld [vmem:[%s2 + $0x308] sm:$0x33]
  %v160 = vld [vmem:[%s2 + $0x310] sm:$0x33]
  %v161 = vld [vmem:[%s2 + $0x318] sm:$0x33]
  %v162 = vld [vmem:[%s3] sm:$0xff]
  %v164 = vlaneseq
  %v165 = vshrl.u32 %v164, 7
  %v166 = vsub.s32 0, %v165
  %v167 = vrot.slane %v162, %v166
  %v168 = vlaneseq
  %v169 = vshrl.u32 %v168, 7
  %v170 = vsub.s32 1, %v169
  %v171 = vrot.slane %v162, %v170
  %v172 = vlaneseq
  %v173 = vshrl.u32 %v172, 7
  %v174 = vsub.s32 2, %v173
  %v175 = vrot.slane %v162, %v174
  %v176 = vlaneseq
  %v177 = vshrl.u32 %v176, 7
  %v178 = vsub.s32 3, %v177
  %v179 = vrot.slane %v162, %v178
  %v180 = vlaneseq
  %v181 = vshrl.u32 %v180, 7
  %v182 = vsub.s32 4, %v181
  %v183 = vrot.slane %v162, %v182
  %v184 = vlaneseq
  %v185 = vshrl.u32 %v184, 7
  %v186 = vsub.s32 5, %v185
  %v187 = vrot.slane %v162, %v186
  %v188 = vlaneseq
  %v189 = vshrl.u32 %v188, 7
  %v190 = vsub.s32 6, %v189
  %v191 = vrot.slane %v162, %v190
  %v192 = vlaneseq
  %v193 = vshrl.u32 %v192, 7
  %v194 = vsub.s32 7, %v193
  %v195 = vrot.slane %v162, %v194
  %v206 = vunpack.c.l.b16 %v60
  %v207 = vunpack.c.h.b16 %v60
  %v208 = vunpack.c.l.b16 %v61
  %v209 = vunpack.c.h.b16 %v61
  %v210 = vpack.c.b16 %v208, %v206
  %v211 = vpack.c.b16 %v209, %v207
  %v313 = vunpack.c.l.b16 %v62
  %v314 = vunpack.c.h.b16 %v62
  %v315 = vunpack.c.l.b16 %v63
  %v316 = vunpack.c.h.b16 %v63
  %v317 = vunpack.c.l.b16 %v64
  %v318 = vunpack.c.h.b16 %v64
  %v319 = vunpack.c.l.b16 %v65
  %v320 = vunpack.c.h.b16 %v65
  %v321 = vunpack.c.l.b16 %v66
  %v322 = vunpack.c.h.b16 %v66
  %v323 = vunpack.c.l.b16 %v67
  %v324 = vunpack.c.h.b16 %v67
  %v325 = vunpack.c.l.b16 %v68
  %v326 = vunpack.c.h.b16 %v68
  %v327 = vunpack.c.l.b16 %v69
  %v328 = vunpack.c.h.b16 %v69
  %v329 = vunpack.c.l.b16 %v70
  %v330 = vunpack.c.h.b16 %v70
  %v331 = vunpack.c.l.b16 %v71
  %v332 = vunpack.c.h.b16 %v71
  %v333 = vunpack.c.l.b16 %v72
  %v334 = vunpack.c.h.b16 %v72
  %v335 = vunpack.c.l.b16 %v73
  %v336 = vunpack.c.h.b16 %v73
  %v337 = vunpack.c.l.b16 %v74
  %v338 = vunpack.c.h.b16 %v74
  %v339 = vunpack.c.l.b16 %v75
  %v340 = vunpack.c.h.b16 %v75
  %v341 = vunpack.c.l.b16 %v76
  %v342 = vunpack.c.h.b16 %v76
  %v343 = vunpack.c.l.b16 %v77
  %v344 = vunpack.c.h.b16 %v77
  %v345 = vunpack.c.l.b16 %v78
  %v346 = vunpack.c.h.b16 %v78
  %v347 = vunpack.c.l.b16 %v79
  %v348 = vunpack.c.h.b16 %v79
  %v349 = vunpack.c.l.b16 %v80
  %v350 = vunpack.c.h.b16 %v80
  %v351 = vunpack.c.l.b16 %v81
  %v352 = vunpack.c.h.b16 %v81
  %v353 = vunpack.c.l.b16 %v82
  %v354 = vunpack.c.h.b16 %v82
  %v355 = vunpack.c.l.b16 %v83
  %v356 = vunpack.c.h.b16 %v83
  %v357 = vunpack.c.l.b16 %v84
  %v358 = vunpack.c.h.b16 %v84
  %v359 = vunpack.c.l.b16 %v85
  %v360 = vunpack.c.h.b16 %v85
  %v361 = vunpack.c.l.b16 %v86
  %v362 = vunpack.c.h.b16 %v86
  %v363 = vunpack.c.l.b16 %v87
  %v364 = vunpack.c.h.b16 %v87
  %v365 = vunpack.c.l.b16 %v88
  %v366 = vunpack.c.h.b16 %v88
  %v367 = vunpack.c.l.b16 %v89
  %v368 = vunpack.c.h.b16 %v89
  %v369 = vunpack.c.l.b16 %v90
  %v370 = vunpack.c.h.b16 %v90
  %v371 = vunpack.c.l.b16 %v91
  %v372 = vunpack.c.h.b16 %v91
  %v373 = vunpack.c.l.b16 %v92
  %v374 = vunpack.c.h.b16 %v92
  %v375 = vunpack.c.l.b16 %v93
  %v376 = vunpack.c.h.b16 %v93
  %v377 = vunpack.c.l.b16 %v94
  %v378 = vunpack.c.h.b16 %v94
  %v379 = vunpack.c.l.b16 %v95
  %v380 = vunpack.c.h.b16 %v95
  %v381 = vunpack.c.l.b16 %v96
  %v382 = vunpack.c.h.b16 %v96
  %v383 = vunpack.c.l.b16 %v97
  %v384 = vunpack.c.h.b16 %v97
  %v385 = vunpack.c.l.b16 %v98
  %v386 = vunpack.c.h.b16 %v98
  %v387 = vunpack.c.l.b16 %v99
  %v388 = vunpack.c.h.b16 %v99
  %v389 = vunpack.c.l.b16 %v100
  %v390 = vunpack.c.h.b16 %v100
  %v391 = vunpack.c.l.b16 %v101
  %v392 = vunpack.c.h.b16 %v101
  %v393 = vunpack.c.l.b16 %v102
  %v394 = vunpack.c.h.b16 %v102
  %v395 = vunpack.c.l.b16 %v103
  %v396 = vunpack.c.h.b16 %v103
  %v397 = vunpack.c.l.b16 %v104
  %v398 = vunpack.c.h.b16 %v104
  %v399 = vunpack.c.l.b16 %v105
  %v400 = vunpack.c.h.b16 %v105
  %v401 = vunpack.c.l.b16 %v106
  %v402 = vunpack.c.h.b16 %v106
  %v403 = vunpack.c.l.b16 %v107
  %v404 = vunpack.c.h.b16 %v107
  %v405 = vunpack.c.l.b16 %v108
  %v406 = vunpack.c.h.b16 %v108
  %v407 = vunpack.c.l.b16 %v109
  %v408 = vunpack.c.h.b16 %v109
  %v409 = vunpack.c.l.b16 %v110
  %v410 = vunpack.c.h.b16 %v110
  %v411 = vunpack.c.l.b16 %v111
  %v412 = vunpack.c.h.b16 %v111
  %v413 = vunpack.c.l.b16 %v112
  %v414 = vunpack.c.h.b16 %v112
  %v415 = vunpack.c.l.b16 %v113
  %v416 = vunpack.c.h.b16 %v113
  %v417 = vunpack.c.l.b16 %v114
  %v418 = vunpack.c.h.b16 %v114
  %v419 = vunpack.c.l.b16 %v115
  %v420 = vunpack.c.h.b16 %v115
  %v421 = vunpack.c.l.b16 %v116
  %v422 = vunpack.c.h.b16 %v116
  %v423 = vunpack.c.l.b16 %v117
  %v424 = vunpack.c.h.b16 %v117
  %v425 = vunpack.c.l.b16 %v118
  %v426 = vunpack.c.h.b16 %v118
  %v427 = vunpack.c.l.b16 %v119
  %v428 = vunpack.c.h.b16 %v119
  %v429 = vunpack.c.l.b16 %v120
  %v430 = vunpack.c.h.b16 %v120
  %v431 = vunpack.c.l.b16 %v121
  %v432 = vunpack.c.h.b16 %v121
  %v433 = vunpack.c.l.b16 %v122
  %v434 = vunpack.c.h.b16 %v122
  %v435 = vunpack.c.l.b16 %v123
  %v436 = vunpack.c.h.b16 %v123
  %v437 = vunpack.c.l.b16 %v124
  %v438 = vunpack.c.h.b16 %v124
  %v439 = vunpack.c.l.b16 %v125
  %v440 = vunpack.c.h.b16 %v125
  %v441 = vunpack.c.l.b16 %v126
  %v442 = vunpack.c.h.b16 %v126
  %v443 = vunpack.c.l.b16 %v127
  %v444 = vunpack.c.h.b16 %v127
  %v445 = vunpack.c.l.b16 %v128
  %v446 = vunpack.c.h.b16 %v128
  %v447 = vunpack.c.l.b16 %v129
  %v448 = vunpack.c.h.b16 %v129
  %v449 = vunpack.c.l.b16 %v130
  %v450 = vunpack.c.h.b16 %v130
  %v451 = vunpack.c.l.b16 %v131
  %v452 = vunpack.c.h.b16 %v131
  %v453 = vunpack.c.l.b16 %v132
  %v454 = vunpack.c.h.b16 %v132
  %v455 = vunpack.c.l.b16 %v133
  %v456 = vunpack.c.h.b16 %v133
  %v457 = vunpack.c.l.b16 %v134
  %v458 = vunpack.c.h.b16 %v134
  %v459 = vunpack.c.l.b16 %v135
  %v460 = vunpack.c.h.b16 %v135
  %v461 = vunpack.c.l.b16 %v136
  %v462 = vunpack.c.h.b16 %v136
  %v463 = vunpack.c.l.b16 %v137
  %v464 = vunpack.c.h.b16 %v137
  %v465 = vunpack.c.l.b16 %v138
  %v466 = vunpack.c.h.b16 %v138
  %v467 = vunpack.c.l.b16 %v139
  %v468 = vunpack.c.h.b16 %v139
  %v469 = vunpack.c.l.b16 %v140
  %v470 = vunpack.c.h.b16 %v140
  %v471 = vunpack.c.l.b16 %v141
  %v472 = vunpack.c.h.b16 %v141
  %v473 = vunpack.c.l.b16 %v142
  %v474 = vunpack.c.h.b16 %v142
  %v475 = vunpack.c.l.b16 %v143
  %v476 = vunpack.c.h.b16 %v143
  %v477 = vunpack.c.l.b16 %v144
  %v478 = vunpack.c.h.b16 %v144
  %v479 = vunpack.c.l.b16 %v145
  %v480 = vunpack.c.h.b16 %v145
  %v481 = vunpack.c.l.b16 %v146
  %v482 = vunpack.c.h.b16 %v146
  %v483 = vunpack.c.l.b16 %v147
  %v484 = vunpack.c.h.b16 %v147
  %v485 = vunpack.c.l.b16 %v148
  %v486 = vunpack.c.h.b16 %v148
  %v487 = vunpack.c.l.b16 %v149
  %v488 = vunpack.c.h.b16 %v149
  %v489 = vunpack.c.l.b16 %v150
  %v490 = vunpack.c.h.b16 %v150
  %v491 = vunpack.c.l.b16 %v151
  %v492 = vunpack.c.h.b16 %v151
  %v493 = vunpack.c.l.b16 %v152
  %v494 = vunpack.c.h.b16 %v152
  %v495 = vunpack.c.l.b16 %v153
  %v496 = vunpack.c.h.b16 %v153
  %v497 = vunpack.c.l.b16 %v154
  %v498 = vunpack.c.h.b16 %v154
  %v499 = vunpack.c.l.b16 %v155
  %v500 = vunpack.c.h.b16 %v155
  %v501 = vunpack.c.l.b16 %v156
  %v502 = vunpack.c.h.b16 %v156
  %v503 = vunpack.c.l.b16 %v157
  %v504 = vunpack.c.h.b16 %v157
  %v505 = vunpack.c.l.b16 %v158
  %v506 = vunpack.c.h.b16 %v158
  %v507 = vunpack.c.l.b16 %v159
  %v508 = vunpack.c.h.b16 %v159
  %v509 = vunpack.c.l.b16 %v160
  %v510 = vunpack.c.h.b16 %v160
  %v511 = vunpack.c.l.b16 %v161
  %v512 = vunpack.c.h.b16 %v161
  %v513 = vpack.c.b16 %v321, %v313
  %v514 = vpack.c.b16 %v322, %v314
  %v515 = vpack.c.b16 %v323, %v315
  %v516 = vpack.c.b16 %v324, %v316
  %v517 = vpack.c.b16 %v325, %v317
  %v518 = vpack.c.b16 %v326, %v318
  %v519 = vpack.c.b16 %v327, %v319
  %v520 = vpack.c.b16 %v328, %v320
  %v521 = vpack.c.b16 %v337, %v329
  %v522 = vpack.c.b16 %v338, %v330
  %v523 = vpack.c.b16 %v339, %v331
  %v524 = vpack.c.b16 %v340, %v332
  %v525 = vpack.c.b16 %v341, %v333
  %v526 = vpack.c.b16 %v342, %v334
  %v527 = vpack.c.b16 %v343, %v335
  %v528 = vpack.c.b16 %v344, %v336
  %v529 = vpack.c.b16 %v353, %v345
  %v530 = vpack.c.b16 %v354, %v346
  %v531 = vpack.c.b16 %v355, %v347
  %v532 = vpack.c.b16 %v356, %v348
  %v533 = vpack.c.b16 %v357, %v349
  %v534 = vpack.c.b16 %v358, %v350
  %v535 = vpack.c.b16 %v359, %v351
  %v536 = vpack.c.b16 %v360, %v352
  %v537 = vpack.c.b16 %v369, %v361
  %v538 = vpack.c.b16 %v370, %v362
  %v539 = vpack.c.b16 %v371, %v363
  %v540 = vpack.c.b16 %v372, %v364
  %v541 = vpack.c.b16 %v373, %v365
  %v542 = vpack.c.b16 %v374, %v366
  %v543 = vpack.c.b16 %v375, %v367
  %v544 = vpack.c.b16 %v376, %v368
  %v545 = vpack.c.b16 %v385, %v377
  %v546 = vpack.c.b16 %v386, %v378
  %v547 = vpack.c.b16 %v387, %v379
  %v548 = vpack.c.b16 %v388, %v380
  %v549 = vpack.c.b16 %v389, %v381
  %v550 = vpack.c.b16 %v390, %v382
  %v551 = vpack.c.b16 %v391, %v383
  %v552 = vpack.c.b16 %v392, %v384
  %v553 = vpack.c.b16 %v401, %v393
  %v554 = vpack.c.b16 %v402, %v394
  %v555 = vpack.c.b16 %v403, %v395
  %v556 = vpack.c.b16 %v404, %v396
  %v557 = vpack.c.b16 %v405, %v397
  %v558 = vpack.c.b16 %v406, %v398
  %v559 = vpack.c.b16 %v407, %v399
  %v560 = vpack.c.b16 %v408, %v400
  %v561 = vpack.c.b16 %v417, %v409
  %v562 = vpack.c.b16 %v418, %v410
  %v563 = vpack.c.b16 %v419, %v411
  %v564 = vpack.c.b16 %v420, %v412
  %v565 = vpack.c.b16 %v421, %v413
  %v566 = vpack.c.b16 %v422, %v414
  %v567 = vpack.c.b16 %v423, %v415
  %v568 = vpack.c.b16 %v424, %v416
  %v569 = vpack.c.b16 %v433, %v425
  %v570 = vpack.c.b16 %v434, %v426
  %v571 = vpack.c.b16 %v435, %v427
  %v572 = vpack.c.b16 %v436, %v428
  %v573 = vpack.c.b16 %v437, %v429
  %v574 = vpack.c.b16 %v438, %v430
  %v575 = vpack.c.b16 %v439, %v431
  %v576 = vpack.c.b16 %v440, %v432
  %v577 = vpack.c.b16 %v449, %v441
  %v578 = vpack.c.b16 %v450, %v442
  %v579 = vpack.c.b16 %v451, %v443
  %v580 = vpack.c.b16 %v452, %v444
  %v581 = vpack.c.b16 %v453, %v445
  %v582 = vpack.c.b16 %v454, %v446
  %v583 = vpack.c.b16 %v455, %v447
  %v584 = vpack.c.b16 %v456, %v448
  %v585 = vpack.c.b16 %v465, %v457
  %v586 = vpack.c.b16 %v466, %v458
  %v587 = vpack.c.b16 %v467, %v459
  %v588 = vpack.c.b16 %v468, %v460
  %v589 = vpack.c.b16 %v469, %v461
  %v590 = vpack.c.b16 %v470, %v462
  %v591 = vpack.c.b16 %v471, %v463
  %v592 = vpack.c.b16 %v472, %v464
  %v593 = vpack.c.b16 %v481, %v473
  %v594 = vpack.c.b16 %v482, %v474
  %v595 = vpack.c.b16 %v483, %v475
  %v596 = vpack.c.b16 %v484, %v476
  %v597 = vpack.c.b16 %v485, %v477
  %v598 = vpack.c.b16 %v486, %v478
  %v599 = vpack.c.b16 %v487, %v479
  %v600 = vpack.c.b16 %v488, %v480
  %v601 = vpack.c.b16 %v497, %v489
  %v602 = vpack.c.b16 %v498, %v490
  %v603 = vpack.c.b16 %v499, %v491
  %v604 = vpack.c.b16 %v500, %v492
  %v605 = vpack.c.b16 %v501, %v493
  %v606 = vpack.c.b16 %v502, %v494
  %v607 = vpack.c.b16 %v503, %v495
  %v608 = vpack.c.b16 %v504, %v496
  %v609 = vpack.c.b16 %v505, %v505
  %v610 = vpack.c.b16 %v506, %v506
  %v611 = vpack.c.b16 %v507, %v507
  %v612 = vpack.c.b16 %v508, %v508
  %v613 = vpack.c.b16 %v509, %v509
  %v614 = vpack.c.b16 %v510, %v510
  %v615 = vpack.c.b16 %v511, %v511
  %v616 = vpack.c.b16 %v512, %v512
  %vm713 = vcmask 556032
  %v715 = vsel %vm713, %v211, 0
  %vm717 = vcmask 1041408
  %v719 = vsel %vm717, %v609, 0
  %v722 = vsel %vm717, %v610, 0
  %v725 = vsel %vm717, %v611, 0
  %v728 = vsel %vm717, %v612, 0
  %v731 = vsel %vm717, %v613, 0
  %v734 = vsel %vm717, %v614, 0
  %v737 = vsel %vm717, %v615, 0
  %v740 = vsel %vm717, %v616, 0
  %742 = vmatprep.subr.bf16.mxu0 %v514
  %743 = vmatpush1.bf16.msra.mxu0 %v513
  %744 = vmatprep.subr.bf16.mxu0 %v522
  %745 = vmatpush1.bf16.msra.mxu0 %v521
  %746 = vmatprep.subr.bf16.mxu0 %v530
  %747 = vmatpush1.bf16.msra.mxu0 %v529
  %748 = vmatprep.subr.bf16.mxu0 %v538
  %749 = vmatpush1.bf16.msra.mxu0 %v537
  %750 = vmatprep.subr.bf16.mxu0 %v546
  %751 = vmatpush1.bf16.msra.mxu0 %v545
  %752 = vmatprep.subr.bf16.mxu0 %v554
  %753 = vmatpush1.bf16.msra.mxu0 %v553
  %754 = vmatprep.subr.bf16.mxu0 %v562
  %755 = vmatpush1.bf16.msra.mxu0 %v561
  %756 = vmatprep.subr.bf16.mxu0 %v570
  %757 = vmatpush1.bf16.msra.mxu0 %v569
  %758 = vmatprep.subr.bf16.mxu0 %v578
  %759 = vmatpush1.bf16.msra.mxu0 %v577
  %760 = vmatprep.subr.bf16.mxu0 %v586
  %761 = vmatpush1.bf16.msra.mxu0 %v585
  %762 = vmatprep.subr.bf16.mxu0 %v594
  %763 = vmatpush1.bf16.msra.mxu0 %v593
  %764 = vmatprep.subr.bf16.mxu0 %v602
  %765 = vmatpush1.bf16.msra.mxu0 %v601
  %766 = vmatprep.subr.bf16.mxu0 %v722
  %767 = vmatpush1.bf16.msra.mxu0 %v719
  %768 = vmatprep.subr.bf16.mxu0 0
  %769 = vmatpush1.bf16.msra.mxu0 0
  %770 = vmatprep.subr.bf16.mxu0 0
  %771 = vmatpush1.bf16.msra.mxu0 0
  %772 = vmatprep.subr.bf16.mxu0 0
  %773 = vmatpush1.bf16.msra.mxu0 0
  %774 = vmatprep.mubr.bf16.mxu0 %v715
  %775 = vmatmul.mubr.bf16.gmra.mrb[0].mxu0 %v210
  %v776 = vpop.f32.mrb[0].mxu0
  %v777 = vadd.f32 %v167, %v776
  %v778 = vpop.f32.mrb[0].mxu0
  %v779 = vadd.f32 %v171, %v778
  %v780 = vpop.f32.mrb[0].mxu0
  %v781 = vadd.f32 %v167, %v780
  %v782 = vpop.f32.mrb[0].mxu0
  %v783 = vadd.f32 %v171, %v782
  %784 = vdwg.mxu0
  %785 = vmatprep.subr.bf16.mxu0 %v516
  %786 = vmatpush1.bf16.msra.mxu0 %v515
  %787 = vmatprep.subr.bf16.mxu0 %v524
  %788 = vmatpush1.bf16.msra.mxu0 %v523
  %789 = vmatprep.subr.bf16.mxu0 %v532
  %790 = vmatpush1.bf16.msra.mxu0 %v531
  %791 = vmatprep.subr.bf16.mxu0 %v540
  %792 = vmatpush1.bf16.msra.mxu0 %v539
  %793 = vmatprep.subr.bf16.mxu0 %v548
  %794 = vmatpush1.bf16.msra.mxu0 %v547
  %795 = vmatprep.subr.bf16.mxu0 %v556
  %796 = vmatpush1.bf16.msra.mxu0 %v555
  %797 = vmatprep.subr.bf16.mxu0 %v564
  %798 = vmatpush1.bf16.msra.mxu0 %v563
  %799 = vmatprep.subr.bf16.mxu0 %v572
  %800 = vmatpush1.bf16.msra.mxu0 %v571
  %801 = vmatprep.subr.bf16.mxu0 %v580
  %802 = vmatpush1.bf16.msra.mxu0 %v579
  %803 = vmatprep.subr.bf16.mxu0 %v588
  %804 = vmatpush1.bf16.msra.mxu0 %v587
  %805 = vmatprep.subr.bf16.mxu0 %v596
  %806 = vmatpush1.bf16.msra.mxu0 %v595
  %807 = vmatprep.subr.bf16.mxu0 %v604
  %808 = vmatpush1.bf16.msra.mxu0 %v603
  %809 = vmatprep.subr.bf16.mxu0 %v728
  %810 = vmatpush1.bf16.msra.mxu0 %v725
  %811 = vmatprep.subr.bf16.mxu0 0
  %812 = vmatpush1.bf16.msra.mxu0 0
  %813 = vmatprep.subr.bf16.mxu0 0
  %814 = vmatpush1.bf16.msra.mxu0 0
  %815 = vmatprep.subr.bf16.mxu0 0
  %816 = vmatpush1.bf16.msra.mxu0 0
  %817 = vmatprep.mubr.bf16.mxu0 %v715
  %818 = vmatmul.mubr.bf16.gmra.mrb[0].mxu0 %v210
  %v819 = vpop.f32.mrb[0].mxu0
  %v820 = vadd.f32 %v175, %v819
  %v821 = vpop.f32.mrb[0].mxu0
  %v822 = vadd.f32 %v179, %v821
  %v823 = vpop.f32.mrb[0].mxu0
  %v824 = vadd.f32 %v175, %v823
  %v825 = vpop.f32.mrb[0].mxu0
  %v826 = vadd.f32 %v179, %v825
  %827 = vdwg.mxu0
  %828 = vmatprep.subr.bf16.mxu0 %v518
  %829 = vmatpush1.bf16.msra.mxu0 %v517
  %830 = vmatprep.subr.bf16.mxu0 %v526
  %831 = vmatpush1.bf16.msra.mxu0 %v525
  %832 = vmatprep.subr.bf16.mxu0 %v534
  %833 = vmatpush1.bf16.msra.mxu0 %v533
  %834 = vmatprep.subr.bf16.mxu0 %v542
  %835 = vmatpush1.bf16.msra.mxu0 %v541
  %836 = vmatprep.subr.bf16.mxu0 %v550
  %837 = vmatpush1.bf16.msra.mxu0 %v549
  %838 = vmatprep.subr.bf16.mxu0 %v558
  %839 = vmatpush1.bf16.msra.mxu0 %v557
  %840 = vmatprep.subr.bf16.mxu0 %v566
  %841 = vmatpush1.bf16.msra.mxu0 %v565
  %842 = vmatprep.subr.bf16.mxu0 %v574
  %843 = vmatpush1.bf16.msra.mxu0 %v573
  %844 = vmatprep.subr.bf16.mxu0 %v582
  %845 = vmatpush1.bf16.msra.mxu0 %v581
  %846 = vmatprep.subr.bf16.mxu0 %v590
  %847 = vmatpush1.bf16.msra.mxu0 %v589
  %848 = vmatprep.subr.bf16.mxu0 %v598
  %849 = vmatpush1.bf16.msra.mxu0 %v597
  %850 = vmatprep.subr.bf16.mxu0 %v606
  %851 = vmatpush1.bf16.msra.mxu0 %v605
  %852 = vmatprep.subr.bf16.mxu0 %v734
  %853 = vmatpush1.bf16.msra.mxu0 %v731
  %854 = vmatprep.subr.bf16.mxu0 0
  %855 = vmatpush1.bf16.msra.mxu0 0
  %856 = vmatprep.subr.bf16.mxu0 0
  %857 = vmatpush1.bf16.msra.mxu0 0
  %858 = vmatprep.subr.bf16.mxu0 0
  %859 = vmatpush1.bf16.msra.mxu0 0
  %860 = vmatprep.mubr.bf16.mxu0 %v715
  %861 = vmatmul.mubr.bf16.gmra.mrb[0].mxu0 %v210
  %v862 = vpop.f32.mrb[0].mxu0
  %v863 = vadd.f32 %v183, %v862
  %v864 = vpop.f32.mrb[0].mxu0
  %v865 = vadd.f32 %v187, %v864
  %v866 = vpop.f32.mrb[0].mxu0
  %v867 = vadd.f32 %v183, %v866
  %v868 = vpop.f32.mrb[0].mxu0
  %v869 = vadd.f32 %v187, %v868
  %870 = vdwg.mxu0
  %871 = vmatprep.subr.bf16.mxu0 %v520
  %872 = vmatpush1.bf16.msra.mxu0 %v519
  %873 = vmatprep.subr.bf16.mxu0 %v528
  %874 = vmatpush1.bf16.msra.mxu0 %v527
  %875 = vmatprep.subr.bf16.mxu0 %v536
  %876 = vmatpush1.bf16.msra.mxu0 %v535
  %877 = vmatprep.subr.bf16.mxu0 %v544
  %878 = vmatpush1.bf16.msra.mxu0 %v543
  %879 = vmatprep.subr.bf16.mxu0 %v552
  %880 = vmatpush1.bf16.msra.mxu0 %v551
  %881 = vmatprep.subr.bf16.mxu0 %v560
  %882 = vmatpush1.bf16.msra.mxu0 %v559
  %883 = vmatprep.subr.bf16.mxu0 %v568
  %884 = vmatpush1.bf16.msra.mxu0 %v567
  %885 = vmatprep.subr.bf16.mxu0 %v576
  %886 = vmatpush1.bf16.msra.mxu0 %v575
  %887 = vmatprep.subr.bf16.mxu0 %v584
  %888 = vmatpush1.bf16.msra.mxu0 %v583
  %889 = vmatprep.subr.bf16.mxu0 %v592
  %890 = vmatpush1.bf16.msra.mxu0 %v591
  %891 = vmatprep.subr.bf16.mxu0 %v600
  %892 = vmatpush1.bf16.msra.mxu0 %v599
  %893 = vmatprep.subr.bf16.mxu0 %v608
  %894 = vmatpush1.bf16.msra.mxu0 %v607
  %895 = vmatprep.subr.bf16.mxu0 %v740
  %896 = vmatpush1.bf16.msra.mxu0 %v737
  %897 = vmatprep.subr.bf16.mxu0 0
  %898 = vmatpush1.bf16.msra.mxu0 0
  %899 = vmatprep.subr.bf16.mxu0 0
  %900 = vmatpush1.bf16.msra.mxu0 0
  %901 = vmatprep.subr.bf16.mxu0 0
  %902 = vmatpush1.bf16.msra.mxu0 0
  %903 = vmatprep.mubr.bf16.mxu0 %v715
  %904 = vmatmul.mubr.bf16.gmra.mrb[0].mxu0 %v210
  %v905 = vpop.f32.mrb[0].mxu0
  %v906 = vadd.f32 %v191, %v905
  %v907 = vpop.f32.mrb[0].mxu0
  %v908 = vadd.f32 %v195, %v907
  %v909 = vpop.f32.mrb[0].mxu0
  %v910 = vadd.f32 %v191, %v909
  %v911 = vpop.f32.mrb[0].mxu0
  %v912 = vadd.f32 %v195, %v911
  %913 = vdwg.mxu0
  %v914 = vsub.f32 0.0, %v777
  %v915 = vsub.f32 0.0, %v779
  %v916 = vsub.f32 0.0, %v820
  %v917 = vsub.f32 0.0, %v822
  %v918 = vsub.f32 0.0, %v863
  %v919 = vsub.f32 0.0, %v865
  %v920 = vsub.f32 0.0, %v906
  %v921 = vsub.f32 0.0, %v908
  %v922 = vsub.f32 0.0, %v781
  %v923 = vsub.f32 0.0, %v783
  %v924 = vsub.f32 0.0, %v824
  %v925 = vsub.f32 0.0, %v826
  %v926 = vsub.f32 0.0, %v867
  %v927 = vsub.f32 0.0, %v869
  %v928 = vsub.f32 0.0, %v910
  %v929 = vsub.f32 0.0, %v912
  %v930 = vmul.f32 %v914, 1.442695
  %v931 = vpow.pop %v930
  %v932 = vmul.f32 %v915, 1.442695
  %v933 = vpow.pop %v932
  %v934 = vmul.f32 %v916, 1.442695
  %v935 = vpow.pop %v934
  %v936 = vmul.f32 %v917, 1.442695
  %v937 = vpow.pop %v936
  %v938 = vmul.f32 %v918, 1.442695
  %v939 = vpow.pop %v938
  %v940 = vmul.f32 %v919, 1.442695
  %v941 = vpow.pop %v940
  %v942 = vmul.f32 %v920, 1.442695
  %v943 = vpow.pop %v942
  %v944 = vmul.f32 %v921, 1.442695
  %v945 = vpow.pop %v944
  %v946 = vmul.f32 %v922, 1.442695
  %v947 = vpow.pop %v946
  %v948 = vmul.f32 %v923, 1.442695
  %v949 = vpow.pop %v948
  %v950 = vmul.f32 %v924, 1.442695
  %v951 = vpow.pop %v950
  %v952 = vmul.f32 %v925, 1.442695
  %v953 = vpow.pop %v952
  %v954 = vmul.f32 %v926, 1.442695
  %v955 = vpow.pop %v954
  %v956 = vmul.f32 %v927, 1.442695
  %v957 = vpow.pop %v956
  %v958 = vmul.f32 %v928, 1.442695
  %v959 = vpow.pop %v958
  %v960 = vmul.f32 %v929, 1.442695
  %v961 = vpow.pop %v960
  %v962 = vadd.f32 %v931, 1.0
  %v963 = vadd.f32 %v933, 1.0
  %v964 = vadd.f32 %v935, 1.0
  %v965 = vadd.f32 %v937, 1.0
  %v966 = vadd.f32 %v939, 1.0
  %v967 = vadd.f32 %v941, 1.0
  %v968 = vadd.f32 %v943, 1.0
  %v969 = vadd.f32 %v945, 1.0
  %v970 = vadd.f32 %v947, 1.0
  %v971 = vadd.f32 %v949, 1.0
  %v972 = vadd.f32 %v951, 1.0
  %v973 = vadd.f32 %v953, 1.0
  %v974 = vadd.f32 %v955, 1.0
  %v975 = vadd.f32 %v957, 1.0
  %v976 = vadd.f32 %v959, 1.0
  %v977 = vadd.f32 %v961, 1.0
  %v978 = vrcp.pop %v962
  %v979 = vrcp.pop %v963
  %v980 = vrcp.pop %v964
  %v981 = vrcp.pop %v965
  %v982 = vrcp.pop %v966
  %v983 = vrcp.pop %v967
  %v984 = vrcp.pop %v968
  %v985 = vrcp.pop %v969
  %v986 = vrcp.pop %v970
  %v987 = vrcp.pop %v971
  %v988 = vrcp.pop %v972
  %v989 = vrcp.pop %v973
  %v990 = vrcp.pop %v974
  %v991 = vrcp.pop %v975
  %v992 = vrcp.pop %v976
  %v993 = vrcp.pop %v977
  %v994 = vpack.c.bf16 %v986, %v978
  %v995 = vpack.c.bf16 %v987, %v979
  %v996 = vpack.c.bf16 %v988, %v980
  %v997 = vpack.c.bf16 %v989, %v981
  %v998 = vpack.c.bf16 %v990, %v982
  %v999 = vpack.c.bf16 %v991, %v983
  %v1000 = vpack.c.bf16 %v992, %v984
  %v1001 = vpack.c.bf16 %v993, %v985
  %v1002 = vld [vmem:[%s4] sm:$0xff]
  %v1003 = vld [vmem:[%s4 + $0x8] sm:$0xff]
  %v1004 = vld [vmem:[%s4 + $0x10] sm:$0xff]
  %v1005 = vld [vmem:[%s4 + $0x18] sm:$0xff]
  %v1006 = vld [vmem:[%s4 + $0x20] sm:$0xff]
  %v1007 = vld [vmem:[%s4 + $0x28] sm:$0xff]
  %v1008 = vld [vmem:[%s4 + $0x30] sm:$0xff]
  %v1009 = vld [vmem:[%s4 + $0x38] sm:$0xff]
  %v1010 = vld [vmem:[%s4 + $0x40] sm:$0xff]
  %v1011 = vld [vmem:[%s4 + $0x48] sm:$0xff]
  %v1012 = vld [vmem:[%s4 + $0x50] sm:$0xff]
  %v1013 = vld [vmem:[%s4 + $0x58] sm:$0xff]
  %v1014 = vld [vmem:[%s4 + $0x60] sm:$0xff]
  %v1015 = vld [vmem:[%s4 + $0x68] sm:$0xff]
  %v1016 = vld [vmem:[%s4 + $0x70] sm:$0xff]
  %v1017 = vld [vmem:[%s4 + $0x78] sm:$0xff]
  %v1018 = vld [vmem:[%s4 + $0x80] sm:$0xff]
  %v1019 = vld [vmem:[%s4 + $0x88] sm:$0xff]
  %v1020 = vld [vmem:[%s4 + $0x90] sm:$0xff]
  %v1021 = vld [vmem:[%s4 + $0x98] sm:$0xff]
  %v1022 = vld [vmem:[%s4 + $0xa0] sm:$0xff]
  %v1023 = vld [vmem:[%s4 + $0xa8] sm:$0xff]
  %v1024 = vld [vmem:[%s4 + $0xb0] sm:$0xff]
  %v1025 = vld [vmem:[%s4 + $0xb8] sm:$0xff]
  %v1026 = vld [vmem:[%s4 + $0xc0] sm:$0xff]
  %v1027 = vld [vmem:[%s4 + $0xc8] sm:$0xff]
  %v1028 = vld [vmem:[%s4 + $0xd0] sm:$0xff]
  %v1029 = vld [vmem:[%s4 + $0xd8] sm:$0xff]
  %v1030 = vld [vmem:[%s4 + $0xe0] sm:$0xff]
  %v1031 = vld [vmem:[%s4 + $0xe8] sm:$0xff]
  %v1032 = vld [vmem:[%s4 + $0xf0] sm:$0xff]
  %v1033 = vld [vmem:[%s4 + $0xf8] sm:$0xff]
  %v1034 = vld [vmem:[%s4 + $0x100] sm:$0xff]
  %v1035 = vld [vmem:[%s4 + $0x108] sm:$0xff]
  %v1036 = vld [vmem:[%s4 + $0x110] sm:$0xff]
  %v1037 = vld [vmem:[%s4 + $0x118] sm:$0xff]
  %v1038 = vld [vmem:[%s4 + $0x120] sm:$0xff]
  %v1039 = vld [vmem:[%s4 + $0x128] sm:$0xff]
  %v1040 = vld [vmem:[%s4 + $0x130] sm:$0xff]
  %v1041 = vld [vmem:[%s4 + $0x138] sm:$0xff]
  %v1042 = vld [vmem:[%s4 + $0x140] sm:$0xff]
  %v1043 = vld [vmem:[%s4 + $0x148] sm:$0xff]
  %v1044 = vld [vmem:[%s4 + $0x150] sm:$0xff]
  %v1045 = vld [vmem:[%s4 + $0x158] sm:$0xff]
  %v1046 = vld [vmem:[%s4 + $0x160] sm:$0xff]
  %v1047 = vld [vmem:[%s4 + $0x168] sm:$0xff]
  %v1048 = vld [vmem:[%s4 + $0x170] sm:$0xff]
  %v1049 = vld [vmem:[%s4 + $0x178] sm:$0xff]
  %v1050 = vld [vmem:[%s4 + $0x180] sm:$0xff]
  %v1051 = vld [vmem:[%s4 + $0x188] sm:$0xff]
  %v1052 = vld [vmem:[%s4 + $0x190] sm:$0xff]
  %v1053 = vld [vmem:[%s4 + $0x198] sm:$0xff]
  %v1054 = vld [vmem:[%s4 + $0x1a0] sm:$0xff]
  %v1055 = vld [vmem:[%s4 + $0x1a8] sm:$0xff]
  %v1056 = vld [vmem:[%s4 + $0x1b0] sm:$0xff]
  %v1057 = vld [vmem:[%s4 + $0x1b8] sm:$0xff]
  %v1058 = vld [vmem:[%s4 + $0x1c0] sm:$0xff]
  %v1059 = vld [vmem:[%s4 + $0x1c8] sm:$0xff]
  %v1060 = vld [vmem:[%s4 + $0x1d0] sm:$0xff]
  %v1061 = vld [vmem:[%s4 + $0x1d8] sm:$0xff]
  %v1062 = vld [vmem:[%s4 + $0x1e0] sm:$0xff]
  %v1063 = vld [vmem:[%s4 + $0x1e8] sm:$0xff]
  %v1064 = vld [vmem:[%s4 + $0x1f0] sm:$0xff]
  %v1065 = vld [vmem:[%s4 + $0x1f8] sm:$0xff]
  %v1066 = vld [vmem:[%s4 + $0x200] sm:$0xff]
  %v1067 = vld [vmem:[%s4 + $0x208] sm:$0xff]
  %v1068 = vld [vmem:[%s4 + $0x210] sm:$0xff]
  %v1069 = vld [vmem:[%s4 + $0x218] sm:$0xff]
  %v1070 = vld [vmem:[%s4 + $0x220] sm:$0xff]
  %v1071 = vld [vmem:[%s4 + $0x228] sm:$0xff]
  %v1072 = vld [vmem:[%s4 + $0x230] sm:$0xff]
  %v1073 = vld [vmem:[%s4 + $0x238] sm:$0xff]
  %v1074 = vld [vmem:[%s4 + $0x240] sm:$0xff]
  %v1075 = vld [vmem:[%s4 + $0x248] sm:$0xff]
  %v1076 = vld [vmem:[%s4 + $0x250] sm:$0xff]
  %v1077 = vld [vmem:[%s4 + $0x258] sm:$0xff]
  %v1078 = vld [vmem:[%s4 + $0x260] sm:$0xff]
  %v1079 = vld [vmem:[%s4 + $0x268] sm:$0xff]
  %v1080 = vld [vmem:[%s4 + $0x270] sm:$0xff]
  %v1081 = vld [vmem:[%s4 + $0x278] sm:$0xff]
  %v1082 = vld [vmem:[%s4 + $0x280] sm:$0xff]
  %v1083 = vld [vmem:[%s4 + $0x288] sm:$0xff]
  %v1084 = vld [vmem:[%s4 + $0x290] sm:$0xff]
  %v1085 = vld [vmem:[%s4 + $0x298] sm:$0xff]
  %v1086 = vld [vmem:[%s4 + $0x2a0] sm:$0xff]
  %v1087 = vld [vmem:[%s4 + $0x2a8] sm:$0xff]
  %v1088 = vld [vmem:[%s4 + $0x2b0] sm:$0xff]
  %v1089 = vld [vmem:[%s4 + $0x2b8] sm:$0xff]
  %v1090 = vld [vmem:[%s4 + $0x2c0] sm:$0xff]
  %v1091 = vld [vmem:[%s4 + $0x2c8] sm:$0xff]
  %v1092 = vld [vmem:[%s4 + $0x2d0] sm:$0xff]
  %v1093 = vld [vmem:[%s4 + $0x2d8] sm:$0xff]
  %v1094 = vld [vmem:[%s4 + $0x2e0] sm:$0xff]
  %v1095 = vld [vmem:[%s4 + $0x2e8] sm:$0xff]
  %v1096 = vld [vmem:[%s4 + $0x2f0] sm:$0xff]
  %v1097 = vld [vmem:[%s4 + $0x2f8] sm:$0xff]
  %v1098 = vld [vmem:[%s4 + $0x300] sm:$0xff]
  %v1099 = vld [vmem:[%s4 + $0x308] sm:$0xff]
  %v1100 = vld [vmem:[%s4 + $0x310] sm:$0xff]
  %v1101 = vld [vmem:[%s4 + $0x318] sm:$0xff]
  %v1102 = vld [vmem:[%s4 + $0x320] sm:$0xff]
  %v1103 = vld [vmem:[%s4 + $0x328] sm:$0xff]
  %v1104 = vld [vmem:[%s4 + $0x330] sm:$0xff]
  %v1105 = vld [vmem:[%s4 + $0x338] sm:$0xff]
  %v1106 = vld [vmem:[%s4 + $0x340] sm:$0xff]
  %v1107 = vld [vmem:[%s4 + $0x348] sm:$0xff]
  %v1108 = vld [vmem:[%s4 + $0x350] sm:$0xff]
  %v1109 = vld [vmem:[%s4 + $0x358] sm:$0xff]
  %v1110 = vld [vmem:[%s4 + $0x360] sm:$0xff]
  %v1111 = vld [vmem:[%s4 + $0x368] sm:$0xff]
  %v1112 = vld [vmem:[%s4 + $0x370] sm:$0xff]
  %v1113 = vld [vmem:[%s4 + $0x378] sm:$0xff]
  %v1114 = vld [vmem:[%s4 + $0x380] sm:$0xff]
  %v1115 = vld [vmem:[%s4 + $0x388] sm:$0xff]
  %v1116 = vld [vmem:[%s4 + $0x390] sm:$0xff]
  %v1117 = vld [vmem:[%s4 + $0x398] sm:$0xff]
  %v1118 = vld [vmem:[%s4 + $0x3a0] sm:$0xff]
  %v1119 = vld [vmem:[%s4 + $0x3a8] sm:$0xff]
  %v1120 = vld [vmem:[%s4 + $0x3b0] sm:$0xff]
  %v1121 = vld [vmem:[%s4 + $0x3b8] sm:$0xff]
  %v1122 = vld [vmem:[%s4 + $0x3c0] sm:$0xff]
  %v1123 = vld [vmem:[%s4 + $0x3c8] sm:$0xff]
  %v1124 = vld [vmem:[%s4 + $0x3d0] sm:$0xff]
  %v1125 = vld [vmem:[%s4 + $0x3d8] sm:$0xff]
  %v1126 = vld [vmem:[%s4 + $0x3e0] sm:$0xff]
  %v1127 = vld [vmem:[%s4 + $0x3e8] sm:$0xff]
  %v1128 = vld [vmem:[%s4 + $0x3f0] sm:$0xff]
  %v1129 = vld [vmem:[%s4 + $0x3f8] sm:$0xff]
  %v1130 = vld [vmem:[%s4 + $0x400] sm:$0xff]
  %v1131 = vld [vmem:[%s4 + $0x408] sm:$0xff]
  %v1132 = vld [vmem:[%s4 + $0x410] sm:$0xff]
  %v1133 = vld [vmem:[%s4 + $0x418] sm:$0xff]
  %v1134 = vld [vmem:[%s4 + $0x420] sm:$0xff]
  %v1135 = vld [vmem:[%s4 + $0x428] sm:$0xff]
  %v1136 = vld [vmem:[%s4 + $0x430] sm:$0xff]
  %v1137 = vld [vmem:[%s4 + $0x438] sm:$0xff]
  %v1138 = vld [vmem:[%s4 + $0x440] sm:$0xff]
  %v1139 = vld [vmem:[%s4 + $0x448] sm:$0xff]
  %v1140 = vld [vmem:[%s4 + $0x450] sm:$0xff]
  %v1141 = vld [vmem:[%s4 + $0x458] sm:$0xff]
  %v1142 = vld [vmem:[%s4 + $0x460] sm:$0xff]
  %v1143 = vld [vmem:[%s4 + $0x468] sm:$0xff]
  %v1144 = vld [vmem:[%s4 + $0x470] sm:$0xff]
  %v1145 = vld [vmem:[%s4 + $0x478] sm:$0xff]
  %v1146 = vld [vmem:[%s4 + $0x480] sm:$0xff]
  %v1147 = vld [vmem:[%s4 + $0x488] sm:$0xff]
  %v1148 = vld [vmem:[%s4 + $0x490] sm:$0xff]
  %v1149 = vld [vmem:[%s4 + $0x498] sm:$0xff]
  %v1150 = vld [vmem:[%s4 + $0x4a0] sm:$0xff]
  %v1151 = vld [vmem:[%s4 + $0x4a8] sm:$0xff]
  %v1152 = vld [vmem:[%s4 + $0x4b0] sm:$0xff]
  %v1153 = vld [vmem:[%s4 + $0x4b8] sm:$0xff]
  %v1154 = vld [vmem:[%s4 + $0x4c0] sm:$0xff]
  %v1155 = vld [vmem:[%s4 + $0x4c8] sm:$0xff]
  %v1156 = vld [vmem:[%s4 + $0x4d0] sm:$0xff]
  %v1157 = vld [vmem:[%s4 + $0x4d8] sm:$0xff]
  %v1158 = vld [vmem:[%s4 + $0x4e0] sm:$0xff]
  %v1159 = vld [vmem:[%s4 + $0x4e8] sm:$0xff]
  %v1160 = vld [vmem:[%s4 + $0x4f0] sm:$0xff]
  %v1161 = vld [vmem:[%s4 + $0x4f8] sm:$0xff]
  %v1162 = vld [vmem:[%s4 + $0x500] sm:$0xff]
  %v1163 = vld [vmem:[%s4 + $0x508] sm:$0xff]
  %v1164 = vld [vmem:[%s4 + $0x510] sm:$0xff]
  %v1165 = vld [vmem:[%s4 + $0x518] sm:$0xff]
  %v1166 = vld [vmem:[%s4 + $0x520] sm:$0xff]
  %v1167 = vld [vmem:[%s4 + $0x528] sm:$0xff]
  %v1168 = vld [vmem:[%s4 + $0x530] sm:$0xff]
  %v1169 = vld [vmem:[%s4 + $0x538] sm:$0xff]
  %v1170 = vld [vmem:[%s4 + $0x540] sm:$0xff]
  %v1171 = vld [vmem:[%s4 + $0x548] sm:$0xff]
  %v1172 = vld [vmem:[%s4 + $0x550] sm:$0xff]
  %v1173 = vld [vmem:[%s4 + $0x558] sm:$0xff]
  %v1174 = vld [vmem:[%s4 + $0x560] sm:$0xff]
  %v1175 = vld [vmem:[%s4 + $0x568] sm:$0xff]
  %v1176 = vld [vmem:[%s4 + $0x570] sm:$0xff]
  %v1177 = vld [vmem:[%s4 + $0x578] sm:$0xff]
  %v1178 = vld [vmem:[%s4 + $0x580] sm:$0xff]
  %v1179 = vld [vmem:[%s4 + $0x588] sm:$0xff]
  %v1180 = vld [vmem:[%s4 + $0x590] sm:$0xff]
  %v1181 = vld [vmem:[%s4 + $0x598] sm:$0xff]
  %v1182 = vld [vmem:[%s4 + $0x5a0] sm:$0xff]
  %v1183 = vld [vmem:[%s4 + $0x5a8] sm:$0xff]
  %v1184 = vld [vmem:[%s4 + $0x5b0] sm:$0xff]
  %v1185 = vld [vmem:[%s4 + $0x5b8] sm:$0xff]
  %v1186 = vld [vmem:[%s4 + $0x5c0] sm:$0xff]
  %v1187 = vld [vmem:[%s4 + $0x5c8] sm:$0xff]
  %v1188 = vld [vmem:[%s4 + $0x5d0] sm:$0xff]
  %v1189 = vld [vmem:[%s4 + $0x5d8] sm:$0xff]
  %v1190 = vld [vmem:[%s4 + $0x5e0] sm:$0xff]
  %v1191 = vld [vmem:[%s4 + $0x5e8] sm:$0xff]
  %v1192 = vld [vmem:[%s4 + $0x5f0] sm:$0xff]
  %v1193 = vld [vmem:[%s4 + $0x5f8] sm:$0xff]
  %v1194 = vld [vmem:[%s4 + $0x600] sm:$0xff]
  %v1195 = vld [vmem:[%s4 + $0x608] sm:$0xff]
  %v1196 = vld [vmem:[%s4 + $0x610] sm:$0xff]
  %v1197 = vld [vmem:[%s4 + $0x618] sm:$0xff]
  %v1198 = vld [vmem:[%s4 + $0x620] sm:$0xff]
  %v1199 = vld [vmem:[%s4 + $0x628] sm:$0xff]
  %v1200 = vld [vmem:[%s4 + $0x630] sm:$0xff]
  %v1201 = vld [vmem:[%s4 + $0x638] sm:$0xff]
  %v1202 = vld [vmem:[%s4 + $0x640] sm:$0xff]
  %v1203 = vld [vmem:[%s4 + $0x648] sm:$0xff]
  %v1204 = vld [vmem:[%s4 + $0x650] sm:$0xff]
  %v1205 = vld [vmem:[%s4 + $0x658] sm:$0xff]
  %v1206 = vld [vmem:[%s4 + $0x660] sm:$0xff]
  %v1207 = vld [vmem:[%s4 + $0x668] sm:$0xff]
  %v1208 = vld [vmem:[%s4 + $0x670] sm:$0xff]
  %v1209 = vld [vmem:[%s4 + $0x678] sm:$0xff]
  %v1210 = vld [vmem:[%s4 + $0x680] sm:$0xff]
  %v1211 = vld [vmem:[%s4 + $0x688] sm:$0xff]
  %v1212 = vld [vmem:[%s4 + $0x690] sm:$0xff]
  %v1213 = vld [vmem:[%s4 + $0x698] sm:$0xff]
  %v1214 = vld [vmem:[%s4 + $0x6a0] sm:$0xff]
  %v1215 = vld [vmem:[%s4 + $0x6a8] sm:$0xff]
  %v1216 = vld [vmem:[%s4 + $0x6b0] sm:$0xff]
  %v1217 = vld [vmem:[%s4 + $0x6b8] sm:$0xff]
  %v1218 = vld [vmem:[%s4 + $0x6c0] sm:$0xff]
  %v1219 = vld [vmem:[%s4 + $0x6c8] sm:$0xff]
  %v1220 = vld [vmem:[%s4 + $0x6d0] sm:$0xff]
  %v1221 = vld [vmem:[%s4 + $0x6d8] sm:$0xff]
  %v1222 = vld [vmem:[%s4 + $0x6e0] sm:$0xff]
  %v1223 = vld [vmem:[%s4 + $0x6e8] sm:$0xff]
  %v1224 = vld [vmem:[%s4 + $0x6f0] sm:$0xff]
  %v1225 = vld [vmem:[%s4 + $0x6f8] sm:$0xff]
  %v1226 = vld [vmem:[%s4 + $0x700] sm:$0xff]
  %v1227 = vld [vmem:[%s4 + $0x708] sm:$0xff]
  %v1228 = vld [vmem:[%s4 + $0x710] sm:$0xff]
  %v1229 = vld [vmem:[%s4 + $0x718] sm:$0xff]
  %v1230 = vld [vmem:[%s4 + $0x720] sm:$0xff]
  %v1231 = vld [vmem:[%s4 + $0x728] sm:$0xff]
  %v1232 = vld [vmem:[%s4 + $0x730] sm:$0xff]
  %v1233 = vld [vmem:[%s4 + $0x738] sm:$0xff]
  %v1234 = vld [vmem:[%s4 + $0x740] sm:$0xff]
  %v1235 = vld [vmem:[%s4 + $0x748] sm:$0xff]
  %v1236 = vld [vmem:[%s4 + $0x750] sm:$0xff]
  %v1237 = vld [vmem:[%s4 + $0x758] sm:$0xff]
  %v1238 = vld [vmem:[%s4 + $0x760] sm:$0xff]
  %v1239 = vld [vmem:[%s4 + $0x768] sm:$0xff]
  %v1240 = vld [vmem:[%s4 + $0x770] sm:$0xff]
  %v1241 = vld [vmem:[%s4 + $0x778] sm:$0xff]
  %v1242 = vld [vmem:[%s4 + $0x780] sm:$0xff]
  %v1243 = vld [vmem:[%s4 + $0x788] sm:$0xff]
  %v1244 = vld [vmem:[%s4 + $0x790] sm:$0xff]
  %v1245 = vld [vmem:[%s4 + $0x798] sm:$0xff]
  %v1246 = vld [vmem:[%s4 + $0x7a0] sm:$0x33]
  %v1247 = vld [vmem:[%s4 + $0x7a8] sm:$0x33]
  %v1248 = vld [vmem:[%s5] sm:$0xf]
  %v1250 = vlaneseq
  %v1251 = vshrl.u32 %v1250, 7
  %v1252 = vsub.s32 0, %v1251
  %v1253 = vrot.slane %v1248, %v1252
  %v1254 = vlaneseq
  %v1255 = vshrl.u32 %v1254, 7
  %v1256 = vsub.s32 1, %v1255
  %v1257 = vrot.slane %v1248, %v1256
  %v1258 = vlaneseq
  %v1259 = vshrl.u32 %v1258, 7
  %v1260 = vsub.s32 2, %v1259
  %v1261 = vrot.slane %v1248, %v1260
  %v1262 = vlaneseq
  %v1263 = vshrl.u32 %v1262, 7
  %v1264 = vsub.s32 3, %v1263
  %v1265 = vrot.slane %v1248, %v1264
  %v1516 = vunpack.c.l.b16 %v1002
  %v1517 = vunpack.c.h.b16 %v1002
  %v1518 = vunpack.c.l.b16 %v1003
  %v1519 = vunpack.c.h.b16 %v1003
  %v1520 = vunpack.c.l.b16 %v1004
  %v1521 = vunpack.c.h.b16 %v1004
  %v1522 = vunpack.c.l.b16 %v1005
  %v1523 = vunpack.c.h.b16 %v1005
  %v1524 = vunpack.c.l.b16 %v1006
  %v1525 = vunpack.c.h.b16 %v1006
  %v1526 = vunpack.c.l.b16 %v1007
  %v1527 = vunpack.c.h.b16 %v1007
  %v1528 = vunpack.c.l.b16 %v1008
  %v1529 = vunpack.c.h.b16 %v1008
  %v1530 = vunpack.c.l.b16 %v1009
  %v1531 = vunpack.c.h.b16 %v1009
  %v1532 = vunpack.c.l.b16 %v1010
  %v1533 = vunpack.c.h.b16 %v1010
  %v1534 = vunpack.c.l.b16 %v1011
  %v1535 = vunpack.c.h.b16 %v1011
  %v1536 = vunpack.c.l.b16 %v1012
  %v1537 = vunpack.c.h.b16 %v1012
  %v1538 = vunpack.c.l.b16 %v1013
  %v1539 = vunpack.c.h.b16 %v1013
  %v1540 = vunpack.c.l.b16 %v1014
  %v1541 = vunpack.c.h.b16 %v1014
  %v1542 = vunpack.c.l.b16 %v1015
  %v1543 = vunpack.c.h.b16 %v1015
  %v1544 = vunpack.c.l.b16 %v1016
  %v1545 = vunpack.c.h.b16 %v1016
  %v1546 = vunpack.c.l.b16 %v1017
  %v1547 = vunpack.c.h.b16 %v1017
  %v1548 = vunpack.c.l.b16 %v1018
  %v1549 = vunpack.c.h.b16 %v1018
  %v1550 = vunpack.c.l.b16 %v1019
  %v1551 = vunpack.c.h.b16 %v1019
  %v1552 = vunpack.c.l.b16 %v1020
  %v1553 = vunpack.c.h.b16 %v1020
  %v1554 = vunpack.c.l.b16 %v1021
  %v1555 = vunpack.c.h.b16 %v1021
  %v1556 = vunpack.c.l.b16 %v1022
  %v1557 = vunpack.c.h.b16 %v1022
  %v1558 = vunpack.c.l.b16 %v1023
  %v1559 = vunpack.c.h.b16 %v1023
  %v1560 = vunpack.c.l.b16 %v1024
  %v1561 = vunpack.c.h.b16 %v1024
  %v1562 = vunpack.c.l.b16 %v1025
  %v1563 = vunpack.c.h.b16 %v1025
  %v1564 = vunpack.c.l.b16 %v1026
  %v1565 = vunpack.c.h.b16 %v1026
  %v1566 = vunpack.c.l.b16 %v1027
  %v1567 = vunpack.c.h.b16 %v1027
  %v1568 = vunpack.c.l.b16 %v1028
  %v1569 = vunpack.c.h.b16 %v1028
  %v1570 = vunpack.c.l.b16 %v1029
  %v1571 = vunpack.c.h.b16 %v1029
  %v1572 = vunpack.c.l.b16 %v1030
  %v1573 = vunpack.c.h.b16 %v1030
  %v1574 = vunpack.c.l.b16 %v1031
  %v1575 = vunpack.c.h.b16 %v1031
  %v1576 = vunpack.c.l.b16 %v1032
  %v1577 = vunpack.c.h.b16 %v1032
  %v1578 = vunpack.c.l.b16 %v1033
  %v1579 = vunpack.c.h.b16 %v1033
  %v1580 = vunpack.c.l.b16 %v1034
  %v1581 = vunpack.c.h.b16 %v1034
  %v1582 = vunpack.c.l.b16 %v1035
  %v1583 = vunpack.c.h.b16 %v1035
  %v1584 = vunpack.c.l.b16 %v1036
  %v1585 = vunpack.c.h.b16 %v1036
  %v1586 = vunpack.c.l.b16 %v1037
  %v1587 = vunpack.c.h.b16 %v1037
  %v1588 = vunpack.c.l.b16 %v1038
  %v1589 = vunpack.c.h.b16 %v1038
  %v1590 = vunpack.c.l.b16 %v1039
  %v1591 = vunpack.c.h.b16 %v1039
  %v1592 = vunpack.c.l.b16 %v1040
  %v1593 = vunpack.c.h.b16 %v1040
  %v1594 = vunpack.c.l.b16 %v1041
  %v1595 = vunpack.c.h.b16 %v1041
  %v1596 = vunpack.c.l.b16 %v1042
  %v1597 = vunpack.c.h.b16 %v1042
  %v1598 = vunpack.c.l.b16 %v1043
  %v1599 = vunpack.c.h.b16 %v1043
  %v1600 = vunpack.c.l.b16 %v1044
  %v1601 = vunpack.c.h.b16 %v1044
  %v1602 = vunpack.c.l.b16 %v1045
  %v1603 = vunpack.c.h.b16 %v1045
  %v1604 = vunpack.c.l.b16 %v1046
  %v1605 = vunpack.c.h.b16 %v1046
  %v1606 = vunpack.c.l.b16 %v1047
  %v1607 = vunpack.c.h.b16 %v1047
  %v1608 = vunpack.c.l.b16 %v1048
  %v1609 = vunpack.c.h.b16 %v1048
  %v1610 = vunpack.c.l.b16 %v1049
  %v1611 = vunpack.c.h.b16 %v1049
  %v1612 = vunpack.c.l.b16 %v1050
  %v1613 = vunpack.c.h.b16 %v1050
  %v1614 = vunpack.c.l.b16 %v1051
  %v1615 = vunpack.c.h.b16 %v1051
  %v1616 = vunpack.c.l.b16 %v1052
  %v1617 = vunpack.c.h.b16 %v1052
  %v1618 = vunpack.c.l.b16 %v1053
  %v1619 = vunpack.c.h.b16 %v1053
  %v1620 = vunpack.c.l.b16 %v1054
  %v1621 = vunpack.c.h.b16 %v1054
  %v1622 = vunpack.c.l.b16 %v1055
  %v1623 = vunpack.c.h.b16 %v1055
  %v1624 = vunpack.c.l.b16 %v1056
  %v1625 = vunpack.c.h.b16 %v1056
  %v1626 = vunpack.c.l.b16 %v1057
  %v1627 = vunpack.c.h.b16 %v1057
  %v1628 = vunpack.c.l.b16 %v1058
  %v1629 = vunpack.c.h.b16 %v1058
  %v1630 = vunpack.c.l.b16 %v1059
  %v1631 = vunpack.c.h.b16 %v1059
  %v1632 = vunpack.c.l.b16 %v1060
  %v1633 = vunpack.c.h.b16 %v1060
  %v1634 = vunpack.c.l.b16 %v1061
  %v1635 = vunpack.c.h.b16 %v1061
  %v1636 = vunpack.c.l.b16 %v1062
  %v1637 = vunpack.c.h.b16 %v1062
  %v1638 = vunpack.c.l.b16 %v1063
  %v1639 = vunpack.c.h.b16 %v1063
  %v1640 = vunpack.c.l.b16 %v1064
  %v1641 = vunpack.c.h.b16 %v1064
  %v1642 = vunpack.c.l.b16 %v1065
  %v1643 = vunpack.c.h.b16 %v1065
  %v1644 = vunpack.c.l.b16 %v1066
  %v1645 = vunpack.c.h.b16 %v1066
  %v1646 = vunpack.c.l.b16 %v1067
  %v1647 = vunpack.c.h.b16 %v1067
  %v1648 = vunpack.c.l.b16 %v1068
  %v1649 = vunpack.c.h.b16 %v1068
  %v1650 = vunpack.c.l.b16 %v1069
  %v1651 = vunpack.c.h.b16 %v1069
  %v1652 = vunpack.c.l.b16 %v1070
  %v1653 = vunpack.c.h.b16 %v1070
  %v1654 = vunpack.c.l.b16 %v1071
  %v1655 = vunpack.c.h.b16 %v1071
  %v1656 = vunpack.c.l.b16 %v1072
  %v1657 = vunpack.c.h.b16 %v1072
  %v1658 = vunpack.c.l.b16 %v1073
  %v1659 = vunpack.c.h.b16 %v1073
  %v1660 = vunpack.c.l.b16 %v1074
  %v1661 = vunpack.c.h.b16 %v1074
  %v1662 = vunpack.c.l.b16 %v1075
  %v1663 = vunpack.c.h.b16 %v1075
  %v1664 = vunpack.c.l.b16 %v1076
  %v1665 = vunpack.c.h.b16 %v1076
  %v1666 = vunpack.c.l.b16 %v1077
  %v1667 = vunpack.c.h.b16 %v1077
  %v1668 = vunpack.c.l.b16 %v1078
  %v1669 = vunpack.c.h.b16 %v1078
  %v1670 = vunpack.c.l.b16 %v1079
  %v1671 = vunpack.c.h.b16 %v1079
  %v1672 = vunpack.c.l.b16 %v1080
  %v1673 = vunpack.c.h.b16 %v1080
  %v1674 = vunpack.c.l.b16 %v1081
  %v1675 = vunpack.c.h.b16 %v1081
  %v1676 = vunpack.c.l.b16 %v1082
  %v1677 = vunpack.c.h.b16 %v1082
  %v1678 = vunpack.c.l.b16 %v1083
  %v1679 = vunpack.c.h.b16 %v1083
  %v1680 = vunpack.c.l.b16 %v1084
  %v1681 = vunpack.c.h.b16 %v1084
  %v1682 = vunpack.c.l.b16 %v1085
  %v1683 = vunpack.c.h.b16 %v1085
  %v1684 = vunpack.c.l.b16 %v1086
  %v1685 = vunpack.c.h.b16 %v1086
  %v1686 = vunpack.c.l.b16 %v1087
  %v1687 = vunpack.c.h.b16 %v1087
  %v1688 = vunpack.c.l.b16 %v1088
  %v1689 = vunpack.c.h.b16 %v1088
  %v1690 = vunpack.c.l.b16 %v1089
  %v1691 = vunpack.c.h.b16 %v1089
  %v1692 = vunpack.c.l.b16 %v1090
  %v1693 = vunpack.c.h.b16 %v1090
  %v1694 = vunpack.c.l.b16 %v1091
  %v1695 = vunpack.c.h.b16 %v1091
  %v1696 = vunpack.c.l.b16 %v1092
  %v1697 = vunpack.c.h.b16 %v1092
  %v1698 = vunpack.c.l.b16 %v1093
  %v1699 = vunpack.c.h.b16 %v1093
  %v1700 = vunpack.c.l.b16 %v1094
  %v1701 = vunpack.c.h.b16 %v1094
  %v1702 = vunpack.c.l.b16 %v1095
  %v1703 = vunpack.c.h.b16 %v1095
  %v1704 = vunpack.c.l.b16 %v1096
  %v1705 = vunpack.c.h.b16 %v1096
  %v1706 = vunpack.c.l.b16 %v1097
  %v1707 = vunpack.c.h.b16 %v1097
  %v1708 = vunpack.c.l.b16 %v1098
  %v1709 = vunpack.c.h.b16 %v1098
  %v1710 = vunpack.c.l.b16 %v1099
  %v1711 = vunpack.c.h.b16 %v1099
  %v1712 = vunpack.c.l.b16 %v1100
  %v1713 = vunpack.c.h.b16 %v1100
  %v1714 = vunpack.c.l.b16 %v1101
  %v1715 = vunpack.c.h.b16 %v1101
  %v1716 = vunpack.c.l.b16 %v1102
  %v1717 = vunpack.c.h.b16 %v1102
  %v1718 = vunpack.c.l.b16 %v1103
  %v1719 = vunpack.c.h.b16 %v1103
  %v1720 = vunpack.c.l.b16 %v1104
  %v1721 = vunpack.c.h.b16 %v1104
  %v1722 = vunpack.c.l.b16 %v1105
  %v1723 = vunpack.c.h.b16 %v1105
  %v1724 = vunpack.c.l.b16 %v1106
  %v1725 = vunpack.c.h.b16 %v1106
  %v1726 = vunpack.c.l.b16 %v1107
  %v1727 = vunpack.c.h.b16 %v1107
  %v1728 = vunpack.c.l.b16 %v1108
  %v1729 = vunpack.c.h.b16 %v1108
  %v1730 = vunpack.c.l.b16 %v1109
  %v1731 = vunpack.c.h.b16 %v1109
  %v1732 = vunpack.c.l.b16 %v1110
  %v1733 = vunpack.c.h.b16 %v1110
  %v1734 = vunpack.c.l.b16 %v1111
  %v1735 = vunpack.c.h.b16 %v1111
  %v1736 = vunpack.c.l.b16 %v1112
  %v1737 = vunpack.c.h.b16 %v1112
  %v1738 = vunpack.c.l.b16 %v1113
  %v1739 = vunpack.c.h.b16 %v1113
  %v1740 = vunpack.c.l.b16 %v1114
  %v1741 = vunpack.c.h.b16 %v1114
  %v1742 = vunpack.c.l.b16 %v1115
  %v1743 = vunpack.c.h.b16 %v1115
  %v1744 = vunpack.c.l.b16 %v1116
  %v1745 = vunpack.c.h.b16 %v1116
  %v1746 = vunpack.c.l.b16 %v1117
  %v1747 = vunpack.c.h.b16 %v1117
  %v1748 = vunpack.c.l.b16 %v1118
  %v1749 = vunpack.c.h.b16 %v1118
  %v1750 = vunpack.c.l.b16 %v1119
  %v1751 = vunpack.c.h.b16 %v1119
  %v1752 = vunpack.c.l.b16 %v1120
  %v1753 = vunpack.c.h.b16 %v1120
  %v1754 = vunpack.c.l.b16 %v1121
  %v1755 = vunpack.c.h.b16 %v1121
  %v1756 = vunpack.c.l.b16 %v1122
  %v1757 = vunpack.c.h.b16 %v1122
  %v1758 = vunpack.c.l.b16 %v1123
  %v1759 = vunpack.c.h.b16 %v1123
  %v1760 = vunpack.c.l.b16 %v1124
  %v1761 = vunpack.c.h.b16 %v1124
  %v1762 = vunpack.c.l.b16 %v1125
  %v1763 = vunpack.c.h.b16 %v1125
  %v1764 = vunpack.c.l.b16 %v1126
  %v1765 = vunpack.c.h.b16 %v1126
  %v1766 = vunpack.c.l.b16 %v1127
  %v1767 = vunpack.c.h.b16 %v1127
  %v1768 = vunpack.c.l.b16 %v1128
  %v1769 = vunpack.c.h.b16 %v1128
  %v1770 = vunpack.c.l.b16 %v1129
  %v1771 = vunpack.c.h.b16 %v1129
  %v1772 = vunpack.c.l.b16 %v1130
  %v1773 = vunpack.c.h.b16 %v1130
  %v1774 = vunpack.c.l.b16 %v1131
  %v1775 = vunpack.c.h.b16 %v1131
  %v1776 = vunpack.c.l.b16 %v1132
  %v1777 = vunpack.c.h.b16 %v1132
  %v1778 = vunpack.c.l.b16 %v1133
  %v1779 = vunpack.c.h.b16 %v1133
  %v1780 = vunpack.c.l.b16 %v1134
  %v1781 = vunpack.c.h.b16 %v1134
  %v1782 = vunpack.c.l.b16 %v1135
  %v1783 = vunpack.c.h.b16 %v1135
  %v1784 = vunpack.c.l.b16 %v1136
  %v1785 = vunpack.c.h.b16 %v1136
  %v1786 = vunpack.c.l.b16 %v1137
  %v1787 = vunpack.c.h.b16 %v1137
  %v1788 = vunpack.c.l.b16 %v1138
  %v1789 = vunpack.c.h.b16 %v1138
  %v1790 = vunpack.c.l.b16 %v1139
  %v1791 = vunpack.c.h.b16 %v1139
  %v1792 = vunpack.c.l.b16 %v1140
  %v1793 = vunpack.c.h.b16 %v1140
  %v1794 = vunpack.c.l.b16 %v1141
  %v1795 = vunpack.c.h.b16 %v1141
  %v1796 = vunpack.c.l.b16 %v1142
  %v1797 = vunpack.c.h.b16 %v1142
  %v1798 = vunpack.c.l.b16 %v1143
  %v1799 = vunpack.c.h.b16 %v1143
  %v1800 = vunpack.c.l.b16 %v1144
  %v1801 = vunpack.c.h.b16 %v1144
  %v1802 = vunpack.c.l.b16 %v1145
  %v1803 = vunpack.c.h.b16 %v1145
  %v1804 = vunpack.c.l.b16 %v1146
  %v1805 = vunpack.c.h.b16 %v1146
  %v1806 = vunpack.c.l.b16 %v1147
  %v1807 = vunpack.c.h.b16 %v1147
  %v1808 = vunpack.c.l.b16 %v1148
  %v1809 = vunpack.c.h.b16 %v1148
  %v1810 = vunpack.c.l.b16 %v1149
  %v1811 = vunpack.c.h.b16 %v1149
  %v1812 = vunpack.c.l.b16 %v1150
  %v1813 = vunpack.c.h.b16 %v1150
  %v1814 = vunpack.c.l.b16 %v1151
  %v1815 = vunpack.c.h.b16 %v1151
  %v1816 = vunpack.c.l.b16 %v1152
  %v1817 = vunpack.c.h.b16 %v1152
  %v1818 = vunpack.c.l.b16 %v1153
  %v1819 = vunpack.c.h.b16 %v1153
  %v1820 = vunpack.c.l.b16 %v1154
  %v1821 = vunpack.c.h.b16 %v1154
  %v1822 = vunpack.c.l.b16 %v1155
  %v1823 = vunpack.c.h.b16 %v1155
  %v1824 = vunpack.c.l.b16 %v1156
  %v1825 = vunpack.c.h.b16 %v1156
  %v1826 = vunpack.c.l.b16 %v1157
  %v1827 = vunpack.c.h.b16 %v1157
  %v1828 = vunpack.c.l.b16 %v1158
  %v1829 = vunpack.c.h.b16 %v1158
  %v1830 = vunpack.c.l.b16 %v1159
  %v1831 = vunpack.c.h.b16 %v1159
  %v1832 = vunpack.c.l.b16 %v1160
  %v1833 = vunpack.c.h.b16 %v1160
  %v1834 = vunpack.c.l.b16 %v1161
  %v1835 = vunpack.c.h.b16 %v1161
  %v1836 = vunpack.c.l.b16 %v1162
  %v1837 = vunpack.c.h.b16 %v1162
  %v1838 = vunpack.c.l.b16 %v1163
  %v1839 = vunpack.c.h.b16 %v1163
  %v1840 = vunpack.c.l.b16 %v1164
  %v1841 = vunpack.c.h.b16 %v1164
  %v1842 = vunpack.c.l.b16 %v1165
  %v1843 = vunpack.c.h.b16 %v1165
  %v1844 = vunpack.c.l.b16 %v1166
  %v1845 = vunpack.c.h.b16 %v1166
  %v1846 = vunpack.c.l.b16 %v1167
  %v1847 = vunpack.c.h.b16 %v1167
  %v1848 = vunpack.c.l.b16 %v1168
  %v1849 = vunpack.c.h.b16 %v1168
  %v1850 = vunpack.c.l.b16 %v1169
  %v1851 = vunpack.c.h.b16 %v1169
  %v1852 = vunpack.c.l.b16 %v1170
  %v1853 = vunpack.c.h.b16 %v1170
  %v1854 = vunpack.c.l.b16 %v1171
  %v1855 = vunpack.c.h.b16 %v1171
  %v1856 = vunpack.c.l.b16 %v1172
  %v1857 = vunpack.c.h.b16 %v1172
  %v1858 = vunpack.c.l.b16 %v1173
  %v1859 = vunpack.c.h.b16 %v1173
  %v1860 = vunpack.c.l.b16 %v1174
  %v1861 = vunpack.c.h.b16 %v1174
  %v1862 = vunpack.c.l.b16 %v1175
  %v1863 = vunpack.c.h.b16 %v1175
  %v1864 = vunpack.c.l.b16 %v1176
  %v1865 = vunpack.c.h.b16 %v1176
  %v1866 = vunpack.c.l.b16 %v1177
  %v1867 = vunpack.c.h.b16 %v1177
  %v1868 = vunpack.c.l.b16 %v1178
  %v1869 = vunpack.c.h.b16 %v1178
  %v1870 = vunpack.c.l.b16 %v1179
  %v1871 = vunpack.c.h.b16 %v1179
  %v1872 = vunpack.c.l.b16 %v1180
  %v1873 = vunpack.c.h.b16 %v1180
  %v1874 = vunpack.c.l.b16 %v1181
  %v1875 = vunpack.c.h.b16 %v1181
  %v1876 = vunpack.c.l.b16 %v1182
  %v1877 = vunpack.c.h.b16 %v1182
  %v1878 = vunpack.c.l.b16 %v1183
  %v1879 = vunpack.c.h.b16 %v1183
  %v1880 = vunpack.c.l.b16 %v1184
  %v1881 = vunpack.c.h.b16 %v1184
  %v1882 = vunpack.c.l.b16 %v1185
  %v1883 = vunpack.c.h.b16 %v1185
  %v1884 = vunpack.c.l.b16 %v1186
  %v1885 = vunpack.c.h.b16 %v1186
  %v1886 = vunpack.c.l.b16 %v1187
  %v1887 = vunpack.c.h.b16 %v1187
  %v1888 = vunpack.c.l.b16 %v1188
  %v1889 = vunpack.c.h.b16 %v1188
  %v1890 = vunpack.c.l.b16 %v1189
  %v1891 = vunpack.c.h.b16 %v1189
  %v1892 = vunpack.c.l.b16 %v1190
  %v1893 = vunpack.c.h.b16 %v1190
  %v1894 = vunpack.c.l.b16 %v1191
  %v1895 = vunpack.c.h.b16 %v1191
  %v1896 = vunpack.c.l.b16 %v1192
  %v1897 = vunpack.c.h.b16 %v1192
  %v1898 = vunpack.c.l.b16 %v1193
  %v1899 = vunpack.c.h.b16 %v1193
  %v1900 = vunpack.c.l.b16 %v1194
  %v1901 = vunpack.c.h.b16 %v1194
  %v1902 = vunpack.c.l.b16 %v1195
  %v1903 = vunpack.c.h.b16 %v1195
  %v1904 = vunpack.c.l.b16 %v1196
  %v1905 = vunpack.c.h.b16 %v1196
  %v1906 = vunpack.c.l.b16 %v1197
  %v1907 = vunpack.c.h.b16 %v1197
  %v1908 = vunpack.c.l.b16 %v1198
  %v1909 = vunpack.c.h.b16 %v1198
  %v1910 = vunpack.c.l.b16 %v1199
  %v1911 = vunpack.c.h.b16 %v1199
  %v1912 = vunpack.c.l.b16 %v1200
  %v1913 = vunpack.c.h.b16 %v1200
  %v1914 = vunpack.c.l.b16 %v1201
  %v1915 = vunpack.c.h.b16 %v1201
  %v1916 = vunpack.c.l.b16 %v1202
  %v1917 = vunpack.c.h.b16 %v1202
  %v1918 = vunpack.c.l.b16 %v1203
  %v1919 = vunpack.c.h.b16 %v1203
  %v1920 = vunpack.c.l.b16 %v1204
  %v1921 = vunpack.c.h.b16 %v1204
  %v1922 = vunpack.c.l.b16 %v1205
  %v1923 = vunpack.c.h.b16 %v1205
  %v1924 = vunpack.c.l.b16 %v1206
  %v1925 = vunpack.c.h.b16 %v1206
  %v1926 = vunpack.c.l.b16 %v1207
  %v1927 = vunpack.c.h.b16 %v1207
  %v1928 = vunpack.c.l.b16 %v1208
  %v1929 = vunpack.c.h.b16 %v1208
  %v1930 = vunpack.c.l.b16 %v1209
  %v1931 = vunpack.c.h.b16 %v1209
  %v1932 = vunpack.c.l.b16 %v1210
  %v1933 = vunpack.c.h.b16 %v1210
  %v1934 = vunpack.c.l.b16 %v1211
  %v1935 = vunpack.c.h.b16 %v1211
  %v1936 = vunpack.c.l.b16 %v1212
  %v1937 = vunpack.c.h.b16 %v1212
  %v1938 = vunpack.c.l.b16 %v1213
  %v1939 = vunpack.c.h.b16 %v1213
  %v1940 = vunpack.c.l.b16 %v1214
  %v1941 = vunpack.c.h.b16 %v1214
  %v1942 = vunpack.c.l.b16 %v1215
  %v1943 = vunpack.c.h.b16 %v1215
  %v1944 = vunpack.c.l.b16 %v1216
  %v1945 = vunpack.c.h.b16 %v1216
  %v1946 = vunpack.c.l.b16 %v1217
  %v1947 = vunpack.c.h.b16 %v1217
  %v1948 = vunpack.c.l.b16 %v1218
  %v1949 = vunpack.c.h.b16 %v1218
  %v1950 = vunpack.c.l.b16 %v1219
  %v1951 = vunpack.c.h.b16 %v1219
  %v1952 = vunpack.c.l.b16 %v1220
  %v1953 = vunpack.c.h.b16 %v1220
  %v1954 = vunpack.c.l.b16 %v1221
  %v1955 = vunpack.c.h.b16 %v1221
  %v1956 = vunpack.c.l.b16 %v1222
  %v1957 = vunpack.c.h.b16 %v1222
  %v1958 = vunpack.c.l.b16 %v1223
  %v1959 = vunpack.c.h.b16 %v1223
  %v1960 = vunpack.c.l.b16 %v1224
  %v1961 = vunpack.c.h.b16 %v1224
  %v1962 = vunpack.c.l.b16 %v1225
  %v1963 = vunpack.c.h.b16 %v1225
  %v1964 = vunpack.c.l.b16 %v1226
  %v1965 = vunpack.c.h.b16 %v1226
  %v1966 = vunpack.c.l.b16 %v1227
  %v1967 = vunpack.c.h.b16 %v1227
  %v1968 = vunpack.c.l.b16 %v1228
  %v1969 = vunpack.c.h.b16 %v1228
  %v1970 = vunpack.c.l.b16 %v1229
  %v1971 = vunpack.c.h.b16 %v1229
  %v1972 = vunpack.c.l.b16 %v1230
  %v1973 = vunpack.c.h.b16 %v1230
  %v1974 = vunpack.c.l.b16 %v1231
  %v1975 = vunpack.c.h.b16 %v1231
  %v1976 = vunpack.c.l.b16 %v1232
  %v1977 = vunpack.c.h.b16 %v1232
  %v1978 = vunpack.c.l.b16 %v1233
  %v1979 = vunpack.c.h.b16 %v1233
  %v1980 = vunpack.c.l.b16 %v1234
  %v1981 = vunpack.c.h.b16 %v1234
  %v1982 = vunpack.c.l.b16 %v1235
  %v1983 = vunpack.c.h.b16 %v1235
  %v1984 = vunpack.c.l.b16 %v1236
  %v1985 = vunpack.c.h.b16 %v1236
  %v1986 = vunpack.c.l.b16 %v1237
  %v1987 = vunpack.c.h.b16 %v1237
  %v1988 = vunpack.c.l.b16 %v1238
  %v1989 = vunpack.c.h.b16 %v1238
  %v1990 = vunpack.c.l.b16 %v1239
  %v1991 = vunpack.c.h.b16 %v1239
  %v1992 = vunpack.c.l.b16 %v1240
  %v1993 = vunpack.c.h.b16 %v1240
  %v1994 = vunpack.c.l.b16 %v1241
  %v1995 = vunpack.c.h.b16 %v1241
  %v1996 = vunpack.c.l.b16 %v1242
  %v1997 = vunpack.c.h.b16 %v1242
  %v1998 = vunpack.c.l.b16 %v1243
  %v1999 = vunpack.c.h.b16 %v1243
  %v2000 = vunpack.c.l.b16 %v1244
  %v2001 = vunpack.c.h.b16 %v1244
  %v2002 = vunpack.c.l.b16 %v1245
  %v2003 = vunpack.c.h.b16 %v1245
  %v2004 = vunpack.c.l.b16 %v1246
  %v2005 = vunpack.c.h.b16 %v1246
  %v2006 = vunpack.c.l.b16 %v1247
  %v2007 = vunpack.c.h.b16 %v1247
  %v2008 = vpack.c.b16 %v1520, %v1516
  %v2009 = vpack.c.b16 %v1521, %v1517
  %v2010 = vpack.c.b16 %v1522, %v1518
  %v2011 = vpack.c.b16 %v1523, %v1519
  %v2012 = vpack.c.b16 %v1528, %v1524
  %v2013 = vpack.c.b16 %v1529, %v1525
  %v2014 = vpack.c.b16 %v1530, %v1526
  %v2015 = vpack.c.b16 %v1531, %v1527
  %v2016 = vpack.c.b16 %v1536, %v1532
  %v2017 = vpack.c.b16 %v1537, %v1533
  %v2018 = vpack.c.b16 %v1538, %v1534
  %v2019 = vpack.c.b16 %v1539, %v1535
  %v2020 = vpack.c.b16 %v1544, %v1540
  %v2021 = vpack.c.b16 %v1545, %v1541
  %v2022 = vpack.c.b16 %v1546, %v1542
  %v2023 = vpack.c.b16 %v1547, %v1543
  %v2024 = vpack.c.b16 %v1552, %v1548
  %v2025 = vpack.c.b16 %v1553, %v1549
  %v2026 = vpack.c.b16 %v1554, %v1550
  %v2027 = vpack.c.b16 %v1555, %v1551
  %v2028 = vpack.c.b16 %v1560, %v1556
  %v2029 = vpack.c.b16 %v1561, %v1557
  %v2030 = vpack.c.b16 %v1562, %v1558
  %v2031 = vpack.c.b16 %v1563, %v1559
  %v2032 = vpack.c.b16 %v1568, %v1564
  %v2033 = vpack.c.b16 %v1569, %v1565
  %v2034 = vpack.c.b16 %v1570, %v1566
  %v2035 = vpack.c.b16 %v1571, %v1567
  %v2036 = vpack.c.b16 %v1576, %v1572
  %v2037 = vpack.c.b16 %v1577, %v1573
  %v2038 = vpack.c.b16 %v1578, %v1574
  %v2039 = vpack.c.b16 %v1579, %v1575
  %v2040 = vpack.c.b16 %v1584, %v1580
  %v2041 = vpack.c.b16 %v1585, %v1581
  %v2042 = vpack.c.b16 %v1586, %v1582
  %v2043 = vpack.c.b16 %v1587, %v1583
  %v2044 = vpack.c.b16 %v1592, %v1588
  %v2045 = vpack.c.b16 %v1593, %v1589
  %v2046 = vpack.c.b16 %v1594, %v1590
  %v2047 = vpack.c.b16 %v1595, %v1591
  %v2048 = vpack.c.b16 %v1600, %v1596
  %v2049 = vpack.c.b16 %v1601, %v1597
  %v2050 = vpack.c.b16 %v1602, %v1598
  %v2051 = vpack.c.b16 %v1603, %v1599
  %v2052 = vpack.c.b16 %v1608, %v1604
  %v2053 = vpack.c.b16 %v1609, %v1605
  %v2054 = vpack.c.b16 %v1610, %v1606
  %v2055 = vpack.c.b16 %v1611, %v1607
  %v2056 = vpack.c.b16 %v1616, %v1612
  %v2057 = vpack.c.b16 %v1617, %v1613
  %v2058 = vpack.c.b16 %v1618, %v1614
  %v2059 = vpack.c.b16 %v1619, %v1615
  %v2060 = vpack.c.b16 %v1624, %v1620
  %v2061 = vpack.c.b16 %v1625, %v1621
  %v2062 = vpack.c.b16 %v1626, %v1622
  %v2063 = vpack.c.b16 %v1627, %v1623
  %v2064 = vpack.c.b16 %v1632, %v1628
  %v2065 = vpack.c.b16 %v1633, %v1629
  %v2066 = vpack.c.b16 %v1634, %v1630
  %v2067 = vpack.c.b16 %v1635, %v1631
  %v2068 = vpack.c.b16 %v1640, %v1636
  %v2069 = vpack.c.b16 %v1641, %v1637
  %v2070 = vpack.c.b16 %v1642, %v1638
  %v2071 = vpack.c.b16 %v1643, %v1639
  %v2072 = vpack.c.b16 %v1648, %v1644
  %v2073 = vpack.c.b16 %v1649, %v1645
  %v2074 = vpack.c.b16 %v1650, %v1646
  %v2075 = vpack.c.b16 %v1651, %v1647
  %v2076 = vpack.c.b16 %v1656, %v1652
  %v2077 = vpack.c.b16 %v1657, %v1653
  %v2078 = vpack.c.b16 %v1658, %v1654
  %v2079 = vpack.c.b16 %v1659, %v1655
  %v2080 = vpack.c.b16 %v1664, %v1660
  %v2081 = vpack.c.b16 %v1665, %v1661
  %v2082 = vpack.c.b16 %v1666, %v1662
  %v2083 = vpack.c.b16 %v1667, %v1663
  %v2084 = vpack.c.b16 %v1672, %v1668
  %v2085 = vpack.c.b16 %v1673, %v1669
  %v2086 = vpack.c.b16 %v1674, %v1670
  %v2087 = vpack.c.b16 %v1675, %v1671
  %v2088 = vpack.c.b16 %v1680, %v1676
  %v2089 = vpack.c.b16 %v1681, %v1677
  %v2090 = vpack.c.b16 %v1682, %v1678
  %v2091 = vpack.c.b16 %v1683, %v1679
  %v2092 = vpack.c.b16 %v1688, %v1684
  %v2093 = vpack.c.b16 %v1689, %v1685
  %v2094 = vpack.c.b16 %v1690, %v1686
  %v2095 = vpack.c.b16 %v1691, %v1687
  %v2096 = vpack.c.b16 %v1696, %v1692
  %v2097 = vpack.c.b16 %v1697, %v1693
  %v2098 = vpack.c.b16 %v1698, %v1694
  %v2099 = vpack.c.b16 %v1699, %v1695
  %v2100 = vpack.c.b16 %v1704, %v1700
  %v2101 = vpack.c.b16 %v1705, %v1701
  %v2102 = vpack.c.b16 %v1706, %v1702
  %v2103 = vpack.c.b16 %v1707, %v1703
  %v2104 = vpack.c.b16 %v1712, %v1708
  %v2105 = vpack.c.b16 %v1713, %v1709
  %v2106 = vpack.c.b16 %v1714, %v1710
  %v2107 = vpack.c.b16 %v1715, %v1711
  %v2108 = vpack.c.b16 %v1720, %v1716
  %v2109 = vpack.c.b16 %v1721, %v1717
  %v2110 = vpack.c.b16 %v1722, %v1718
  %v2111 = vpack.c.b16 %v1723, %v1719
  %v2112 = vpack.c.b16 %v1728, %v1724
  %v2113 = vpack.c.b16 %v1729, %v1725
  %v2114 = vpack.c.b16 %v1730, %v1726
  %v2115 = vpack.c.b16 %v1731, %v1727
  %v2116 = vpack.c.b16 %v1736, %v1732
  %v2117 = vpack.c.b16 %v1737, %v1733
  %v2118 = vpack.c.b16 %v1738, %v1734
  %v2119 = vpack.c.b16 %v1739, %v1735
  %v2120 = vpack.c.b16 %v1744, %v1740
  %v2121 = vpack.c.b16 %v1745, %v1741
  %v2122 = vpack.c.b16 %v1746, %v1742
  %v2123 = vpack.c.b16 %v1747, %v1743
  %v2124 = vpack.c.b16 %v1752, %v1748
  %v2125 = vpack.c.b16 %v1753, %v1749
  %v2126 = vpack.c.b16 %v1754, %v1750
  %v2127 = vpack.c.b16 %v1755, %v1751
  %v2128 = vpack.c.b16 %v1760, %v1756
  %v2129 = vpack.c.b16 %v1761, %v1757
  %v2130 = vpack.c.b16 %v1762, %v1758
  %v2131 = vpack.c.b16 %v1763, %v1759
  %v2132 = vpack.c.b16 %v1768, %v1764
  %v2133 = vpack.c.b16 %v1769, %v1765
  %v2134 = vpack.c.b16 %v1770, %v1766
  %v2135 = vpack.c.b16 %v1771, %v1767
  %v2136 = vpack.c.b16 %v1776, %v1772
  %v2137 = vpack.c.b16 %v1777, %v1773
  %v2138 = vpack.c.b16 %v1778, %v1774
  %v2139 = vpack.c.b16 %v1779, %v1775
  %v2140 = vpack.c.b16 %v1784, %v1780
  %v2141 = vpack.c.b16 %v1785, %v1781
  %v2142 = vpack.c.b16 %v1786, %v1782
  %v2143 = vpack.c.b16 %v1787, %v1783
  %v2144 = vpack.c.b16 %v1792, %v1788
  %v2145 = vpack.c.b16 %v1793, %v1789
  %v2146 = vpack.c.b16 %v1794, %v1790
  %v2147 = vpack.c.b16 %v1795, %v1791
  %v2148 = vpack.c.b16 %v1800, %v1796
  %v2149 = vpack.c.b16 %v1801, %v1797
  %v2150 = vpack.c.b16 %v1802, %v1798
  %v2151 = vpack.c.b16 %v1803, %v1799
  %v2152 = vpack.c.b16 %v1808, %v1804
  %v2153 = vpack.c.b16 %v1809, %v1805
  %v2154 = vpack.c.b16 %v1810, %v1806
  %v2155 = vpack.c.b16 %v1811, %v1807
  %v2156 = vpack.c.b16 %v1816, %v1812
  %v2157 = vpack.c.b16 %v1817, %v1813
  %v2158 = vpack.c.b16 %v1818, %v1814
  %v2159 = vpack.c.b16 %v1819, %v1815
  %v2160 = vpack.c.b16 %v1824, %v1820
  %v2161 = vpack.c.b16 %v1825, %v1821
  %v2162 = vpack.c.b16 %v1826, %v1822
  %v2163 = vpack.c.b16 %v1827, %v1823
  %v2164 = vpack.c.b16 %v1832, %v1828
  %v2165 = vpack.c.b16 %v1833, %v1829
  %v2166 = vpack.c.b16 %v1834, %v1830
  %v2167 = vpack.c.b16 %v1835, %v1831
  %v2168 = vpack.c.b16 %v1840, %v1836
  %v2169 = vpack.c.b16 %v1841, %v1837
  %v2170 = vpack.c.b16 %v1842, %v1838
  %v2171 = vpack.c.b16 %v1843, %v1839
  %v2172 = vpack.c.b16 %v1848, %v1844
  %v2173 = vpack.c.b16 %v1849, %v1845
  %v2174 = vpack.c.b16 %v1850, %v1846
  %v2175 = vpack.c.b16 %v1851, %v1847
  %v2176 = vpack.c.b16 %v1856, %v1852
  %v2177 = vpack.c.b16 %v1857, %v1853
  %v2178 = vpack.c.b16 %v1858, %v1854
  %v2179 = vpack.c.b16 %v1859, %v1855
  %v2180 = vpack.c.b16 %v1864, %v1860
  %v2181 = vpack.c.b16 %v1865, %v1861
  %v2182 = vpack.c.b16 %v1866, %v1862
  %v2183 = vpack.c.b16 %v1867, %v1863
  %v2184 = vpack.c.b16 %v1872, %v1868
  %v2185 = vpack.c.b16 %v1873, %v1869
  %v2186 = vpack.c.b16 %v1874, %v1870
  %v2187 = vpack.c.b16 %v1875, %v1871
  %v2188 = vpack.c.b16 %v1880, %v1876
  %v2189 = vpack.c.b16 %v1881, %v1877
  %v2190 = vpack.c.b16 %v1882, %v1878
  %v2191 = vpack.c.b16 %v1883, %v1879
  %v2192 = vpack.c.b16 %v1888, %v1884
  %v2193 = vpack.c.b16 %v1889, %v1885
  %v2194 = vpack.c.b16 %v1890, %v1886
  %v2195 = vpack.c.b16 %v1891, %v1887
  %v2196 = vpack.c.b16 %v1896, %v1892
  %v2197 = vpack.c.b16 %v1897, %v1893
  %v2198 = vpack.c.b16 %v1898, %v1894
  %v2199 = vpack.c.b16 %v1899, %v1895
  %v2200 = vpack.c.b16 %v1904, %v1900
  %v2201 = vpack.c.b16 %v1905, %v1901
  %v2202 = vpack.c.b16 %v1906, %v1902
  %v2203 = vpack.c.b16 %v1907, %v1903
  %v2204 = vpack.c.b16 %v1912, %v1908
  %v2205 = vpack.c.b16 %v1913, %v1909
  %v2206 = vpack.c.b16 %v1914, %v1910
  %v2207 = vpack.c.b16 %v1915, %v1911
  %v2208 = vpack.c.b16 %v1920, %v1916
  %v2209 = vpack.c.b16 %v1921, %v1917
  %v2210 = vpack.c.b16 %v1922, %v1918
  %v2211 = vpack.c.b16 %v1923, %v1919
  %v2212 = vpack.c.b16 %v1928, %v1924
  %v2213 = vpack.c.b16 %v1929, %v1925
  %v2214 = vpack.c.b16 %v1930, %v1926
  %v2215 = vpack.c.b16 %v1931, %v1927
  %v2216 = vpack.c.b16 %v1936, %v1932
  %v2217 = vpack.c.b16 %v1937, %v1933
  %v2218 = vpack.c.b16 %v1938, %v1934
  %v2219 = vpack.c.b16 %v1939, %v1935
  %v2220 = vpack.c.b16 %v1944, %v1940
  %v2221 = vpack.c.b16 %v1945, %v1941
  %v2222 = vpack.c.b16 %v1946, %v1942
  %v2223 = vpack.c.b16 %v1947, %v1943
  %v2224 = vpack.c.b16 %v1952, %v1948
  %v2225 = vpack.c.b16 %v1953, %v1949
  %v2226 = vpack.c.b16 %v1954, %v1950
  %v2227 = vpack.c.b16 %v1955, %v1951
  %v2228 = vpack.c.b16 %v1960, %v1956
  %v2229 = vpack.c.b16 %v1961, %v1957
  %v2230 = vpack.c.b16 %v1962, %v1958
  %v2231 = vpack.c.b16 %v1963, %v1959
  %v2232 = vpack.c.b16 %v1968, %v1964
  %v2233 = vpack.c.b16 %v1969, %v1965
  %v2234 = vpack.c.b16 %v1970, %v1966
  %v2235 = vpack.c.b16 %v1971, %v1967
  %v2236 = vpack.c.b16 %v1976, %v1972
  %v2237 = vpack.c.b16 %v1977, %v1973
  %v2238 = vpack.c.b16 %v1978, %v1974
  %v2239 = vpack.c.b16 %v1979, %v1975
  %v2240 = vpack.c.b16 %v1984, %v1980
  %v2241 = vpack.c.b16 %v1985, %v1981
  %v2242 = vpack.c.b16 %v1986, %v1982
  %v2243 = vpack.c.b16 %v1987, %v1983
  %v2244 = vpack.c.b16 %v1992, %v1988
  %v2245 = vpack.c.b16 %v1993, %v1989
  %v2246 = vpack.c.b16 %v1994, %v1990
  %v2247 = vpack.c.b16 %v1995, %v1991
  %v2248 = vpack.c.b16 %v2000, %v1996
  %v2249 = vpack.c.b16 %v2001, %v1997
  %v2250 = vpack.c.b16 %v2002, %v1998
  %v2251 = vpack.c.b16 %v2003, %v1999
  %v2252 = vpack.c.b16 %v2004, %v2004
  %v2253 = vpack.c.b16 %v2005, %v2005
  %v2254 = vpack.c.b16 %v2006, %v2006
  %v2255 = vpack.c.b16 %v2007, %v2007
  %vm2500 = vcmask 687104
  %v2502 = vsel %vm2500, %v1001, 0
  %v2505 = vsel %vm717, %v2252, 0
  %v2508 = vsel %vm717, %v2253, 0
  %v2511 = vsel %vm717, %v2254, 0
  %v2514 = vsel %vm717, %v2255, 0
  %2516 = vmatprep.subr.bf16.mxu0 %v2009
  %2517 = vmatpush1.bf16.msra.mxu0 %v2008
  %2518 = vmatprep.subr.bf16.mxu0 %v2013
  %2519 = vmatpush1.bf16.msra.mxu0 %v2012
  %2520 = vmatprep.subr.bf16.mxu0 %v2017
  %2521 = vmatpush1.bf16.msra.mxu0 %v2016
  %2522 = vmatprep.subr.bf16.mxu0 %v2021
  %2523 = vmatpush1.bf16.msra.mxu0 %v2020
  %2524 = vmatprep.subr.bf16.mxu0 %v2025
  %2525 = vmatpush1.bf16.msra.mxu0 %v2024
  %2526 = vmatprep.subr.bf16.mxu0 %v2029
  %2527 = vmatpush1.bf16.msra.mxu0 %v2028
  %2528 = vmatprep.subr.bf16.mxu0 %v2033
  %2529 = vmatpush1.bf16.msra.mxu0 %v2032
  %2530 = vmatprep.subr.bf16.mxu0 %v2037
  %2531 = vmatpush1.bf16.msra.mxu0 %v2036
  %2532 = vmatprep.subr.bf16.mxu0 %v2041
  %2533 = vmatpush1.bf16.msra.mxu0 %v2040
  %2534 = vmatprep.subr.bf16.mxu0 %v2045
  %2535 = vmatpush1.bf16.msra.mxu0 %v2044
  %2536 = vmatprep.subr.bf16.mxu0 %v2049
  %2537 = vmatpush1.bf16.msra.mxu0 %v2048
  %2538 = vmatprep.subr.bf16.mxu0 %v2053
  %2539 = vmatpush1.bf16.msra.mxu0 %v2052
  %2540 = vmatprep.subr.bf16.mxu0 %v2057
  %2541 = vmatpush1.bf16.msra.mxu0 %v2056
  %2542 = vmatprep.subr.bf16.mxu0 %v2061
  %2543 = vmatpush1.bf16.msra.mxu0 %v2060
  %2544 = vmatprep.subr.bf16.mxu0 %v2065
  %2545 = vmatpush1.bf16.msra.mxu0 %v2064
  %2546 = vmatprep.subr.bf16.mxu0 %v2069
  %2547 = vmatpush1.bf16.msra.mxu0 %v2068
  %2548 = vmatprep.mubr.bf16.mxu0 %v995
  %2549 = vmatmul.mubr.bf16.gmra.mrb[0].mxu0 %v994
  %v2550 = vpop.f32.mrb[0].mxu0
  %v2551 = vadd.f32 %v1253, %v2550
  %v2552 = vpop.f32.mrb[0].mxu0
  %v2553 = vadd.f32 %v1257, %v2552
  %v2554 = vpop.f32.mrb[0].mxu0
  %v2555 = vadd.f32 %v1253, %v2554
  %v2556 = vpop.f32.mrb[0].mxu0
  %v2557 = vadd.f32 %v1257, %v2556
  %2558 = vdwg.mxu0
  %2559 = vmatprep.subr.bf16.mxu0 %v2073
  %2560 = vmatpush1.bf16.msra.mxu0 %v2072
  %2561 = vmatprep.subr.bf16.mxu0 %v2077
  %2562 = vmatpush1.bf16.msra.mxu0 %v2076
  %2563 = vmatprep.subr.bf16.mxu0 %v2081
  %2564 = vmatpush1.bf16.msra.mxu0 %v2080
  %2565 = vmatprep.subr.bf16.mxu0 %v2085
  %2566 = vmatpush1.bf16.msra.mxu0 %v2084
  %2567 = vmatprep.subr.bf16.mxu0 %v2089
  %2568 = vmatpush1.bf16.msra.mxu0 %v2088
  %2569 = vmatprep.subr.bf16.mxu0 %v2093
  %2570 = vmatpush1.bf16.msra.mxu0 %v2092
  %2571 = vmatprep.subr.bf16.mxu0 %v2097
  %2572 = vmatpush1.bf16.msra.mxu0 %v2096
  %2573 = vmatprep.subr.bf16.mxu0 %v2101
  %2574 = vmatpush1.bf16.msra.mxu0 %v2100
  %2575 = vmatprep.subr.bf16.mxu0 %v2105
  %2576 = vmatpush1.bf16.msra.mxu0 %v2104
  %2577 = vmatprep.subr.bf16.mxu0 %v2109
  %2578 = vmatpush1.bf16.msra.mxu0 %v2108
  %2579 = vmatprep.subr.bf16.mxu0 %v2113
  %2580 = vmatpush1.bf16.msra.mxu0 %v2112
  %2581 = vmatprep.subr.bf16.mxu0 %v2117
  %2582 = vmatpush1.bf16.msra.mxu0 %v2116
  %2583 = vmatprep.subr.bf16.mxu0 %v2121
  %2584 = vmatpush1.bf16.msra.mxu0 %v2120
  %2585 = vmatprep.subr.bf16.mxu0 %v2125
  %2586 = vmatpush1.bf16.msra.mxu0 %v2124
  %2587 = vmatprep.subr.bf16.mxu0 %v2129
  %2588 = vmatpush1.bf16.msra.mxu0 %v2128
  %2589 = vmatprep.subr.bf16.mxu0 %v2133
  %2590 = vmatpush1.bf16.msra.mxu0 %v2132
  %2591 = vmatprep.mubr.bf16.mxu0 %v997
  %2592 = vmatmul.mubr.bf16.gmra.mrb[0].mxu0 %v996
  %v2593 = vpop.f32.mrb[0].mxu0
  %v2594 = vadd.f32 %v2551, %v2593
  %v2595 = vpop.f32.mrb[0].mxu0
  %v2596 = vadd.f32 %v2553, %v2595
  %v2597 = vpop.f32.mrb[0].mxu0
  %v2598 = vadd.f32 %v2555, %v2597
  %v2599 = vpop.f32.mrb[0].mxu0
  %v2600 = vadd.f32 %v2557, %v2599
  %2601 = vdwg.mxu0
  %2602 = vmatprep.subr.bf16.mxu0 %v2137
  %2603 = vmatpush1.bf16.msra.mxu0 %v2136
  %2604 = vmatprep.subr.bf16.mxu0 %v2141
  %2605 = vmatpush1.bf16.msra.mxu0 %v2140
  %2606 = vmatprep.subr.bf16.mxu0 %v2145
  %2607 = vmatpush1.bf16.msra.mxu0 %v2144
  %2608 = vmatprep.subr.bf16.mxu0 %v2149
  %2609 = vmatpush1.bf16.msra.mxu0 %v2148
  %2610 = vmatprep.subr.bf16.mxu0 %v2153
  %2611 = vmatpush1.bf16.msra.mxu0 %v2152
  %2612 = vmatprep.subr.bf16.mxu0 %v2157
  %2613 = vmatpush1.bf16.msra.mxu0 %v2156
  %2614 = vmatprep.subr.bf16.mxu0 %v2161
  %2615 = vmatpush1.bf16.msra.mxu0 %v2160
  %2616 = vmatprep.subr.bf16.mxu0 %v2165
  %2617 = vmatpush1.bf16.msra.mxu0 %v2164
  %2618 = vmatprep.subr.bf16.mxu0 %v2169
  %2619 = vmatpush1.bf16.msra.mxu0 %v2168
  %2620 = vmatprep.subr.bf16.mxu0 %v2173
  %2621 = vmatpush1.bf16.msra.mxu0 %v2172
  %2622 = vmatprep.subr.bf16.mxu0 %v2177
  %2623 = vmatpush1.bf16.msra.mxu0 %v2176
  %2624 = vmatprep.subr.bf16.mxu0 %v2181
  %2625 = vmatpush1.bf16.msra.mxu0 %v2180
  %2626 = vmatprep.subr.bf16.mxu0 %v2185
  %2627 = vmatpush1.bf16.msra.mxu0 %v2184
  %2628 = vmatprep.subr.bf16.mxu0 %v2189
  %2629 = vmatpush1.bf16.msra.mxu0 %v2188
  %2630 = vmatprep.subr.bf16.mxu0 %v2193
  %2631 = vmatpush1.bf16.msra.mxu0 %v2192
  %2632 = vmatprep.subr.bf16.mxu0 %v2197
  %2633 = vmatpush1.bf16.msra.mxu0 %v2196
  %2634 = vmatprep.mubr.bf16.mxu0 %v999
  %2635 = vmatmul.mubr.bf16.gmra.mrb[0].mxu0 %v998
  %v2636 = vpop.f32.mrb[0].mxu0
  %v2637 = vadd.f32 %v2594, %v2636
  %v2638 = vpop.f32.mrb[0].mxu0
  %v2639 = vadd.f32 %v2596, %v2638
  %v2640 = vpop.f32.mrb[0].mxu0
  %v2641 = vadd.f32 %v2598, %v2640
  %v2642 = vpop.f32.mrb[0].mxu0
  %v2643 = vadd.f32 %v2600, %v2642
  %2644 = vdwg.mxu0
  %2645 = vmatprep.subr.bf16.mxu0 %v2201
  %2646 = vmatpush1.bf16.msra.mxu0 %v2200
  %2647 = vmatprep.subr.bf16.mxu0 %v2205
  %2648 = vmatpush1.bf16.msra.mxu0 %v2204
  %2649 = vmatprep.subr.bf16.mxu0 %v2209
  %2650 = vmatpush1.bf16.msra.mxu0 %v2208
  %2651 = vmatprep.subr.bf16.mxu0 %v2213
  %2652 = vmatpush1.bf16.msra.mxu0 %v2212
  %2653 = vmatprep.subr.bf16.mxu0 %v2217
  %2654 = vmatpush1.bf16.msra.mxu0 %v2216
  %2655 = vmatprep.subr.bf16.mxu0 %v2221
  %2656 = vmatpush1.bf16.msra.mxu0 %v2220
  %2657 = vmatprep.subr.bf16.mxu0 %v2225
  %2658 = vmatpush1.bf16.msra.mxu0 %v2224
  %2659 = vmatprep.subr.bf16.mxu0 %v2229
  %2660 = vmatpush1.bf16.msra.mxu0 %v2228
  %2661 = vmatprep.subr.bf16.mxu0 %v2233
  %2662 = vmatpush1.bf16.msra.mxu0 %v2232
  %2663 = vmatprep.subr.bf16.mxu0 %v2237
  %2664 = vmatpush1.bf16.msra.mxu0 %v2236
  %2665 = vmatprep.subr.bf16.mxu0 %v2241
  %2666 = vmatpush1.bf16.msra.mxu0 %v2240
  %2667 = vmatprep.subr.bf16.mxu0 %v2245
  %2668 = vmatpush1.bf16.msra.mxu0 %v2244
  %2669 = vmatprep.subr.bf16.mxu0 %v2249
  %2670 = vmatpush1.bf16.msra.mxu0 %v2248
  %2671 = vmatprep.subr.bf16.mxu0 %v2508
  %2672 = vmatpush1.bf16.msra.mxu0 %v2505
  %2673 = vmatprep.subr.bf16.mxu0 0
  %2674 = vmatpush1.bf16.msra.mxu0 0
  %2675 = vmatprep.subr.bf16.mxu0 0
  %2676 = vmatpush1.bf16.msra.mxu0 0
  %2677 = vmatprep.mubr.bf16.mxu0 %v2502
  %2678 = vmatmul.mubr.bf16.gmra.mrb[0].mxu0 %v1000
  %v2679 = vpop.f32.mrb[0].mxu0
  %v2680 = vadd.f32 %v2637, %v2679
  %v2681 = vpop.f32.mrb[0].mxu0
  %v2682 = vadd.f32 %v2639, %v2681
  %v2683 = vpop.f32.mrb[0].mxu0
  %v2684 = vadd.f32 %v2641, %v2683
  %v2685 = vpop.f32.mrb[0].mxu0
  %v2686 = vadd.f32 %v2643, %v2685
  %2687 = vdwg.mxu0
  %2688 = vmatprep.subr.bf16.mxu0 %v2011
  %2689 = vmatpush1.bf16.msra.mxu0 %v2010
  %2690 = vmatprep.subr.bf16.mxu0 %v2015
  %2691 = vmatpush1.bf16.msra.mxu0 %v2014
  %2692 = vmatprep.subr.bf16.mxu0 %v2019
  %2693 = vmatpush1.bf16.msra.mxu0 %v2018
  %2694 = vmatprep.subr.bf16.mxu0 %v2023
  %2695 = vmatpush1.bf16.msra.mxu0 %v2022
  %2696 = vmatprep.subr.bf16.mxu0 %v2027
  %2697 = vmatpush1.bf16.msra.mxu0 %v2026
  %2698 = vmatprep.subr.bf16.mxu0 %v2031
  %2699 = vmatpush1.bf16.msra.mxu0 %v2030
  %2700 = vmatprep.subr.bf16.mxu0 %v2035
  %2701 = vmatpush1.bf16.msra.mxu0 %v2034
  %2702 = vmatprep.subr.bf16.mxu0 %v2039
  %2703 = vmatpush1.bf16.msra.mxu0 %v2038
  %2704 = vmatprep.subr.bf16.mxu0 %v2043
  %2705 = vmatpush1.bf16.msra.mxu0 %v2042
  %2706 = vmatprep.subr.bf16.mxu0 %v2047
  %2707 = vmatpush1.bf16.msra.mxu0 %v2046
  %2708 = vmatprep.subr.bf16.mxu0 %v2051
  %2709 = vmatpush1.bf16.msra.mxu0 %v2050
  %2710 = vmatprep.subr.bf16.mxu0 %v2055
  %2711 = vmatpush1.bf16.msra.mxu0 %v2054
  %2712 = vmatprep.subr.bf16.mxu0 %v2059
  %2713 = vmatpush1.bf16.msra.mxu0 %v2058
  %2714 = vmatprep.subr.bf16.mxu0 %v2063
  %2715 = vmatpush1.bf16.msra.mxu0 %v2062
  %2716 = vmatprep.subr.bf16.mxu0 %v2067
  %2717 = vmatpush1.bf16.msra.mxu0 %v2066
  %2718 = vmatprep.subr.bf16.mxu0 %v2071
  %2719 = vmatpush1.bf16.msra.mxu0 %v2070
  %2720 = vmatprep.mubr.bf16.mxu0 %v995
  %2721 = vmatmul.mubr.bf16.gmra.mrb[0].mxu0 %v994
  %v2722 = vpop.f32.mrb[0].mxu0
  %v2723 = vadd.f32 %v1261, %v2722
  %v2724 = vpop.f32.mrb[0].mxu0
  %v2725 = vadd.f32 %v1265, %v2724
  %v2726 = vpop.f32.mrb[0].mxu0
  %v2727 = vadd.f32 %v1261, %v2726
  %v2728 = vpop.f32.mrb[0].mxu0
  %v2729 = vadd.f32 %v1265, %v2728
  %2730 = vdwg.mxu0
  %2731 = vmatprep.subr.bf16.mxu0 %v2075
  %2732 = vmatpush1.bf16.msra.mxu0 %v2074
  %2733 = vmatprep.subr.bf16.mxu0 %v2079
  %2734 = vmatpush1.bf16.msra.mxu0 %v2078
  %2735 = vmatprep.subr.bf16.mxu0 %v2083
  %2736 = vmatpush1.bf16.msra.mxu0 %v2082
  %2737 = vmatprep.subr.bf16.mxu0 %v2087
  %2738 = vmatpush1.bf16.msra.mxu0 %v2086
  %2739 = vmatprep.subr.bf16.mxu0 %v2091
  %2740 = vmatpush1.bf16.msra.mxu0 %v2090
  %2741 = vmatprep.subr.bf16.mxu0 %v2095
  %2742 = vmatpush1.bf16.msra.mxu0 %v2094
  %2743 = vmatprep.subr.bf16.mxu0 %v2099
  %2744 = vmatpush1.bf16.msra.mxu0 %v2098
  %2745 = vmatprep.subr.bf16.mxu0 %v2103
  %2746 = vmatpush1.bf16.msra.mxu0 %v2102
  %2747 = vmatprep.subr.bf16.mxu0 %v2107
  %2748 = vmatpush1.bf16.msra.mxu0 %v2106
  %2749 = vmatprep.subr.bf16.mxu0 %v2111
  %2750 = vmatpush1.bf16.msra.mxu0 %v2110
  %2751 = vmatprep.subr.bf16.mxu0 %v2115
  %2752 = vmatpush1.bf16.msra.mxu0 %v2114
  %2753 = vmatprep.subr.bf16.mxu0 %v2119
  %2754 = vmatpush1.bf16.msra.mxu0 %v2118
  %2755 = vmatprep.subr.bf16.mxu0 %v2123
  %2756 = vmatpush1.bf16.msra.mxu0 %v2122
  %2757 = vmatprep.subr.bf16.mxu0 %v2127
  %2758 = vmatpush1.bf16.msra.mxu0 %v2126
  %2759 = vmatprep.subr.bf16.mxu0 %v2131
  %2760 = vmatpush1.bf16.msra.mxu0 %v2130
  %2761 = vmatprep.subr.bf16.mxu0 %v2135
  %2762 = vmatpush1.bf16.msra.mxu0 %v2134
  %2763 = vmatprep.mubr.bf16.mxu0 %v997
  %2764 = vmatmul.mubr.bf16.gmra.mrb[0].mxu0 %v996
  %v2765 = vpop.f32.mrb[0].mxu0
  %v2766 = vadd.f32 %v2723, %v2765
  %v2767 = vpop.f32.mrb[0].mxu0
  %v2768 = vadd.f32 %v2725, %v2767
  %v2769 = vpop.f32.mrb[0].mxu0
  %v2770 = vadd.f32 %v2727, %v2769
  %v2771 = vpop.f32.mrb[0].mxu0
  %v2772 = vadd.f32 %v2729, %v2771
  %2773 = vdwg.mxu0
  %2774 = vmatprep.subr.bf16.mxu0 %v2139
  %2775 = vmatpush1.bf16.msra.mxu0 %v2138
  %2776 = vmatprep.subr.bf16.mxu0 %v2143
  %2777 = vmatpush1.bf16.msra.mxu0 %v2142
  %2778 = vmatprep.subr.bf16.mxu0 %v2147
  %2779 = vmatpush1.bf16.msra.mxu0 %v2146
  %2780 = vmatprep.subr.bf16.mxu0 %v2151
  %2781 = vmatpush1.bf16.msra.mxu0 %v2150
  %2782 = vmatprep.subr.bf16.mxu0 %v2155
  %2783 = vmatpush1.bf16.msra.mxu0 %v2154
  %2784 = vmatprep.subr.bf16.mxu0 %v2159
  %2785 = vmatpush1.bf16.msra.mxu0 %v2158
  %2786 = vmatprep.subr.bf16.mxu0 %v2163
  %2787 = vmatpush1.bf16.msra.mxu0 %v2162
  %2788 = vmatprep.subr.bf16.mxu0 %v2167
  %2789 = vmatpush1.bf16.msra.mxu0 %v2166
  %2790 = vmatprep.subr.bf16.mxu0 %v2171
  %2791 = vmatpush1.bf16.msra.mxu0 %v2170
  %2792 = vmatprep.subr.bf16.mxu0 %v2175
  %2793 = vmatpush1.bf16.msra.mxu0 %v2174
  %2794 = vmatprep.subr.bf16.mxu0 %v2179
  %2795 = vmatpush1.bf16.msra.mxu0 %v2178
  %2796 = vmatprep.subr.bf16.mxu0 %v2183
  %2797 = vmatpush1.bf16.msra.mxu0 %v2182
  %2798 = vmatprep.subr.bf16.mxu0 %v2187
  %2799 = vmatpush1.bf16.msra.mxu0 %v2186
  %2800 = vmatprep.subr.bf16.mxu0 %v2191
  %2801 = vmatpush1.bf16.msra.mxu0 %v2190
  %2802 = vmatprep.subr.bf16.mxu0 %v2195
  %2803 = vmatpush1.bf16.msra.mxu0 %v2194
  %2804 = vmatprep.subr.bf16.mxu0 %v2199
  %2805 = vmatpush1.bf16.msra.mxu0 %v2198
  %2806 = vmatprep.mubr.bf16.mxu0 %v999
  %2807 = vmatmul.mubr.bf16.gmra.mrb[0].mxu0 %v998
  %v2808 = vpop.f32.mrb[0].mxu0
  %v2809 = vadd.f32 %v2766, %v2808
  %v2810 = vpop.f32.mrb[0].mxu0
  %v2811 = vadd.f32 %v2768, %v2810
  %v2812 = vpop.f32.mrb[0].mxu0
  %v2813 = vadd.f32 %v2770, %v2812
  %v2814 = vpop.f32.mrb[0].mxu0
  %v2815 = vadd.f32 %v2772, %v2814
  %2816 = vdwg.mxu0
  %2817 = vmatprep.subr.bf16.mxu0 %v2203
  %2818 = vmatpush1.bf16.msra.mxu0 %v2202
  %2819 = vmatprep.subr.bf16.mxu0 %v2207
  %2820 = vmatpush1.bf16.msra.mxu0 %v2206
  %2821 = vmatprep.subr.bf16.mxu0 %v2211
  %2822 = vmatpush1.bf16.msra.mxu0 %v2210
  %2823 = vmatprep.subr.bf16.mxu0 %v2215
  %2824 = vmatpush1.bf16.msra.mxu0 %v2214
  %2825 = vmatprep.subr.bf16.mxu0 %v2219
  %2826 = vmatpush1.bf16.msra.mxu0 %v2218
  %2827 = vmatprep.subr.bf16.mxu0 %v2223
  %2828 = vmatpush1.bf16.msra.mxu0 %v2222
  %2829 = vmatprep.subr.bf16.mxu0 %v2227
  %2830 = vmatpush1.bf16.msra.mxu0 %v2226
  %2831 = vmatprep.subr.bf16.mxu0 %v2231
  %2832 = vmatpush1.bf16.msra.mxu0 %v2230
  %2833 = vmatprep.subr.bf16.mxu0 %v2235
  %2834 = vmatpush1.bf16.msra.mxu0 %v2234
  %2835 = vmatprep.subr.bf16.mxu0 %v2239
  %2836 = vmatpush1.bf16.msra.mxu0 %v2238
  %2837 = vmatprep.subr.bf16.mxu0 %v2243
  %2838 = vmatpush1.bf16.msra.mxu0 %v2242
  %2839 = vmatprep.subr.bf16.mxu0 %v2247
  %2840 = vmatpush1.bf16.msra.mxu0 %v2246
  %2841 = vmatprep.subr.bf16.mxu0 %v2251
  %2842 = vmatpush1.bf16.msra.mxu0 %v2250
  %2843 = vmatprep.subr.bf16.mxu0 %v2514
  %2844 = vmatpush1.bf16.msra.mxu0 %v2511
  %2845 = vmatprep.subr.bf16.mxu0 0
  %2846 = vmatpush1.bf16.msra.mxu0 0
  %2847 = vmatprep.subr.bf16.mxu0 0
  %2848 = vmatpush1.bf16.msra.mxu0 0
  %2849 = vmatprep.mubr.bf16.mxu0 %v2502
  %2850 = vmatmul.mubr.bf16.gmra.mrb[0].mxu0 %v1000
  %v2851 = vpop.f32.mrb[0].mxu0
  %v2852 = vadd.f32 %v2809, %v2851
  %v2853 = vpop.f32.mrb[0].mxu0
  %v2854 = vadd.f32 %v2811, %v2853
  %v2855 = vpop.f32.mrb[0].mxu0
  %v2856 = vadd.f32 %v2813, %v2855
  %v2857 = vpop.f32.mrb[0].mxu0
  %v2858 = vadd.f32 %v2815, %v2857
  %2859 = vdwg.mxu0
  %v2860 = vsub.f32 0.0, %v2680
  %v2861 = vsub.f32 0.0, %v2682
  %v2862 = vsub.f32 0.0, %v2852
  %v2863 = vsub.f32 0.0, %v2854
  %v2864 = vsub.f32 0.0, %v2684
  %v2865 = vsub.f32 0.0, %v2686
  %v2866 = vsub.f32 0.0, %v2856
  %v2867 = vsub.f32 0.0, %v2858
  %v2868 = vmul.f32 %v2860, 1.442695
  %v2869 = vpow.pop %v2868
  %v2870 = vmul.f32 %v2861, 1.442695
  %v2871 = vpow.pop %v2870
  %v2872 = vmul.f32 %v2862, 1.442695
  %v2873 = vpow.pop %v2872
  %v2874 = vmul.f32 %v2863, 1.442695
  %v2875 = vpow.pop %v2874
  %v2876 = vmul.f32 %v2864, 1.442695
  %v2877 = vpow.pop %v2876
  %v2878 = vmul.f32 %v2865, 1.442695
  %v2879 = vpow.pop %v2878
  %v2880 = vmul.f32 %v2866, 1.442695
  %v2881 = vpow.pop %v2880
  %v2882 = vmul.f32 %v2867, 1.442695
  %v2883 = vpow.pop %v2882
  %v2884 = vadd.f32 %v2869, 1.0
  %v2885 = vadd.f32 %v2871, 1.0
  %v2886 = vadd.f32 %v2873, 1.0
  %v2887 = vadd.f32 %v2875, 1.0
  %v2888 = vadd.f32 %v2877, 1.0
  %v2889 = vadd.f32 %v2879, 1.0
  %v2890 = vadd.f32 %v2881, 1.0
  %v2891 = vadd.f32 %v2883, 1.0
  %v2892 = vrcp.pop %v2884
  %v2893 = vrcp.pop %v2885
  %v2894 = vrcp.pop %v2886
  %v2895 = vrcp.pop %v2887
  %v2896 = vrcp.pop %v2888
  %v2897 = vrcp.pop %v2889
  %v2898 = vrcp.pop %v2890
  %v2899 = vrcp.pop %v2891
  %v2900 = vpack.c.bf16 %v2896, %v2892
  %v2901 = vpack.c.bf16 %v2897, %v2893
  %v2902 = vpack.c.bf16 %v2898, %v2894
  %v2903 = vpack.c.bf16 %v2899, %v2895
  %v2904 = vld [vmem:[%s6] sm:$0xf]
  %v2905 = vld [vmem:[%s6 + $0x4] sm:$0xf]
  %v2906 = vld [vmem:[%s6 + $0x8] sm:$0xf]
  %v2907 = vld [vmem:[%s6 + $0xc] sm:$0xf]
  %v2908 = vld [vmem:[%s6 + $0x10] sm:$0xf]
  %v2909 = vld [vmem:[%s6 + $0x14] sm:$0xf]
  %v2910 = vld [vmem:[%s6 + $0x18] sm:$0xf]
  %v2911 = vld [vmem:[%s6 + $0x1c] sm:$0xf]
  %v2912 = vld [vmem:[%s6 + $0x20] sm:$0xf]
  %v2913 = vld [vmem:[%s6 + $0x24] sm:$0xf]
  %v2914 = vld [vmem:[%s6 + $0x28] sm:$0xf]
  %v2915 = vld [vmem:[%s6 + $0x2c] sm:$0xf]
  %v2916 = vld [vmem:[%s6 + $0x30] sm:$0xf]
  %v2917 = vld [vmem:[%s6 + $0x34] sm:$0xf]
  %v2918 = vld [vmem:[%s6 + $0x38] sm:$0xf]
  %v2919 = vld [vmem:[%s6 + $0x3c] sm:$0xf]
  %v2920 = vld [vmem:[%s6 + $0x40] sm:$0xf]
  %v2921 = vld [vmem:[%s6 + $0x44] sm:$0xf]
  %v2922 = vld [vmem:[%s6 + $0x48] sm:$0xf]
  %v2923 = vld [vmem:[%s6 + $0x4c] sm:$0xf]
  %v2924 = vld [vmem:[%s6 + $0x50] sm:$0xf]
  %v2925 = vld [vmem:[%s6 + $0x54] sm:$0xf]
  %v2926 = vld [vmem:[%s6 + $0x58] sm:$0xf]
  %v2927 = vld [vmem:[%s6 + $0x5c] sm:$0xf]
  %v2928 = vld [vmem:[%s6 + $0x60] sm:$0xf]
  %v2929 = vld [vmem:[%s6 + $0x64] sm:$0xf]
  %v2930 = vld [vmem:[%s6 + $0x68] sm:$0xf]
  %v2931 = vld [vmem:[%s6 + $0x6c] sm:$0xf]
  %v2932 = vld [vmem:[%s6 + $0x70] sm:$0xf]
  %v2933 = vld [vmem:[%s6 + $0x74] sm:$0xf]
  %v2934 = vld [vmem:[%s6 + $0x78] sm:$0xf]
  %v2935 = vld [vmem:[%s6 + $0x7c] sm:$0xf]
  %v2936 = vld [vmem:[%s6 + $0x80] sm:$0xf]
  %v2937 = vld [vmem:[%s6 + $0x84] sm:$0xf]
  %v2938 = vld [vmem:[%s6 + $0x88] sm:$0xf]
  %v2939 = vld [vmem:[%s6 + $0x8c] sm:$0xf]
  %v2940 = vld [vmem:[%s6 + $0x90] sm:$0xf]
  %v2941 = vld [vmem:[%s6 + $0x94] sm:$0xf]
  %v2942 = vld [vmem:[%s6 + $0x98] sm:$0xf]
  %v2943 = vld [vmem:[%s6 + $0x9c] sm:$0xf]
  %v2944 = vld [vmem:[%s6 + $0xa0] sm:$0xf]
  %v2945 = vld [vmem:[%s6 + $0xa4] sm:$0xf]
  %v2946 = vld [vmem:[%s6 + $0xa8] sm:$0xf]
  %v2947 = vld [vmem:[%s6 + $0xac] sm:$0xf]
  %v2948 = vld [vmem:[%s6 + $0xb0] sm:$0xf]
  %v2949 = vld [vmem:[%s6 + $0xb4] sm:$0xf]
  %v2950 = vld [vmem:[%s6 + $0xb8] sm:$0xf]
  %v2951 = vld [vmem:[%s6 + $0xbc] sm:$0xf]
  %v2952 = vld [vmem:[%s6 + $0xc0] sm:$0xf]
  %v2953 = vld [vmem:[%s6 + $0xc4] sm:$0xf]
  %v2954 = vld [vmem:[%s6 + $0xc8] sm:$0xf]
  %v2955 = vld [vmem:[%s6 + $0xcc] sm:$0xf]
  %v2956 = vld [vmem:[%s6 + $0xd0] sm:$0xf]
  %v2957 = vld [vmem:[%s6 + $0xd4] sm:$0xf]
  %v2958 = vld [vmem:[%s6 + $0xd8] sm:$0xf]
  %v2959 = vld [vmem:[%s6 + $0xdc] sm:$0xf]
  %v2960 = vld [vmem:[%s6 + $0xe0] sm:$0xf]
  %v2961 = vld [vmem:[%s6 + $0xe4] sm:$0xf]
  %v2962 = vld [vmem:[%s6 + $0xe8] sm:$0xf]
  %v2963 = vld [vmem:[%s6 + $0xec] sm:$0xf]
  %v2964 = vld [vmem:[%s6 + $0xf0] sm:$0xf]
  %v2965 = vld [vmem:[%s6 + $0xf4] sm:$0x1]
  %v2966 = vld [vmem:[%s7] sm:$0x1]
  %v2968 = vlaneseq
  %v2969 = vshrl.u32 %v2968, 7
  %v2970 = vsub.s32 0, %v2969
  %v2971 = vrot.slane %v2966, %v2970
  %v3035 = vunpack.c.l.b16 %v2904
  %v3036 = vunpack.c.l.b16 %v2905
  %v3037 = vunpack.c.l.b16 %v2906
  %v3038 = vunpack.c.l.b16 %v2907
  %v3039 = vunpack.c.l.b16 %v2908
  %v3040 = vunpack.c.l.b16 %v2909
  %v3041 = vunpack.c.l.b16 %v2910
  %v3042 = vunpack.c.l.b16 %v2911
  %v3043 = vunpack.c.l.b16 %v2912
  %v3044 = vunpack.c.l.b16 %v2913
  %v3045 = vunpack.c.l.b16 %v2914
  %v3046 = vunpack.c.l.b16 %v2915
  %v3047 = vunpack.c.l.b16 %v2916
  %v3048 = vunpack.c.l.b16 %v2917
  %v3049 = vunpack.c.l.b16 %v2918
  %v3050 = vunpack.c.l.b16 %v2919
  %v3051 = vunpack.c.l.b16 %v2920
  %v3052 = vunpack.c.l.b16 %v2921
  %v3053 = vunpack.c.l.b16 %v2922
  %v3054 = vunpack.c.l.b16 %v2923
  %v3055 = vunpack.c.l.b16 %v2924
  %v3056 = vunpack.c.l.b16 %v2925
  %v3057 = vunpack.c.l.b16 %v2926
  %v3058 = vunpack.c.l.b16 %v2927
  %v3059 = vunpack.c.l.b16 %v2928
  %v3060 = vunpack.c.l.b16 %v2929
  %v3061 = vunpack.c.l.b16 %v2930
  %v3062 = vunpack.c.l.b16 %v2931
  %v3063 = vunpack.c.l.b16 %v2932
  %v3064 = vunpack.c.l.b16 %v2933
  %v3065 = vunpack.c.l.b16 %v2934
  %v3066 = vunpack.c.l.b16 %v2935
  %v3067 = vunpack.c.l.b16 %v2936
  %v3068 = vunpack.c.l.b16 %v2937
  %v3069 = vunpack.c.l.b16 %v2938
  %v3070 = vunpack.c.l.b16 %v2939
  %v3071 = vunpack.c.l.b16 %v2940
  %v3072 = vunpack.c.l.b16 %v2941
  %v3073 = vunpack.c.l.b16 %v2942
  %v3074 = vunpack.c.l.b16 %v2943
  %v3075 = vunpack.c.l.b16 %v2944
  %v3076 = vunpack.c.l.b16 %v2945
  %v3077 = vunpack.c.l.b16 %v2946
  %v3078 = vunpack.c.l.b16 %v2947
  %v3079 = vunpack.c.l.b16 %v2948
  %v3080 = vunpack.c.l.b16 %v2949
  %v3081 = vunpack.c.l.b16 %v2950
  %v3082 = vunpack.c.l.b16 %v2951
  %v3083 = vunpack.c.l.b16 %v2952
  %v3084 = vunpack.c.l.b16 %v2953
  %v3085 = vunpack.c.l.b16 %v2954
  %v3086 = vunpack.c.l.b16 %v2955
  %v3087 = vunpack.c.l.b16 %v2956
  %v3088 = vunpack.c.l.b16 %v2957
  %v3089 = vunpack.c.l.b16 %v2958
  %v3090 = vunpack.c.l.b16 %v2959
  %v3091 = vunpack.c.l.b16 %v2960
  %v3092 = vunpack.c.l.b16 %v2961
  %v3093 = vunpack.c.l.b16 %v2962
  %v3094 = vunpack.c.l.b16 %v2963
  %v3095 = vunpack.c.l.b16 %v2964
  %v3096 = vunpack.c.l.b16 %v2965
  %v3097 = vpack.c.b16 %v3036, %v3035
  %v3098 = vpack.c.b16 %v3038, %v3037
  %v3099 = vpack.c.b16 %v3040, %v3039
  %v3100 = vpack.c.b16 %v3042, %v3041
  %v3101 = vpack.c.b16 %v3044, %v3043
  %v3102 = vpack.c.b16 %v3046, %v3045
  %v3103 = vpack.c.b16 %v3048, %v3047
  %v3104 = vpack.c.b16 %v3050, %v3049
  %v3105 = vpack.c.b16 %v3052, %v3051
  %v3106 = vpack.c.b16 %v3054, %v3053
  %v3107 = vpack.c.b16 %v3056, %v3055
  %v3108 = vpack.c.b16 %v3058, %v3057
  %v3109 = vpack.c.b16 %v3060, %v3059
  %v3110 = vpack.c.b16 %v3062, %v3061
  %v3111 = vpack.c.b16 %v3064, %v3063
  %v3112 = vpack.c.b16 %v3066, %v3065
  %v3113 = vpack.c.b16 %v3068, %v3067
  %v3114 = vpack.c.b16 %v3070, %v3069
  %v3115 = vpack.c.b16 %v3072, %v3071
  %v3116 = vpack.c.b16 %v3074, %v3073
  %v3117 = vpack.c.b16 %v3076, %v3075
  %v3118 = vpack.c.b16 %v3078, %v3077
  %v3119 = vpack.c.b16 %v3080, %v3079
  %v3120 = vpack.c.b16 %v3082, %v3081
  %v3121 = vpack.c.b16 %v3084, %v3083
  %v3122 = vpack.c.b16 %v3086, %v3085
  %v3123 = vpack.c.b16 %v3088, %v3087
  %v3124 = vpack.c.b16 %v3090, %v3089
  %v3125 = vpack.c.b16 %v3092, %v3091
  %v3126 = vpack.c.b16 %v3094, %v3093
  %v3127 = vpack.c.b16 %v3096, %v3095
  %vm3158 = vcmask 867328
  %v3160 = vsel %vm3158, %v2903, 0
  %vm3162 = vcmask 1044480
  %v3164 = vsel %vm3162, %v3127, 0
  %3166 = vmatprep.subr.bf16.mxu0 0
  %3167 = vmatpush1.bf16.msra.mxu0 %v3097
  %3168 = vmatprep.subr.bf16.mxu0 0
  %3169 = vmatpush1.bf16.msra.mxu0 %v3098
  %3170 = vmatprep.subr.bf16.mxu0 0
  %3171 = vmatpush1.bf16.msra.mxu0 %v3099
  %3172 = vmatprep.subr.bf16.mxu0 0
  %3173 = vmatpush1.bf16.msra.mxu0 %v3100
  %3174 = vmatprep.subr.bf16.mxu0 0
  %3175 = vmatpush1.bf16.msra.mxu0 %v3101
  %3176 = vmatprep.subr.bf16.mxu0 0
  %3177 = vmatpush1.bf16.msra.mxu0 %v3102
  %3178 = vmatprep.subr.bf16.mxu0 0
  %3179 = vmatpush1.bf16.msra.mxu0 %v3103
  %3180 = vmatprep.subr.bf16.mxu0 0
  %3181 = vmatpush1.bf16.msra.mxu0 %v3104
  %3182 = vmatprep.subr.bf16.mxu0 0
  %3183 = vmatpush1.bf16.msra.mxu0 %v3105
  %3184 = vmatprep.subr.bf16.mxu0 0
  %3185 = vmatpush1.bf16.msra.mxu0 %v3106
  %3186 = vmatprep.subr.bf16.mxu0 0
  %3187 = vmatpush1.bf16.msra.mxu0 %v3107
  %3188 = vmatprep.subr.bf16.mxu0 0
  %3189 = vmatpush1.bf16.msra.mxu0 %v3108
  %3190 = vmatprep.subr.bf16.mxu0 0
  %3191 = vmatpush1.bf16.msra.mxu0 %v3109
  %3192 = vmatprep.subr.bf16.mxu0 0
  %3193 = vmatpush1.bf16.msra.mxu0 %v3110
  %3194 = vmatprep.subr.bf16.mxu0 0
  %3195 = vmatpush1.bf16.msra.mxu0 %v3111
  %3196 = vmatprep.subr.bf16.mxu0 0
  %3197 = vmatpush1.bf16.msra.mxu0 %v3112
  %3198 = vmatprep.mubr.bf16.mxu0 %v2901
  %3199 = vmatmul.mubr.bf16.gmra.mrb[0].mxu0 %v2900
  %v3200 = vpop.f32.mrb[0].mxu0
  %v3201 = vadd.f32 %v2971, %v3200
  %v3202 = vpop.f32.mrb[0].mxu0
  %v3203 = vpop.f32.mrb[0].mxu0
  %v3204 = vadd.f32 %v2971, %v3203
  %v3205 = vpop.f32.mrb[0].mxu0
  %3206 = vdwg.mxu0
  %3207 = vmatprep.subr.bf16.mxu0 0
  %3208 = vmatpush1.bf16.msra.mxu0 %v3113
  %3209 = vmatprep.subr.bf16.mxu0 0
  %3210 = vmatpush1.bf16.msra.mxu0 %v3114
  %3211 = vmatprep.subr.bf16.mxu0 0
  %3212 = vmatpush1.bf16.msra.mxu0 %v3115
  %3213 = vmatprep.subr.bf16.mxu0 0
  %3214 = vmatpush1.bf16.msra.mxu0 %v3116
  %3215 = vmatprep.subr.bf16.mxu0 0
  %3216 = vmatpush1.bf16.msra.mxu0 %v3117
  %3217 = vmatprep.subr.bf16.mxu0 0
  %3218 = vmatpush1.bf16.msra.mxu0 %v3118
  %3219 = vmatprep.subr.bf16.mxu0 0
  %3220 = vmatpush1.bf16.msra.mxu0 %v3119
  %3221 = vmatprep.subr.bf16.mxu0 0
  %3222 = vmatpush1.bf16.msra.mxu0 %v3120
  %3223 = vmatprep.subr.bf16.mxu0 0
  %3224 = vmatpush1.bf16.msra.mxu0 %v3121
  %3225 = vmatprep.subr.bf16.mxu0 0
  %3226 = vmatpush1.bf16.msra.mxu0 %v3122
  %3227 = vmatprep.subr.bf16.mxu0 0
  %3228 = vmatpush1.bf16.msra.mxu0 %v3123
  %3229 = vmatprep.subr.bf16.mxu0 0
  %3230 = vmatpush1.bf16.msra.mxu0 %v3124
  %3231 = vmatprep.subr.bf16.mxu0 0
  %3232 = vmatpush1.bf16.msra.mxu0 %v3125
  %3233 = vmatprep.subr.bf16.mxu0 0
  %3234 = vmatpush1.bf16.msra.mxu0 %v3126
  %3235 = vmatprep.subr.bf16.mxu0 0
  %3236 = vmatpush1.bf16.msra.mxu0 %v3164
  %3237 = vmatprep.subr.bf16.mxu0 0
  %3238 = vmatpush1.bf16.msra.mxu0 0
  %3239 = vmatprep.mubr.bf16.mxu0 %v3160
  %3240 = vmatmul.mubr.bf16.gmra.mrb[0].mxu0 %v2902
  %v3241 = vpop.f32.mrb[0].mxu0
  %v3242 = vadd.f32 %v3201, %v3241
  %v3243 = vpop.f32.mrb[0].mxu0
  %v3244 = vpop.f32.mrb[0].mxu0
  %v3245 = vadd.f32 %v3204, %v3244
  %v3246 = vpop.f32.mrb[0].mxu0
  %3247 = vdwg.mxu0
  %v3248 = vpack.c.bf16 %v3245, %v3242
  %v3249 = vld [vmem:[%s8] sm:$0xf]
  %v3250 = vld [vmem:[%s8 + $0x4] sm:$0xf]
  %v3251 = vld [vmem:[%s8 + $0x8] sm:$0xf]
  %v3252 = vld [vmem:[%s8 + $0xc] sm:$0xf]
  %v3253 = vld [vmem:[%s8 + $0x10] sm:$0xf]
  %v3254 = vld [vmem:[%s8 + $0x14] sm:$0xf]
  %v3255 = vld [vmem:[%s8 + $0x18] sm:$0x1]
  %v3256 = vld [vmem:[%s9] sm:$0x1]
  %v3258 = vlaneseq
  %v3259 = vshrl.u32 %v3258, 7
  %v3260 = vsub.s32 0, %v3259
  %v3261 = vrot.slane %v3256, %v3260
  %v3270 = vunpack.c.l.b16 %v3249
  %v3271 = vunpack.c.l.b16 %v3250
  %v3272 = vunpack.c.l.b16 %v3251
  %v3273 = vunpack.c.l.b16 %v3252
  %v3274 = vunpack.c.l.b16 %v3253
  %v3275 = vunpack.c.l.b16 %v3254
  %v3276 = vunpack.c.l.b16 %v3255
  %v3277 = vpack.c.b16 %v3271, %v3270
  %v3278 = vpack.c.b16 %v3273, %v3272
  %v3279 = vpack.c.b16 %v3275, %v3274
  %v3280 = vpack.c.b16 %v3276, %v3276
  %vm3284 = vcmask 408576
  %v3286 = vsel %vm3284, %v3248, 0
  %vm3288 = vcmask 1040384
  %v3290 = vsel %vm3288, %v3280, 0
  %3292 = vmatprep.subr.bf16.mxu0 0
  %3293 = vmatpush1.bf16.msra.mxu0 %v3277
  %3294 = vmatprep.subr.bf16.mxu0 0
  %3295 = vmatpush1.bf16.msra.mxu0 %v3278
  %3296 = vmatprep.subr.bf16.mxu0 0
  %3297 = vmatpush1.bf16.msra.mxu0 %v3279
  %3298 = vmatprep.subr.bf16.mxu0 0
  %3299 = vmatpush1.bf16.msra.mxu0 %v3290
  %3300 = vmatprep.subr.bf16.mxu0 0
  %3301 = vmatpush1.bf16.msra.mxu0 0
  %3302 = vmatprep.subr.bf16.mxu0 0
  %3303 = vmatpush1.bf16.msra.mxu0 0
  %3304 = vmatprep.subr.bf16.mxu0 0
  %3305 = vmatpush1.bf16.msra.mxu0 0
  %3306 = vmatprep.subr.bf16.mxu0 0
  %3307 = vmatpush1.bf16.msra.mxu0 0
  %3308 = vmatprep.subr.bf16.mxu0 0
  %3309 = vmatpush1.bf16.msra.mxu0 0
  %3310 = vmatprep.subr.bf16.mxu0 0
  %3311 = vmatpush1.bf16.msra.mxu0 0
  %3312 = vmatprep.subr.bf16.mxu0 0
  %3313 = vmatpush1.bf16.msra.mxu0 0
  %3314 = vmatprep.subr.bf16.mxu0 0
  %3315 = vmatpush1.bf16.msra.mxu0 0
  %3316 = vmatprep.subr.bf16.mxu0 0
  %3317 = vmatpush1.bf16.msra.mxu0 0
  %3318 = vmatprep.subr.bf16.mxu0 0
  %3319 = vmatpush1.bf16.msra.mxu0 0
  %3320 = vmatprep.subr.bf16.mxu0 0
  %3321 = vmatpush1.bf16.msra.mxu0 0
  %3322 = vmatprep.subr.bf16.mxu0 0
  %3323 = vmatpush1.bf16.msra.mxu0 0
  %3324 = vmatprep.mubr.bf16.mxu0 0
  %3325 = vmatmul.mubr.bf16.gmra.mrb[0].mxu0 %v3286
  %v3326 = vpop.f32.mrb[0].mxu0
  %v3327 = vadd.f32 %v3261, %v3326
  %v3328 = vpop.f32.mrb[0].mxu0
  %v3329 = vpop.f32.mrb[0].mxu0
  %v3330 = vadd.f32 %v3261, %v3329
  %v3331 = vpop.f32.mrb[0].mxu0
  %3332 = vdwg.mxu0
  %v3333 = vld [vmem:[%s10] sm:$0xf]
  %v3334 = vld [vmem:[%s10 + $0x4] sm:$0xf]
  %v3335 = vld [vmem:[%s10 + $0x8] sm:$0xf]
  %v3336 = vld [vmem:[%s10 + $0xc] sm:$0xf]
  %v3337 = vld [vmem:[%s10 + $0x10] sm:$0xf]
  %v3338 = vld [vmem:[%s10 + $0x14] sm:$0xf]
  %v3339 = vld [vmem:[%s10 + $0x18] sm:$0x1]
  %v3340 = vld [vmem:[%s11] sm:$0x1]
  %v3342 = vlaneseq
  %v3343 = vshrl.u32 %v3342, 7
  %v3344 = vsub.s32 0, %v3343
  %v3345 = vrot.slane %v3340, %v3344
  %v3354 = vunpack.c.l.b16 %v3333
  %v3355 = vunpack.c.l.b16 %v3334
  %v3356 = vunpack.c.l.b16 %v3335
  %v3357 = vunpack.c.l.b16 %v3336
  %v3358 = vunpack.c.l.b16 %v3337
  %v3359 = vunpack.c.l.b16 %v3338
  %v3360 = vunpack.c.l.b16 %v3339
  %v3361 = vpack.c.b16 %v3355, %v3354
  %v3362 = vpack.c.b16 %v3357, %v3356
  %v3363 = vpack.c.b16 %v3359, %v3358
  %v3364 = vpack.c.b16 %v3360, %v3360
  %v3369 = vsel %vm3288, %v3364, 0
  %3371 = vmatprep.subr.bf16.mxu0 0
  %3372 = vmatpush1.bf16.msra.mxu0 %v3361
  %3373 = vmatprep.subr.bf16.mxu0 0
  %3374 = vmatpush1.bf16.msra.mxu0 %v3362
  %3375 = vmatprep.subr.bf16.mxu0 0
  %3376 = vmatpush1.bf16.msra.mxu0 %v3363
  %3377 = vmatprep.subr.bf16.mxu0 0
  %3378 = vmatpush1.bf16.msra.mxu0 %v3369
  %3379 = vmatprep.subr.bf16.mxu0 0
  %3380 = vmatpush1.bf16.msra.mxu0 0
  %3381 = vmatprep.subr.bf16.mxu0 0
  %3382 = vmatpush1.bf16.msra.mxu0 0
  %3383 = vmatprep.subr.bf16.mxu0 0
  %3384 = vmatpush1.bf16.msra.mxu0 0
  %3385 = vmatprep.subr.bf16.mxu0 0
  %3386 = vmatpush1.bf16.msra.mxu0 0
  %3387 = vmatprep.subr.bf16.mxu0 0
  %3388 = vmatpush1.bf16.msra.mxu0 0
  %3389 = vmatprep.subr.bf16.mxu0 0
  %3390 = vmatpush1.bf16.msra.mxu0 0
  %3391 = vmatprep.subr.bf16.mxu0 0
  %3392 = vmatpush1.bf16.msra.mxu0 0
  %3393 = vmatprep.subr.bf16.mxu0 0
  %3394 = vmatpush1.bf16.msra.mxu0 0
  %3395 = vmatprep.subr.bf16.mxu0 0
  %3396 = vmatpush1.bf16.msra.mxu0 0
  %3397 = vmatprep.subr.bf16.mxu0 0
  %3398 = vmatpush1.bf16.msra.mxu0 0
  %3399 = vmatprep.subr.bf16.mxu0 0
  %3400 = vmatpush1.bf16.msra.mxu0 0
  %3401 = vmatprep.subr.bf16.mxu0 0
  %3402 = vmatpush1.bf16.msra.mxu0 0
  %3403 = vmatprep.mubr.bf16.mxu0 0
  %3404 = vmatmul.mubr.bf16.gmra.mrb[0].mxu0 %v3286
  %v3405 = vpop.f32.mrb[0].mxu0
  %v3406 = vadd.f32 %v3345, %v3405
  %v3407 = vpop.f32.mrb[0].mxu0
  %v3408 = vpop.f32.mrb[0].mxu0
  %v3409 = vadd.f32 %v3345, %v3408
  %v3410 = vpop.f32.mrb[0].mxu0
  %3411 = vdwg.mxu0
  %v3412 = vmul.f32 %v3406, 1.442695
  %v3413 = vpow.pop %v3412
  %v3414 = vmul.f32 %v3409, 1.442695
  %v3415 = vpow.pop %v3414
  %v3416 = vld [vmem:[%s1] sm:$0xff]
  %v3417 = vld [vmem:[%s1 + $0x8] sm:$0xff]
  %v3418 = vmul.f32 %v3413, %v3416
  %v3419 = vmul.f32 %v3415, %v3417
  %v3420 = vadd.f32 %v3327, %v3418
  %v3421 = vadd.f32 %v3330, %v3419
  %v3422 = vpack.c.bf16 %v3421, %v3420
  %v3423 = vld [vmem:[%s12] sm:$0x77]
  %v3424 = vld [vmem:[%s12 + $0x8] sm:$0x77]
  %v3425 = vld [vmem:[%s13] sm:$0xf]
  %v3427 = vlaneseq
  %v3428 = vshrl.u32 %v3427, 7
  %v3429 = vsub.s32 0, %v3428
  %v3430 = vrot.slane %v3425, %v3429
  %v3431 = vlaneseq
  %v3432 = vshrl.u32 %v3431, 7
  %v3433 = vsub.s32 1, %v3432
  %v3434 = vrot.slane %v3425, %v3433
  %v3435 = vlaneseq
  %v3436 = vshrl.u32 %v3435, 7
  %v3437 = vsub.s32 2, %v3436
  %v3438 = vrot.slane %v3425, %v3437
  %v3439 = vlaneseq
  %v3440 = vshrl.u32 %v3439, 7
  %v3441 = vsub.s32 3, %v3440
  %v3442 = vrot.slane %v3425, %v3441
  %v3449 = vunpack.c.l.b16 %v3423
  %v3450 = vunpack.c.h.b16 %v3423
  %v3451 = vunpack.c.l.b16 %v3424
  %v3452 = vunpack.c.h.b16 %v3424
  %v3453 = vpack.c.b16 %v3449, %v3449
  %v3454 = vpack.c.b16 %v3450, %v3450
  %v3455 = vpack.c.b16 %v3451, %v3451
  %v3456 = vpack.c.b16 %v3452, %v3452
  %vm3457 = vcmask 39936
  %v3459 = vsel %vm3457, %v3422, 0
  %vm3461 = vcmask 1042432
  %v3462 = vsel %vm717, 4294967295, 65535
  %v3463 = vsel %vm3461, %v3462, 0
  %v3465 = vand.u32 %v3453, %v3463
  %v3468 = vand.u32 %v3454, %v3463
  %v3471 = vand.u32 %v3455, %v3463
  %v3474 = vand.u32 %v3456, %v3463
  %3476 = vmatprep.subr.bf16.mxu0 %v3468
  %3477 = vmatpush1.bf16.msra.mxu0 %v3465
  %3478 = vmatprep.subr.bf16.mxu0 0
  %3479 = vmatpush1.bf16.msra.mxu0 0
  %3480 = vmatprep.subr.bf16.mxu0 0
  %3481 = vmatpush1.bf16.msra.mxu0 0
  %3482 = vmatprep.subr.bf16.mxu0 0
  %3483 = vmatpush1.bf16.msra.mxu0 0
  %3484 = vmatprep.subr.bf16.mxu0 0
  %3485 = vmatpush1.bf16.msra.mxu0 0
  %3486 = vmatprep.subr.bf16.mxu0 0
  %3487 = vmatpush1.bf16.msra.mxu0 0
  %3488 = vmatprep.subr.bf16.mxu0 0
  %3489 = vmatpush1.bf16.msra.mxu0 0
  %3490 = vmatprep.subr.bf16.mxu0 0
  %3491 = vmatpush1.bf16.msra.mxu0 0
  %3492 = vmatprep.subr.bf16.mxu0 0
  %3493 = vmatpush1.bf16.msra.mxu0 0
  %3494 = vmatprep.subr.bf16.mxu0 0
  %3495 = vmatpush1.bf16.msra.mxu0 0
  %3496 = vmatprep.subr.bf16.mxu0 0
  %3497 = vmatpush1.bf16.msra.mxu0 0
  %3498 = vmatprep.subr.bf16.mxu0 0
  %3499 = vmatpush1.bf16.msra.mxu0 0
  %3500 = vmatprep.subr.bf16.mxu0 0
  %3501 = vmatpush1.bf16.msra.mxu0 0
  %3502 = vmatprep.subr.bf16.mxu0 0
  %3503 = vmatpush1.bf16.msra.mxu0 0
  %3504 = vmatprep.subr.bf16.mxu0 0
  %3505 = vmatpush1.bf16.msra.mxu0 0
  %3506 = vmatprep.subr.bf16.mxu0 0
  %3507 = vmatpush1.bf16.msra.mxu0 0
  %3508 = vmatprep.mubr.bf16.mxu0 0
  %3509 = vmatmul.mubr.bf16.gmra.mrb[0].mxu0 %v3459
  %v3510 = vpop.f32.mrb[0].mxu0
  %v3511 = vadd.f32 %v3430, %v3510
  %v3512 = vpop.f32.mrb[0].mxu0
  %v3513 = vadd.f32 %v3434, %v3512
  %v3514 = vpop.f32.mrb[0].mxu0
  %v3515 = vadd.f32 %v3430, %v3514
  %v3516 = vpop.f32.mrb[0].mxu0
  %v3517 = vadd.f32 %v3434, %v3516
  %3518 = vdwg.mxu0
  %3519 = vmatprep.subr.bf16.mxu0 %v3474
  %3520 = vmatpush1.bf16.msra.mxu0 %v3471
  %3521 = vmatprep.subr.bf16.mxu0 0
  %3522 = vmatpush1.bf16.msra.mxu0 0
  %3523 = vmatprep.subr.bf16.mxu0 0
  %3524 = vmatpush1.bf16.msra.mxu0 0
  %3525 = vmatprep.subr.bf16.mxu0 0
  %3526 = vmatpush1.bf16.msra.mxu0 0
  %3527 = vmatprep.subr.bf16.mxu0 0
  %3528 = vmatpush1.bf16.msra.mxu0 0
  %3529 = vmatprep.subr.bf16.mxu0 0
  %3530 = vmatpush1.bf16.msra.mxu0 0
  %3531 = vmatprep.subr.bf16.mxu0 0
  %3532 = vmatpush1.bf16.msra.mxu0 0
  %3533 = vmatprep.subr.bf16.mxu0 0
  %3534 = vmatpush1.bf16.msra.mxu0 0
  %3535 = vmatprep.subr.bf16.mxu0 0
  %3536 = vmatpush1.bf16.msra.mxu0 0
  %3537 = vmatprep.subr.bf16.mxu0 0
  %3538 = vmatpush1.bf16.msra.mxu0 0
  %3539 = vmatprep.subr.bf16.mxu0 0
  %3540 = vmatpush1.bf16.msra.mxu0 0
  %3541 = vmatprep.subr.bf16.mxu0 0
  %3542 = vmatpush1.bf16.msra.mxu0 0
  %3543 = vmatprep.subr.bf16.mxu0 0
  %3544 = vmatpush1.bf16.msra.mxu0 0
  %3545 = vmatprep.subr.bf16.mxu0 0
  %3546 = vmatpush1.bf16.msra.mxu0 0
  %3547 = vmatprep.subr.bf16.mxu0 0
  %3548 = vmatpush1.bf16.msra.mxu0 0
  %3549 = vmatprep.subr.bf16.mxu0 0
  %3550 = vmatpush1.bf16.msra.mxu0 0
  %3551 = vmatprep.mubr.bf16.mxu0 0
  %3552 = vmatmul.mubr.bf16.gmra.mrb[0].mxu0 %v3459
  %v3553 = vpop.f32.mrb[0].mxu0
  %v3554 = vadd.f32 %v3438, %v3553
  %v3555 = vpop.f32.mrb[0].mxu0
  %v3556 = vadd.f32 %v3442, %v3555
  %v3557 = vpop.f32.mrb[0].mxu0
  %v3558 = vadd.f32 %v3438, %v3557
  %v3559 = vpop.f32.mrb[0].mxu0
  %v3560 = vadd.f32 %v3442, %v3559
  %3561 = vdwg.mxu0
  %v3562 = vpack.c.bf16 %v3515, %v3511
  %v3563 = vpack.c.bf16 %v3517, %v3513
  %v3564 = vpack.c.bf16 %v3558, %v3554
  %v3565 = vpack.c.bf16 %v3560, %v3556
  %v3566 = vld [vmem:[%s14] sm:$0xff]
  %v3567 = vld [vmem:[%s14 + $0x8] sm:$0xff]
  %v3568 = vld [vmem:[%s14 + $0x10] sm:$0xff]
  %v3569 = vld [vmem:[%s14 + $0x18] sm:$0xf]
  %v3570 = vld [vmem:[%s14 + $0x1c] sm:$0xff]
  %v3571 = vld [vmem:[%s14 + $0x24] sm:$0xff]
  %v3572 = vld [vmem:[%s14 + $0x2c] sm:$0xff]
  %v3573 = vld [vmem:[%s14 + $0x34] sm:$0xf]
  %v3574 = vld [vmem:[%s14 + $0x38] sm:$0xff]
  %v3575 = vld [vmem:[%s14 + $0x40] sm:$0xff]
  %v3576 = vld [vmem:[%s14 + $0x48] sm:$0xff]
  %v3577 = vld [vmem:[%s14 + $0x50] sm:$0xf]
  %v3578 = vld [vmem:[%s14 + $0x54] sm:$0xff]
  %v3579 = vld [vmem:[%s14 + $0x5c] sm:$0xff]
  %v3580 = vld [vmem:[%s14 + $0x64] sm:$0xff]
  %v3581 = vld [vmem:[%s14 + $0x6c] sm:$0xf]
  %v3582 = vld [vmem:[%s14 + $0x70] sm:$0xff]
  %v3583 = vld [vmem:[%s14 + $0x78] sm:$0xff]
  %v3584 = vld [vmem:[%s14 + $0x80] sm:$0xff]
  %v3585 = vld [vmem:[%s14 + $0x88] sm:$0xf]
  %v3586 = vld [vmem:[%s14 + $0x8c] sm:$0xff]
  %v3587 = vld [vmem:[%s14 + $0x94] sm:$0xff]
  %v3588 = vld [vmem:[%s14 + $0x9c] sm:$0xff]
  %v3589 = vld [vmem:[%s14 + $0xa4] sm:$0xf]
  %v3590 = vld [vmem:[%s14 + $0xa8] sm:$0xff]
  %v3591 = vld [vmem:[%s14 + $0xb0] sm:$0xff]
  %v3592 = vld [vmem:[%s14 + $0xb8] sm:$0xff]
  %v3593 = vld [vmem:[%s14 + $0xc0] sm:$0xf]
  %v3594 = vld [vmem:[%s14 + $0xc4] sm:$0xff]
  %v3595 = vld [vmem:[%s14 + $0xcc] sm:$0xff]
  %v3596 = vld [vmem:[%s14 + $0xd4] sm:$0xff]
  %v3597 = vld [vmem:[%s14 + $0xdc] sm:$0xf]
  %v3598 = vld [vmem:[%s14 + $0xe0] sm:$0xff]
  %v3599 = vld [vmem:[%s14 + $0xe8] sm:$0xff]
  %v3600 = vld [vmem:[%s14 + $0xf0] sm:$0xff]
  %v3601 = vld [vmem:[%s14 + $0xf8] sm:$0xf]
  %v3602 = vld [vmem:[%s14 + $0xfc] sm:$0xff]
  %v3603 = vld [vmem:[%s14 + $0x104] sm:$0xff]
  %v3604 = vld [vmem:[%s14 + $0x10c] sm:$0xff]
  %v3605 = vld [vmem:[%s14 + $0x114] sm:$0xf]
  %v3606 = vld [vmem:[%s14 + $0x118] sm:$0xff]
  %v3607 = vld [vmem:[%s14 + $0x120] sm:$0xff]
  %v3608 = vld [vmem:[%s14 + $0x128] sm:$0xff]
  %v3609 = vld [vmem:[%s14 + $0x130] sm:$0xf]
  %v3610 = vld [vmem:[%s14 + $0x134] sm:$0xff]
  %v3611 = vld [vmem:[%s14 + $0x13c] sm:$0xff]
  %v3612 = vld [vmem:[%s14 + $0x144] sm:$0xff]
  %v3613 = vld [vmem:[%s14 + $0x14c] sm:$0xf]
  %v3614 = vld [vmem:[%s14 + $0x150] sm:$0xff]
  %v3615 = vld [vmem:[%s14 + $0x158] sm:$0xff]
  %v3616 = vld [vmem:[%s14 + $0x160] sm:$0xff]
  %v3617 = vld [vmem:[%s14 + $0x168] sm:$0xf]
  %v3618 = vld [vmem:[%s14 + $0x16c] sm:$0xff]
  %v3619 = vld [vmem:[%s14 + $0x174] sm:$0xff]
  %v3620 = vld [vmem:[%s14 + $0x17c] sm:$0xff]
  %v3621 = vld [vmem:[%s14 + $0x184] sm:$0xf]
  %v3622 = vld [vmem:[%s14 + $0x188] sm:$0xff]
  %v3623 = vld [vmem:[%s14 + $0x190] sm:$0xff]
  %v3624 = vld [vmem:[%s14 + $0x198] sm:$0xff]
  %v3625 = vld [vmem:[%s14 + $0x1a0] sm:$0xf]
  %v3626 = vld [vmem:[%s14 + $0x1a4] sm:$0xff]
  %v3627 = vld [vmem:[%s14 + $0x1ac] sm:$0xff]
  %v3628 = vld [vmem:[%s14 + $0x1b4] sm:$0xff]
  %v3629 = vld [vmem:[%s14 + $0x1bc] sm:$0xf]
  %v3630 = vld [vmem:[%s14 + $0x1c0] sm:$0xff]
  %v3631 = vld [vmem:[%s14 + $0x1c8] sm:$0xff]
  %v3632 = vld [vmem:[%s14 + $0x1d0] sm:$0xff]
  %v3633 = vld [vmem:[%s14 + $0x1d8] sm:$0xf]
  %v3634 = vld [vmem:[%s14 + $0x1dc] sm:$0xff]
  %v3635 = vld [vmem:[%s14 + $0x1e4] sm:$0xff]
  %v3636 = vld [vmem:[%s14 + $0x1ec] sm:$0xff]
  %v3637 = vld [vmem:[%s14 + $0x1f4] sm:$0xf]
  %v3638 = vld [vmem:[%s14 + $0x1f8] sm:$0xff]
  %v3639 = vld [vmem:[%s14 + $0x200] sm:$0xff]
  %v3640 = vld [vmem:[%s14 + $0x208] sm:$0xff]
  %v3641 = vld [vmem:[%s14 + $0x210] sm:$0xf]
  %v3642 = vld [vmem:[%s14 + $0x214] sm:$0xff]
  %v3643 = vld [vmem:[%s14 + $0x21c] sm:$0xff]
  %v3644 = vld [vmem:[%s14 + $0x224] sm:$0xff]
  %v3645 = vld [vmem:[%s14 + $0x22c] sm:$0xf]
  %v3646 = vld [vmem:[%s14 + $0x230] sm:$0xff]
  %v3647 = vld [vmem:[%s14 + $0x238] sm:$0xff]
  %v3648 = vld [vmem:[%s14 + $0x240] sm:$0xff]
  %v3649 = vld [vmem:[%s14 + $0x248] sm:$0xf]
  %v3650 = vld [vmem:[%s14 + $0x24c] sm:$0xff]
  %v3651 = vld [vmem:[%s14 + $0x254] sm:$0xff]
  %v3652 = vld [vmem:[%s14 + $0x25c] sm:$0xff]
  %v3653 = vld [vmem:[%s14 + $0x264] sm:$0xf]
  %v3654 = vld [vmem:[%s14 + $0x268] sm:$0xff]
  %v3655 = vld [vmem:[%s14 + $0x270] sm:$0xff]
  %v3656 = vld [vmem:[%s14 + $0x278] sm:$0xff]
  %v3657 = vld [vmem:[%s14 + $0x280] sm:$0xf]
  %v3658 = vld [vmem:[%s14 + $0x284] sm:$0xff]
  %v3659 = vld [vmem:[%s14 + $0x28c] sm:$0xff]
  %v3660 = vld [vmem:[%s14 + $0x294] sm:$0xff]
  %v3661 = vld [vmem:[%s14 + $0x29c] sm:$0xf]
  %v3662 = vld [vmem:[%s14 + $0x2a0] sm:$0xff]
  %v3663 = vld [vmem:[%s14 + $0x2a8] sm:$0xff]
  %v3664 = vld [vmem:[%s14 + $0x2b0] sm:$0xff]
  %v3665 = vld [vmem:[%s14 + $0x2b8] sm:$0xf]
  %v3666 = vld [vmem:[%s14 + $0x2bc] sm:$0xff]
  %v3667 = vld [vmem:[%s14 + $0x2c4] sm:$0xff]
  %v3668 = vld [vmem:[%s14 + $0x2cc] sm:$0xff]
  %v3669 = vld [vmem:[%s14 + $0x2d4] sm:$0xf]
  %v3670 = vld [vmem:[%s14 + $0x2d8] sm:$0xff]
  %v3671 = vld [vmem:[%s14 + $0x2e0] sm:$0xff]
  %v3672 = vld [vmem:[%s14 + $0x2e8] sm:$0xff]
  %v3673 = vld [vmem:[%s14 + $0x2f0] sm:$0xf]
  %v3674 = vld [vmem:[%s14 + $0x2f4] sm:$0xff]
  %v3675 = vld [vmem:[%s14 + $0x2fc] sm:$0xff]
  %v3676 = vld [vmem:[%s14 + $0x304] sm:$0xff]
  %v3677 = vld [vmem:[%s14 + $0x30c] sm:$0xf]
  %v3678 = vld [vmem:[%s14 + $0x310] sm:$0xff]
  %v3679 = vld [vmem:[%s14 + $0x318] sm:$0xff]
  %v3680 = vld [vmem:[%s14 + $0x320] sm:$0xff]
  %v3681 = vld [vmem:[%s14 + $0x328] sm:$0xf]
  %v3682 = vld [vmem:[%s14 + $0x32c] sm:$0xff]
  %v3683 = vld [vmem:[%s14 + $0x334] sm:$0xff]
  %v3684 = vld [vmem:[%s14 + $0x33c] sm:$0xff]
  %v3685 = vld [vmem:[%s14 + $0x344] sm:$0xf]
  %v3686 = vld [vmem:[%s14 + $0x348] sm:$0xff]
  %v3687 = vld [vmem:[%s14 + $0x350] sm:$0xff]
  %v3688 = vld [vmem:[%s14 + $0x358] sm:$0xff]
  %v3689 = vld [vmem:[%s14 + $0x360] sm:$0xf]
  %v3690 = vld [vmem:[%s14 + $0x364] sm:$0xff]
  %v3691 = vld [vmem:[%s14 + $0x36c] sm:$0xff]
  %v3692 = vld [vmem:[%s14 + $0x374] sm:$0xff]
  %v3693 = vld [vmem:[%s14 + $0x37c] sm:$0xf]
  %v3694 = vld [vmem:[%s14 + $0x380] sm:$0xff]
  %v3695 = vld [vmem:[%s14 + $0x388] sm:$0xff]
  %v3696 = vld [vmem:[%s14 + $0x390] sm:$0xff]
  %v3697 = vld [vmem:[%s14 + $0x398] sm:$0xf]
  %v3698 = vld [vmem:[%s14 + $0x39c] sm:$0xff]
  %v3699 = vld [vmem:[%s14 + $0x3a4] sm:$0xff]
  %v3700 = vld [vmem:[%s14 + $0x3ac] sm:$0xff]
  %v3701 = vld [vmem:[%s14 + $0x3b4] sm:$0xf]
  %v3702 = vld [vmem:[%s14 + $0x3b8] sm:$0xff]
  %v3703 = vld [vmem:[%s14 + $0x3c0] sm:$0xff]
  %v3704 = vld [vmem:[%s14 + $0x3c8] sm:$0xff]
  %v3705 = vld [vmem:[%s14 + $0x3d0] sm:$0xf]
  %v3706 = vld [vmem:[%s14 + $0x3d4] sm:$0xff]
  %v3707 = vld [vmem:[%s14 + $0x3dc] sm:$0xff]
  %v3708 = vld [vmem:[%s14 + $0x3e4] sm:$0xff]
  %v3709 = vld [vmem:[%s14 + $0x3ec] sm:$0xf]
  %v3710 = vld [vmem:[%s14 + $0x3f0] sm:$0xff]
  %v3711 = vld [vmem:[%s14 + $0x3f8] sm:$0xff]
  %v3712 = vld [vmem:[%s14 + $0x400] sm:$0xff]
  %v3713 = vld [vmem:[%s14 + $0x408] sm:$0xf]
  %v3714 = vld [vmem:[%s14 + $0x40c] sm:$0xff]
  %v3715 = vld [vmem:[%s14 + $0x414] sm:$0xff]
  %v3716 = vld [vmem:[%s14 + $0x41c] sm:$0xff]
  %v3717 = vld [vmem:[%s14 + $0x424] sm:$0xf]
  %v3718 = vld [vmem:[%s14 + $0x428] sm:$0xff]
  %v3719 = vld [vmem:[%s14 + $0x430] sm:$0xff]
  %v3720 = vld [vmem:[%s14 + $0x438] sm:$0xff]
  %v3721 = vld [vmem:[%s14 + $0x440] sm:$0xf]
  %v3722 = vld [vmem:[%s14 + $0x444] sm:$0xff]
  %v3723 = vld [vmem:[%s14 + $0x44c] sm:$0xff]
  %v3724 = vld [vmem:[%s14 + $0x454] sm:$0xff]
  %v3725 = vld [vmem:[%s14 + $0x45c] sm:$0xf]
  %v3726 = vld [vmem:[%s14 + $0x460] sm:$0xff]
  %v3727 = vld [vmem:[%s14 + $0x468] sm:$0xff]
  %v3728 = vld [vmem:[%s14 + $0x470] sm:$0xff]
  %v3729 = vld [vmem:[%s14 + $0x478] sm:$0xf]
  %v3730 = vld [vmem:[%s14 + $0x47c] sm:$0xff]
  %v3731 = vld [vmem:[%s14 + $0x484] sm:$0xff]
  %v3732 = vld [vmem:[%s14 + $0x48c] sm:$0xff]
  %v3733 = vld [vmem:[%s14 + $0x494] sm:$0xf]
  %v3734 = vld [vmem:[%s14 + $0x498] sm:$0xff]
  %v3735 = vld [vmem:[%s14 + $0x4a0] sm:$0xff]
  %v3736 = vld [vmem:[%s14 + $0x4a8] sm:$0xff]
  %v3737 = vld [vmem:[%s14 + $0x4b0] sm:$0xf]
  %v3738 = vld [vmem:[%s14 + $0x4b4] sm:$0xff]
  %v3739 = vld [vmem:[%s14 + $0x4bc] sm:$0xff]
  %v3740 = vld [vmem:[%s14 + $0x4c4] sm:$0xff]
  %v3741 = vld [vmem:[%s14 + $0x4cc] sm:$0xf]
  %v3742 = vld [vmem:[%s14 + $0x4d0] sm:$0xff]
  %v3743 = vld [vmem:[%s14 + $0x4d8] sm:$0xff]
  %v3744 = vld [vmem:[%s14 + $0x4e0] sm:$0xff]
  %v3745 = vld [vmem:[%s14 + $0x4e8] sm:$0xf]
  %v3746 = vld [vmem:[%s14 + $0x4ec] sm:$0xff]
  %v3747 = vld [vmem:[%s14 + $0x4f4] sm:$0xff]
  %v3748 = vld [vmem:[%s14 + $0x4fc] sm:$0xff]
  %v3749 = vld [vmem:[%s14 + $0x504] sm:$0xf]
  %v3750 = vld [vmem:[%s14 + $0x508] sm:$0xff]
  %v3751 = vld [vmem:[%s14 + $0x510] sm:$0xff]
  %v3752 = vld [vmem:[%s14 + $0x518] sm:$0xff]
  %v3753 = vld [vmem:[%s14 + $0x520] sm:$0xf]
  %v3754 = vld [vmem:[%s14 + $0x524] sm:$0xff]
  %v3755 = vld [vmem:[%s14 + $0x52c] sm:$0xff]
  %v3756 = vld [vmem:[%s14 + $0x534] sm:$0xff]
  %v3757 = vld [vmem:[%s14 + $0x53c] sm:$0xf]
  %v3758 = vld [vmem:[%s14 + $0x540] sm:$0xff]
  %v3759 = vld [vmem:[%s14 + $0x548] sm:$0xff]
  %v3760 = vld [vmem:[%s14 + $0x550] sm:$0xff]
  %v3761 = vld [vmem:[%s14 + $0x558] sm:$0xf]
  %v3762 = vld [vmem:[%s14 + $0x55c] sm:$0xff]
  %v3763 = vld [vmem:[%s14 + $0x564] sm:$0xff]
  %v3764 = vld [vmem:[%s14 + $0x56c] sm:$0xff]
  %v3765 = vld [vmem:[%s14 + $0x574] sm:$0xf]
  %v3766 = vld [vmem:[%s14 + $0x578] sm:$0xff]
  %v3767 = vld [vmem:[%s14 + $0x580] sm:$0xff]
  %v3768 = vld [vmem:[%s14 + $0x588] sm:$0xff]
  %v3769 = vld [vmem:[%s14 + $0x590] sm:$0xf]
  %v3770 = vld [vmem:[%s14 + $0x594] sm:$0xff]
  %v3771 = vld [vmem:[%s14 + $0x59c] sm:$0xff]
  %v3772 = vld [vmem:[%s14 + $0x5a4] sm:$0xff]
  %v3773 = vld [vmem:[%s14 + $0x5ac] sm:$0xf]
  %v3774 = vld [vmem:[%s14 + $0x5b0] sm:$0xff]
  %v3775 = vld [vmem:[%s14 + $0x5b8] sm:$0xff]
  %v3776 = vld [vmem:[%s14 + $0x5c0] sm:$0xff]
  %v3777 = vld [vmem:[%s14 + $0x5c8] sm:$0xf]
  %v3778 = vld [vmem:[%s14 + $0x5cc] sm:$0xff]
  %v3779 = vld [vmem:[%s14 + $0x5d4] sm:$0xff]
  %v3780 = vld [vmem:[%s14 + $0x5dc] sm:$0xff]
  %v3781 = vld [vmem:[%s14 + $0x5e4] sm:$0xf]
  %v3782 = vld [vmem:[%s14 + $0x5e8] sm:$0xff]
  %v3783 = vld [vmem:[%s14 + $0x5f0] sm:$0xff]
  %v3784 = vld [vmem:[%s14 + $0x5f8] sm:$0xff]
  %v3785 = vld [vmem:[%s14 + $0x600] sm:$0xf]
  %v3786 = vld [vmem:[%s14 + $0x604] sm:$0xff]
  %v3787 = vld [vmem:[%s14 + $0x60c] sm:$0xff]
  %v3788 = vld [vmem:[%s14 + $0x614] sm:$0xff]
  %v3789 = vld [vmem:[%s14 + $0x61c] sm:$0xf]
  %v3790 = vld [vmem:[%s14 + $0x620] sm:$0xff]
  %v3791 = vld [vmem:[%s14 + $0x628] sm:$0xff]
  %v3792 = vld [vmem:[%s14 + $0x630] sm:$0xff]
  %v3793 = vld [vmem:[%s14 + $0x638] sm:$0xf]
  %v3794 = vld [vmem:[%s14 + $0x63c] sm:$0xff]
  %v3795 = vld [vmem:[%s14 + $0x644] sm:$0xff]
  %v3796 = vld [vmem:[%s14 + $0x64c] sm:$0xff]
  %v3797 = vld [vmem:[%s14 + $0x654] sm:$0xf]
  %v3798 = vld [vmem:[%s14 + $0x658] sm:$0xff]
  %v3799 = vld [vmem:[%s14 + $0x660] sm:$0xff]
  %v3800 = vld [vmem:[%s14 + $0x668] sm:$0xff]
  %v3801 = vld [vmem:[%s14 + $0x670] sm:$0xf]
  %v3802 = vld [vmem:[%s14 + $0x674] sm:$0xff]
  %v3803 = vld [vmem:[%s14 + $0x67c] sm:$0xff]
  %v3804 = vld [vmem:[%s14 + $0x684] sm:$0xff]
  %v3805 = vld [vmem:[%s14 + $0x68c] sm:$0xf]
  %v3806 = vld [vmem:[%s14 + $0x690] sm:$0xff]
  %v3807 = vld [vmem:[%s14 + $0x698] sm:$0xff]
  %v3808 = vld [vmem:[%s14 + $0x6a0] sm:$0xff]
  %v3809 = vld [vmem:[%s14 + $0x6a8] sm:$0xf]
  %v3810 = vld [vmem:[%s14 + $0x6ac] sm:$0x11]
  %v3811 = vld [vmem:[%s14 + $0x6b4] sm:$0x11]
  %v3812 = vld [vmem:[%s14 + $0x6bc] sm:$0x11]
  %v3813 = vld [vmem:[%s14 + $0x6c4] sm:$0x1]
  %v3814 = vld [vmem:[%s15] sm:$0x7f]
  %v3816 = vlaneseq
  %v3817 = vshrl.u32 %v3816, 7
  %v3818 = vsub.s32 0, %v3817
  %v3819 = vrot.slane %v3814, %v3818
  %v3820 = vlaneseq
  %v3821 = vshrl.u32 %v3820, 7
  %v3822 = vsub.s32 1, %v3821
  %v3823 = vrot.slane %v3814, %v3822
  %v3824 = vlaneseq
  %v3825 = vshrl.u32 %v3824, 7
  %v3826 = vsub.s32 2, %v3825
  %v3827 = vrot.slane %v3814, %v3826
  %v3828 = vlaneseq
  %v3829 = vshrl.u32 %v3828, 7
  %v3830 = vsub.s32 3, %v3829
  %v3831 = vrot.slane %v3814, %v3830
  %v3832 = vlaneseq
  %v3833 = vshrl.u32 %v3832, 7
  %v3834 = vsub.s32 4, %v3833
  %v3835 = vrot.slane %v3814, %v3834
  %v3836 = vlaneseq
  %v3837 = vshrl.u32 %v3836, 7
  %v3838 = vsub.s32 5, %v3837
  %v3839 = vrot.slane %v3814, %v3838
  %v3840 = vlaneseq
  %v3841 = vshrl.u32 %v3840, 7
  %v3842 = vsub.s32 6, %v3841
  %v3843 = vrot.slane %v3814, %v3842
  %v4099 = vunpack.c.l.b16 %v3566
  %v4100 = vunpack.c.h.b16 %v3566
  %v4101 = vunpack.c.l.b16 %v3567
  %v4102 = vunpack.c.h.b16 %v3567
  %v4103 = vunpack.c.l.b16 %v3568
  %v4104 = vunpack.c.h.b16 %v3568
  %v4105 = vunpack.c.l.b16 %v3569
  %v4106 = vunpack.c.l.b16 %v3570
  %v4107 = vunpack.c.h.b16 %v3570
  %v4108 = vunpack.c.l.b16 %v3571
  %v4109 = vunpack.c.h.b16 %v3571
  %v4110 = vunpack.c.l.b16 %v3572
  %v4111 = vunpack.c.h.b16 %v3572
  %v4112 = vunpack.c.l.b16 %v3573
  %v4113 = vunpack.c.l.b16 %v3574
  %v4114 = vunpack.c.h.b16 %v3574
  %v4115 = vunpack.c.l.b16 %v3575
  %v4116 = vunpack.c.h.b16 %v3575
  %v4117 = vunpack.c.l.b16 %v3576
  %v4118 = vunpack.c.h.b16 %v3576
  %v4119 = vunpack.c.l.b16 %v3577
  %v4120 = vunpack.c.l.b16 %v3578
  %v4121 = vunpack.c.h.b16 %v3578
  %v4122 = vunpack.c.l.b16 %v3579
  %v4123 = vunpack.c.h.b16 %v3579
  %v4124 = vunpack.c.l.b16 %v3580
  %v4125 = vunpack.c.h.b16 %v3580
  %v4126 = vunpack.c.l.b16 %v3581
  %v4127 = vunpack.c.l.b16 %v3582
  %v4128 = vunpack.c.h.b16 %v3582
  %v4129 = vunpack.c.l.b16 %v3583
  %v4130 = vunpack.c.h.b16 %v3583
  %v4131 = vunpack.c.l.b16 %v3584
  %v4132 = vunpack.c.h.b16 %v3584
  %v4133 = vunpack.c.l.b16 %v3585
  %v4134 = vunpack.c.l.b16 %v3586
  %v4135 = vunpack.c.h.b16 %v3586
  %v4136 = vunpack.c.l.b16 %v3587
  %v4137 = vunpack.c.h.b16 %v3587
  %v4138 = vunpack.c.l.b16 %v3588
  %v4139 = vunpack.c.h.b16 %v3588
  %v4140 = vunpack.c.l.b16 %v3589
  %v4141 = vunpack.c.l.b16 %v3590
  %v4142 = vunpack.c.h.b16 %v3590
  %v4143 = vunpack.c.l.b16 %v3591
  %v4144 = vunpack.c.h.b16 %v3591
  %v4145 = vunpack.c.l.b16 %v3592
  %v4146 = vunpack.c.h.b16 %v3592
  %v4147 = vunpack.c.l.b16 %v3593
  %v4148 = vunpack.c.l.b16 %v3594
  %v4149 = vunpack.c.h.b16 %v3594
  %v4150 = vunpack.c.l.b16 %v3595
  %v4151 = vunpack.c.h.b16 %v3595
  %v4152 = vunpack.c.l.b16 %v3596
  %v4153 = vunpack.c.h.b16 %v3596
  %v4154 = vunpack.c.l.b16 %v3597
  %v4155 = vunpack.c.l.b16 %v3598
  %v4156 = vunpack.c.h.b16 %v3598
  %v4157 = vunpack.c.l.b16 %v3599
  %v4158 = vunpack.c.h.b16 %v3599
  %v4159 = vunpack.c.l.b16 %v3600
  %v4160 = vunpack.c.h.b16 %v3600
  %v4161 = vunpack.c.l.b16 %v3601
  %v4162 = vunpack.c.l.b16 %v3602
  %v4163 = vunpack.c.h.b16 %v3602
  %v4164 = vunpack.c.l.b16 %v3603
  %v4165 = vunpack.c.h.b16 %v3603
  %v4166 = vunpack.c.l.b16 %v3604
  %v4167 = vunpack.c.h.b16 %v3604
  %v4168 = vunpack.c.l.b16 %v3605
  %v4169 = vunpack.c.l.b16 %v3606
  %v4170 = vunpack.c.h.b16 %v3606
  %v4171 = vunpack.c.l.b16 %v3607
  %v4172 = vunpack.c.h.b16 %v3607
  %v4173 = vunpack.c.l.b16 %v3608
  %v4174 = vunpack.c.h.b16 %v3608
  %v4175 = vunpack.c.l.b16 %v3609
  %v4176 = vunpack.c.l.b16 %v3610
  %v4177 = vunpack.c.h.b16 %v3610
  %v4178 = vunpack.c.l.b16 %v3611
  %v4179 = vunpack.c.h.b16 %v3611
  %v4180 = vunpack.c.l.b16 %v3612
  %v4181 = vunpack.c.h.b16 %v3612
  %v4182 = vunpack.c.l.b16 %v3613
  %v4183 = vunpack.c.l.b16 %v3614
  %v4184 = vunpack.c.h.b16 %v3614
  %v4185 = vunpack.c.l.b16 %v3615
  %v4186 = vunpack.c.h.b16 %v3615
  %v4187 = vunpack.c.l.b16 %v3616
  %v4188 = vunpack.c.h.b16 %v3616
  %v4189 = vunpack.c.l.b16 %v3617
  %v4190 = vunpack.c.l.b16 %v3618
  %v4191 = vunpack.c.h.b16 %v3618
  %v4192 = vunpack.c.l.b16 %v3619
  %v4193 = vunpack.c.h.b16 %v3619
  %v4194 = vunpack.c.l.b16 %v3620
  %v4195 = vunpack.c.h.b16 %v3620
  %v4196 = vunpack.c.l.b16 %v3621
  %v4197 = vunpack.c.l.b16 %v3622
  %v4198 = vunpack.c.h.b16 %v3622
  %v4199 = vunpack.c.l.b16 %v3623
  %v4200 = vunpack.c.h.b16 %v3623
  %v4201 = vunpack.c.l.b16 %v3624
  %v4202 = vunpack.c.h.b16 %v3624
  %v4203 = vunpack.c.l.b16 %v3625
  %v4204 = vunpack.c.l.b16 %v3626
  %v4205 = vunpack.c.h.b16 %v3626
  %v4206 = vunpack.c.l.b16 %v3627
  %v4207 = vunpack.c.h.b16 %v3627
  %v4208 = vunpack.c.l.b16 %v3628
  %v4209 = vunpack.c.h.b16 %v3628
  %v4210 = vunpack.c.l.b16 %v3629
  %v4211 = vunpack.c.l.b16 %v3630
  %v4212 = vunpack.c.h.b16 %v3630
  %v4213 = vunpack.c.l.b16 %v3631
  %v4214 = vunpack.c.h.b16 %v3631
  %v4215 = vunpack.c.l.b16 %v3632
  %v4216 = vunpack.c.h.b16 %v3632
  %v4217 = vunpack.c.l.b16 %v3633
  %v4218 = vunpack.c.l.b16 %v3634
  %v4219 = vunpack.c.h.b16 %v3634
  %v4220 = vunpack.c.l.b16 %v3635
  %v4221 = vunpack.c.h.b16 %v3635
  %v4222 = vunpack.c.l.b16 %v3636
  %v4223 = vunpack.c.h.b16 %v3636
  %v4224 = vunpack.c.l.b16 %v3637
  %v4225 = vunpack.c.l.b16 %v3638
  %v4226 = vunpack.c.h.b16 %v3638
  %v4227 = vunpack.c.l.b16 %v3639
  %v4228 = vunpack.c.h.b16 %v3639
  %v4229 = vunpack.c.l.b16 %v3640
  %v4230 = vunpack.c.h.b16 %v3640
  %v4231 = vunpack.c.l.b16 %v3641
  %v4232 = vunpack.c.l.b16 %v3642
  %v4233 = vunpack.c.h.b16 %v3642
  %v4234 = vunpack.c.l.b16 %v3643
  %v4235 = vunpack.c.h.b16 %v3643
  %v4236 = vunpack.c.l.b16 %v3644
  %v4237 = vunpack.c.h.b16 %v3644
  %v4238 = vunpack.c.l.b16 %v3645
  %v4239 = vunpack.c.l.b16 %v3646
  %v4240 = vunpack.c.h.b16 %v3646
  %v4241 = vunpack.c.l.b16 %v3647
  %v4242 = vunpack.c.h.b16 %v3647
  %v4243 = vunpack.c.l.b16 %v3648
  %v4244 = vunpack.c.h.b16 %v3648
  %v4245 = vunpack.c.l.b16 %v3649
  %v4246 = vunpack.c.l.b16 %v3650
  %v4247 = vunpack.c.h.b16 %v3650
  %v4248 = vunpack.c.l.b16 %v3651
  %v4249 = vunpack.c.h.b16 %v3651
  %v4250 = vunpack.c.l.b16 %v3652
  %v4251 = vunpack.c.h.b16 %v3652
  %v4252 = vunpack.c.l.b16 %v3653
  %v4253 = vunpack.c.l.b16 %v3654
  %v4254 = vunpack.c.h.b16 %v3654
  %v4255 = vunpack.c.l.b16 %v3655
  %v4256 = vunpack.c.h.b16 %v3655
  %v4257 = vunpack.c.l.b16 %v3656
  %v4258 = vunpack.c.h.b16 %v3656
  %v4259 = vunpack.c.l.b16 %v3657
  %v4260 = vunpack.c.l.b16 %v3658
  %v4261 = vunpack.c.h.b16 %v3658
  %v4262 = vunpack.c.l.b16 %v3659
  %v4263 = vunpack.c.h.b16 %v3659
  %v4264 = vunpack.c.l.b16 %v3660
  %v4265 = vunpack.c.h.b16 %v3660
  %v4266 = vunpack.c.l.b16 %v3661
  %v4267 = vunpack.c.l.b16 %v3662
  %v4268 = vunpack.c.h.b16 %v3662
  %v4269 = vunpack.c.l.b16 %v3663
  %v4270 = vunpack.c.h.b16 %v3663
  %v4271 = vunpack.c.l.b16 %v3664
  %v4272 = vunpack.c.h.b16 %v3664
  %v4273 = vunpack.c.l.b16 %v3665
  %v4274 = vunpack.c.l.b16 %v3666
  %v4275 = vunpack.c.h.b16 %v3666
  %v4276 = vunpack.c.l.b16 %v3667
  %v4277 = vunpack.c.h.b16 %v3667
  %v4278 = vunpack.c.l.b16 %v3668
  %v4279 = vunpack.c.h.b16 %v3668
  %v4280 = vunpack.c.l.b16 %v3669
  %v4281 = vunpack.c.l.b16 %v3670
  %v4282 = vunpack.c.h.b16 %v3670
  %v4283 = vunpack.c.l.b16 %v3671
  %v4284 = vunpack.c.h.b16 %v3671
  %v4285 = vunpack.c.l.b16 %v3672
  %v4286 = vunpack.c.h.b16 %v3672
  %v4287 = vunpack.c.l.b16 %v3673
  %v4288 = vunpack.c.l.b16 %v3674
  %v4289 = vunpack.c.h.b16 %v3674
  %v4290 = vunpack.c.l.b16 %v3675
  %v4291 = vunpack.c.h.b16 %v3675
  %v4292 = vunpack.c.l.b16 %v3676
  %v4293 = vunpack.c.h.b16 %v3676
  %v4294 = vunpack.c.l.b16 %v3677
  %v4295 = vunpack.c.l.b16 %v3678
  %v4296 = vunpack.c.h.b16 %v3678
  %v4297 = vunpack.c.l.b16 %v3679
  %v4298 = vunpack.c.h.b16 %v3679
  %v4299 = vunpack.c.l.b16 %v3680
  %v4300 = vunpack.c.h.b16 %v3680
  %v4301 = vunpack.c.l.b16 %v3681
  %v4302 = vunpack.c.l.b16 %v3682
  %v4303 = vunpack.c.h.b16 %v3682
  %v4304 = vunpack.c.l.b16 %v3683
  %v4305 = vunpack.c.h.b16 %v3683
  %v4306 = vunpack.c.l.b16 %v3684
  %v4307 = vunpack.c.h.b16 %v3684
  %v4308 = vunpack.c.l.b16 %v3685
  %v4309 = vunpack.c.l.b16 %v3686
  %v4310 = vunpack.c.h.b16 %v3686
  %v4311 = vunpack.c.l.b16 %v3687
  %v4312 = vunpack.c.h.b16 %v3687
  %v4313 = vunpack.c.l.b16 %v3688
  %v4314 = vunpack.c.h.b16 %v3688
  %v4315 = vunpack.c.l.b16 %v3689
  %v4316 = vunpack.c.l.b16 %v3690
  %v4317 = vunpack.c.h.b16 %v3690
  %v4318 = vunpack.c.l.b16 %v3691
  %v4319 = vunpack.c.h.b16 %v3691
  %v4320 = vunpack.c.l.b16 %v3692
  %v4321 = vunpack.c.h.b16 %v3692
  %v4322 = vunpack.c.l.b16 %v3693
  %v4323 = vunpack.c.l.b16 %v3694
  %v4324 = vunpack.c.h.b16 %v3694
  %v4325 = vunpack.c.l.b16 %v3695
  %v4326 = vunpack.c.h.b16 %v3695
  %v4327 = vunpack.c.l.b16 %v3696
  %v4328 = vunpack.c.h.b16 %v3696
  %v4329 = vunpack.c.l.b16 %v3697
  %v4330 = vunpack.c.l.b16 %v3698
  %v4331 = vunpack.c.h.b16 %v3698
  %v4332 = vunpack.c.l.b16 %v3699
  %v4333 = vunpack.c.h.b16 %v3699
  %v4334 = vunpack.c.l.b16 %v3700
  %v4335 = vunpack.c.h.b16 %v3700
  %v4336 = vunpack.c.l.b16 %v3701
  %v4337 = vunpack.c.l.b16 %v3702
  %v4338 = vunpack.c.h.b16 %v3702
  %v4339 = vunpack.c.l.b16 %v3703
  %v4340 = vunpack.c.h.b16 %v3703
  %v4341 = vunpack.c.l.b16 %v3704
  %v4342 = vunpack.c.h.b16 %v3704
  %v4343 = vunpack.c.l.b16 %v3705
  %v4344 = vunpack.c.l.b16 %v3706
  %v4345 = vunpack.c.h.b16 %v3706
  %v4346 = vunpack.c.l.b16 %v3707
  %v4347 = vunpack.c.h.b16 %v3707
  %v4348 = vunpack.c.l.b16 %v3708
  %v4349 = vunpack.c.h.b16 %v3708
  %v4350 = vunpack.c.l.b16 %v3709
  %v4351 = vunpack.c.l.b16 %v3710
  %v4352 = vunpack.c.h.b16 %v3710
  %v4353 = vunpack.c.l.b16 %v3711
  %v4354 = vunpack.c.h.b16 %v3711
  %v4355 = vunpack.c.l.b16 %v3712
  %v4356 = vunpack.c.h.b16 %v3712
  %v4357 = vunpack.c.l.b16 %v3713
  %v4358 = vunpack.c.l.b16 %v3714
  %v4359 = vunpack.c.h.b16 %v3714
  %v4360 = vunpack.c.l.b16 %v3715
  %v4361 = vunpack.c.h.b16 %v3715
  %v4362 = vunpack.c.l.b16 %v3716
  %v4363 = vunpack.c.h.b16 %v3716
  %v4364 = vunpack.c.l.b16 %v3717
  %v4365 = vunpack.c.l.b16 %v3718
  %v4366 = vunpack.c.h.b16 %v3718
  %v4367 = vunpack.c.l.b16 %v3719
  %v4368 = vunpack.c.h.b16 %v3719
  %v4369 = vunpack.c.l.b16 %v3720
  %v4370 = vunpack.c.h.b16 %v3720
  %v4371 = vunpack.c.l.b16 %v3721
  %v4372 = vunpack.c.l.b16 %v3722
  %v4373 = vunpack.c.h.b16 %v3722
  %v4374 = vunpack.c.l.b16 %v3723
  %v4375 = vunpack.c.h.b16 %v3723
  %v4376 = vunpack.c.l.b16 %v3724
  %v4377 = vunpack.c.h.b16 %v3724
  %v4378 = vunpack.c.l.b16 %v3725
  %v4379 = vunpack.c.l.b16 %v3726
  %v4380 = vunpack.c.h.b16 %v3726
  %v4381 = vunpack.c.l.b16 %v3727
  %v4382 = vunpack.c.h.b16 %v3727
  %v4383 = vunpack.c.l.b16 %v3728
  %v4384 = vunpack.c.h.b16 %v3728
  %v4385 = vunpack.c.l.b16 %v3729
  %v4386 = vunpack.c.l.b16 %v3730
  %v4387 = vunpack.c.h.b16 %v3730
  %v4388 = vunpack.c.l.b16 %v3731
  %v4389 = vunpack.c.h.b16 %v3731
  %v4390 = vunpack.c.l.b16 %v3732
  %v4391 = vunpack.c.h.b16 %v3732
  %v4392 = vunpack.c.l.b16 %v3733
  %v4393 = vunpack.c.l.b16 %v3734
  %v4394 = vunpack.c.h.b16 %v3734
  %v4395 = vunpack.c.l.b16 %v3735
  %v4396 = vunpack.c.h.b16 %v3735
  %v4397 = vunpack.c.l.b16 %v3736
  %v4398 = vunpack.c.h.b16 %v3736
  %v4399 = vunpack.c.l.b16 %v3737
  %v4400 = vunpack.c.l.b16 %v3738
  %v4401 = vunpack.c.h.b16 %v3738
  %v4402 = vunpack.c.l.b16 %v3739
  %v4403 = vunpack.c.h.b16 %v3739
  %v4404 = vunpack.c.l.b16 %v3740
  %v4405 = vunpack.c.h.b16 %v3740
  %v4406 = vunpack.c.l.b16 %v3741
  %v4407 = vunpack.c.l.b16 %v3742
  %v4408 = vunpack.c.h.b16 %v3742
  %v4409 = vunpack.c.l.b16 %v3743
  %v4410 = vunpack.c.h.b16 %v3743
  %v4411 = vunpack.c.l.b16 %v3744
  %v4412 = vunpack.c.h.b16 %v3744
  %v4413 = vunpack.c.l.b16 %v3745
  %v4414 = vunpack.c.l.b16 %v3746
  %v4415 = vunpack.c.h.b16 %v3746
  %v4416 = vunpack.c.l.b16 %v3747
  %v4417 = vunpack.c.h.b16 %v3747
  %v4418 = vunpack.c.l.b16 %v3748
  %v4419 = vunpack.c.h.b16 %v3748
  %v4420 = vunpack.c.l.b16 %v3749
  %v4421 = vunpack.c.l.b16 %v3750
  %v4422 = vunpack.c.h.b16 %v3750
  %v4423 = vunpack.c.l.b16 %v3751
  %v4424 = vunpack.c.h.b16 %v3751
  %v4425 = vunpack.c.l.b16 %v3752
  %v4426 = vunpack.c.h.b16 %v3752
  %v4427 = vunpack.c.l.b16 %v3753
  %v4428 = vunpack.c.l.b16 %v3754
  %v4429 = vunpack.c.h.b16 %v3754
  %v4430 = vunpack.c.l.b16 %v3755
  %v4431 = vunpack.c.h.b16 %v3755
  %v4432 = vunpack.c.l.b16 %v3756
  %v4433 = vunpack.c.h.b16 %v3756
  %v4434 = vunpack.c.l.b16 %v3757
  %v4435 = vunpack.c.l.b16 %v3758
  %v4436 = vunpack.c.h.b16 %v3758
  %v4437 = vunpack.c.l.b16 %v3759
  %v4438 = vunpack.c.h.b16 %v3759
  %v4439 = vunpack.c.l.b16 %v3760
  %v4440 = vunpack.c.h.b16 %v3760
  %v4441 = vunpack.c.l.b16 %v3761
  %v4442 = vunpack.c.l.b16 %v3762
  %v4443 = vunpack.c.h.b16 %v3762
  %v4444 = vunpack.c.l.b16 %v3763
  %v4445 = vunpack.c.h.b16 %v3763
  %v4446 = vunpack.c.l.b16 %v3764
  %v4447 = vunpack.c.h.b16 %v3764
  %v4448 = vunpack.c.l.b16 %v3765
  %v4449 = vunpack.c.l.b16 %v3766
  %v4450 = vunpack.c.h.b16 %v3766
  %v4451 = vunpack.c.l.b16 %v3767
  %v4452 = vunpack.c.h.b16 %v3767
  %v4453 = vunpack.c.l.b16 %v3768
  %v4454 = vunpack.c.h.b16 %v3768
  %v4455 = vunpack.c.l.b16 %v3769
  %v4456 = vunpack.c.l.b16 %v3770
  %v4457 = vunpack.c.h.b16 %v3770
  %v4458 = vunpack.c.l.b16 %v3771
  %v4459 = vunpack.c.h.b16 %v3771
  %v4460 = vunpack.c.l.b16 %v3772
  %v4461 = vunpack.c.h.b16 %v3772
  %v4462 = vunpack.c.l.b16 %v3773
  %v4463 = vunpack.c.l.b16 %v3774
  %v4464 = vunpack.c.h.b16 %v3774
  %v4465 = vunpack.c.l.b16 %v3775
  %v4466 = vunpack.c.h.b16 %v3775
  %v4467 = vunpack.c.l.b16 %v3776
  %v4468 = vunpack.c.h.b16 %v3776
  %v4469 = vunpack.c.l.b16 %v3777
  %v4470 = vunpack.c.l.b16 %v3778
  %v4471 = vunpack.c.h.b16 %v3778
  %v4472 = vunpack.c.l.b16 %v3779
  %v4473 = vunpack.c.h.b16 %v3779
  %v4474 = vunpack.c.l.b16 %v3780
  %v4475 = vunpack.c.h.b16 %v3780
  %v4476 = vunpack.c.l.b16 %v3781
  %v4477 = vunpack.c.l.b16 %v3782
  %v4478 = vunpack.c.h.b16 %v3782
  %v4479 = vunpack.c.l.b16 %v3783
  %v4480 = vunpack.c.h.b16 %v3783
  %v4481 = vunpack.c.l.b16 %v3784
  %v4482 = vunpack.c.h.b16 %v3784
  %v4483 = vunpack.c.l.b16 %v3785
  %v4484 = vunpack.c.l.b16 %v3786
  %v4485 = vunpack.c.h.b16 %v3786
  %v4486 = vunpack.c.l.b16 %v3787
  %v4487 = vunpack.c.h.b16 %v3787
  %v4488 = vunpack.c.l.b16 %v3788
  %v4489 = vunpack.c.h.b16 %v3788
  %v4490 = vunpack.c.l.b16 %v3789
  %v4491 = vunpack.c.l.b16 %v3790
  %v4492 = vunpack.c.h.b16 %v3790
  %v4493 = vunpack.c.l.b16 %v3791
  %v4494 = vunpack.c.h.b16 %v3791
  %v4495 = vunpack.c.l.b16 %v3792
  %v4496 = vunpack.c.h.b16 %v3792
  %v4497 = vunpack.c.l.b16 %v3793
  %v4498 = vunpack.c.l.b16 %v3794
  %v4499 = vunpack.c.h.b16 %v3794
  %v4500 = vunpack.c.l.b16 %v3795
  %v4501 = vunpack.c.h.b16 %v3795
  %v4502 = vunpack.c.l.b16 %v3796
  %v4503 = vunpack.c.h.b16 %v3796
  %v4504 = vunpack.c.l.b16 %v3797
  %v4505 = vunpack.c.l.b16 %v3798
  %v4506 = vunpack.c.h.b16 %v3798
  %v4507 = vunpack.c.l.b16 %v3799
  %v4508 = vunpack.c.h.b16 %v3799
  %v4509 = vunpack.c.l.b16 %v3800
  %v4510 = vunpack.c.h.b16 %v3800
  %v4511 = vunpack.c.l.b16 %v3801
  %v4512 = vunpack.c.l.b16 %v3802
  %v4513 = vunpack.c.h.b16 %v3802
  %v4514 = vunpack.c.l.b16 %v3803
  %v4515 = vunpack.c.h.b16 %v3803
  %v4516 = vunpack.c.l.b16 %v3804
  %v4517 = vunpack.c.h.b16 %v3804
  %v4518 = vunpack.c.l.b16 %v3805
  %v4519 = vunpack.c.l.b16 %v3806
  %v4520 = vunpack.c.h.b16 %v3806
  %v4521 = vunpack.c.l.b16 %v3807
  %v4522 = vunpack.c.h.b16 %v3807
  %v4523 = vunpack.c.l.b16 %v3808
  %v4524 = vunpack.c.h.b16 %v3808
  %v4525 = vunpack.c.l.b16 %v3809
  %v4526 = vunpack.c.l.b16 %v3810
  %v4527 = vunpack.c.h.b16 %v3810
  %v4528 = vunpack.c.l.b16 %v3811
  %v4529 = vunpack.c.h.b16 %v3811
  %v4530 = vunpack.c.l.b16 %v3812
  %v4531 = vunpack.c.h.b16 %v3812
  %v4532 = vunpack.c.l.b16 %v3813
  %v4533 = vpack.c.b16 %v4106, %v4099
  %v4534 = vpack.c.b16 %v4107, %v4100
  %v4535 = vpack.c.b16 %v4108, %v4101
  %v4536 = vpack.c.b16 %v4109, %v4102
  %v4537 = vpack.c.b16 %v4110, %v4103
  %v4538 = vpack.c.b16 %v4111, %v4104
  %v4539 = vpack.c.b16 %v4112, %v4105
  %v4540 = vpack.c.b16 %v4120, %v4113
  %v4541 = vpack.c.b16 %v4121, %v4114
  %v4542 = vpack.c.b16 %v4122, %v4115
  %v4543 = vpack.c.b16 %v4123, %v4116
  %v4544 = vpack.c.b16 %v4124, %v4117
  %v4545 = vpack.c.b16 %v4125, %v4118
  %v4546 = vpack.c.b16 %v4126, %v4119
  %v4547 = vpack.c.b16 %v4134, %v4127
  %v4548 = vpack.c.b16 %v4135, %v4128
  %v4549 = vpack.c.b16 %v4136, %v4129
  %v4550 = vpack.c.b16 %v4137, %v4130
  %v4551 = vpack.c.b16 %v4138, %v4131
  %v4552 = vpack.c.b16 %v4139, %v4132
  %v4553 = vpack.c.b16 %v4140, %v4133
  %v4554 = vpack.c.b16 %v4148, %v4141
  %v4555 = vpack.c.b16 %v4149, %v4142
  %v4556 = vpack.c.b16 %v4150, %v4143
  %v4557 = vpack.c.b16 %v4151, %v4144
  %v4558 = vpack.c.b16 %v4152, %v4145
  %v4559 = vpack.c.b16 %v4153, %v4146
  %v4560 = vpack.c.b16 %v4154, %v4147
  %v4561 = vpack.c.b16 %v4162, %v4155
  %v4562 = vpack.c.b16 %v4163, %v4156
  %v4563 = vpack.c.b16 %v4164, %v4157
  %v4564 = vpack.c.b16 %v4165, %v4158
  %v4565 = vpack.c.b16 %v4166, %v4159
  %v4566 = vpack.c.b16 %v4167, %v4160
  %v4567 = vpack.c.b16 %v4168, %v4161
  %v4568 = vpack.c.b16 %v4176, %v4169
  %v4569 = vpack.c.b16 %v4177, %v4170
  %v4570 = vpack.c.b16 %v4178, %v4171
  %v4571 = vpack.c.b16 %v4179, %v4172
  %v4572 = vpack.c.b16 %v4180, %v4173
  %v4573 = vpack.c.b16 %v4181, %v4174
  %v4574 = vpack.c.b16 %v4182, %v4175
  %v4575 = vpack.c.b16 %v4190, %v4183
  %v4576 = vpack.c.b16 %v4191, %v4184
  %v4577 = vpack.c.b16 %v4192, %v4185
  %v4578 = vpack.c.b16 %v4193, %v4186
  %v4579 = vpack.c.b16 %v4194, %v4187
  %v4580 = vpack.c.b16 %v4195, %v4188
  %v4581 = vpack.c.b16 %v4196, %v4189
  %v4582 = vpack.c.b16 %v4204, %v4197
  %v4583 = vpack.c.b16 %v4205, %v4198
  %v4584 = vpack.c.b16 %v4206, %v4199
  %v4585 = vpack.c.b16 %v4207, %v4200
  %v4586 = vpack.c.b16 %v4208, %v4201
  %v4587 = vpack.c.b16 %v4209, %v4202
  %v4588 = vpack.c.b16 %v4210, %v4203
  %v4589 = vpack.c.b16 %v4218, %v4211
  %v4590 = vpack.c.b16 %v4219, %v4212
  %v4591 = vpack.c.b16 %v4220, %v4213
  %v4592 = vpack.c.b16 %v4221, %v4214
  %v4593 = vpack.c.b16 %v4222, %v4215
  %v4594 = vpack.c.b16 %v4223, %v4216
  %v4595 = vpack.c.b16 %v4224, %v4217
  %v4596 = vpack.c.b16 %v4232, %v4225
  %v4597 = vpack.c.b16 %v4233, %v4226
  %v4598 = vpack.c.b16 %v4234, %v4227
  %v4599 = vpack.c.b16 %v4235, %v4228
  %v4600 = vpack.c.b16 %v4236, %v4229
  %v4601 = vpack.c.b16 %v4237, %v4230
  %v4602 = vpack.c.b16 %v4238, %v4231
  %v4603 = vpack.c.b16 %v4246, %v4239
  %v4604 = vpack.c.b16 %v4247, %v4240
  %v4605 = vpack.c.b16 %v4248, %v4241
  %v4606 = vpack.c.b16 %v4249, %v4242
  %v4607 = vpack.c.b16 %v4250, %v4243
  %v4608 = vpack.c.b16 %v4251, %v4244
  %v4609 = vpack.c.b16 %v4252, %v4245
  %v4610 = vpack.c.b16 %v4260, %v4253
  %v4611 = vpack.c.b16 %v4261, %v4254
  %v4612 = vpack.c.b16 %v4262, %v4255
  %v4613 = vpack.c.b16 %v4263, %v4256
  %v4614 = vpack.c.b16 %v4264, %v4257
  %v4615 = vpack.c.b16 %v4265, %v4258
  %v4616 = vpack.c.b16 %v4266, %v4259
  %v4617 = vpack.c.b16 %v4274, %v4267
  %v4618 = vpack.c.b16 %v4275, %v4268
  %v4619 = vpack.c.b16 %v4276, %v4269
  %v4620 = vpack.c.b16 %v4277, %v4270
  %v4621 = vpack.c.b16 %v4278, %v4271
  %v4622 = vpack.c.b16 %v4279, %v4272
  %v4623 = vpack.c.b16 %v4280, %v4273
  %v4624 = vpack.c.b16 %v4288, %v4281
  %v4625 = vpack.c.b16 %v4289, %v4282
  %v4626 = vpack.c.b16 %v4290, %v4283
  %v4627 = vpack.c.b16 %v4291, %v4284
  %v4628 = vpack.c.b16 %v4292, %v4285
  %v4629 = vpack.c.b16 %v4293, %v4286
  %v4630 = vpack.c.b16 %v4294, %v4287
  %v4631 = vpack.c.b16 %v4302, %v4295
  %v4632 = vpack.c.b16 %v4303, %v4296
  %v4633 = vpack.c.b16 %v4304, %v4297
  %v4634 = vpack.c.b16 %v4305, %v4298
  %v4635 = vpack.c.b16 %v4306, %v4299
  %v4636 = vpack.c.b16 %v4307, %v4300
  %v4637 = vpack.c.b16 %v4308, %v4301
  %v4638 = vpack.c.b16 %v4316, %v4309
  %v4639 = vpack.c.b16 %v4317, %v4310
  %v4640 = vpack.c.b16 %v4318, %v4311
  %v4641 = vpack.c.b16 %v4319, %v4312
  %v4642 = vpack.c.b16 %v4320, %v4313
  %v4643 = vpack.c.b16 %v4321, %v4314
  %v4644 = vpack.c.b16 %v4322, %v4315
  %v4645 = vpack.c.b16 %v4330, %v4323
  %v4646 = vpack.c.b16 %v4331, %v4324
  %v4647 = vpack.c.b16 %v4332, %v4325
  %v4648 = vpack.c.b16 %v4333, %v4326
  %v4649 = vpack.c.b16 %v4334, %v4327
  %v4650 = vpack.c.b16 %v4335, %v4328
  %v4651 = vpack.c.b16 %v4336, %v4329
  %v4652 = vpack.c.b16 %v4344, %v4337
  %v4653 = vpack.c.b16 %v4345, %v4338
  %v4654 = vpack.c.b16 %v4346, %v4339
  %v4655 = vpack.c.b16 %v4347, %v4340
  %v4656 = vpack.c.b16 %v4348, %v4341
  %v4657 = vpack.c.b16 %v4349, %v4342
  %v4658 = vpack.c.b16 %v4350, %v4343
  %v4659 = vpack.c.b16 %v4358, %v4351
  %v4660 = vpack.c.b16 %v4359, %v4352
  %v4661 = vpack.c.b16 %v4360, %v4353
  %v4662 = vpack.c.b16 %v4361, %v4354
  %v4663 = vpack.c.b16 %v4362, %v4355
  %v4664 = vpack.c.b16 %v4363, %v4356
  %v4665 = vpack.c.b16 %v4364, %v4357
  %v4666 = vpack.c.b16 %v4372, %v4365
  %v4667 = vpack.c.b16 %v4373, %v4366
  %v4668 = vpack.c.b16 %v4374, %v4367
  %v4669 = vpack.c.b16 %v4375, %v4368
  %v4670 = vpack.c.b16 %v4376, %v4369
  %v4671 = vpack.c.b16 %v4377, %v4370
  %v4672 = vpack.c.b16 %v4378, %v4371
  %v4673 = vpack.c.b16 %v4386, %v4379
  %v4674 = vpack.c.b16 %v4387, %v4380
  %v4675 = vpack.c.b16 %v4388, %v4381
  %v4676 = vpack.c.b16 %v4389, %v4382
  %v4677 = vpack.c.b16 %v4390, %v4383
  %v4678 = vpack.c.b16 %v4391, %v4384
  %v4679 = vpack.c.b16 %v4392, %v4385
  %v4680 = vpack.c.b16 %v4400, %v4393
  %v4681 = vpack.c.b16 %v4401, %v4394
  %v4682 = vpack.c.b16 %v4402, %v4395
  %v4683 = vpack.c.b16 %v4403, %v4396
  %v4684 = vpack.c.b16 %v4404, %v4397
  %v4685 = vpack.c.b16 %v4405, %v4398
  %v4686 = vpack.c.b16 %v4406, %v4399
  %v4687 = vpack.c.b16 %v4414, %v4407
  %v4688 = vpack.c.b16 %v4415, %v4408
  %v4689 = vpack.c.b16 %v4416, %v4409
  %v4690 = vpack.c.b16 %v4417, %v4410
  %v4691 = vpack.c.b16 %v4418, %v4411
  %v4692 = vpack.c.b16 %v4419, %v4412
  %v4693 = vpack.c.b16 %v4420, %v4413
  %v4694 = vpack.c.b16 %v4428, %v4421
  %v4695 = vpack.c.b16 %v4429, %v4422
  %v4696 = vpack.c.b16 %v4430, %v4423
  %v4697 = vpack.c.b16 %v4431, %v4424
  %v4698 = vpack.c.b16 %v4432, %v4425
  %v4699 = vpack.c.b16 %v4433, %v4426
  %v4700 = vpack.c.b16 %v4434, %v4427
  %v4701 = vpack.c.b16 %v4442, %v4435
  %v4702 = vpack.c.b16 %v4443, %v4436
  %v4703 = vpack.c.b16 %v4444, %v4437
  %v4704 = vpack.c.b16 %v4445, %v4438
  %v4705 = vpack.c.b16 %v4446, %v4439
  %v4706 = vpack.c.b16 %v4447, %v4440
  %v4707 = vpack.c.b16 %v4448, %v4441
  %v4708 = vpack.c.b16 %v4456, %v4449
  %v4709 = vpack.c.b16 %v4457, %v4450
  %v4710 = vpack.c.b16 %v4458, %v4451
  %v4711 = vpack.c.b16 %v4459, %v4452
  %v4712 = vpack.c.b16 %v4460, %v4453
  %v4713 = vpack.c.b16 %v4461, %v4454
  %v4714 = vpack.c.b16 %v4462, %v4455
  %v4715 = vpack.c.b16 %v4470, %v4463
  %v4716 = vpack.c.b16 %v4471, %v4464
  %v4717 = vpack.c.b16 %v4472, %v4465
  %v4718 = vpack.c.b16 %v4473, %v4466
  %v4719 = vpack.c.b16 %v4474, %v4467
  %v4720 = vpack.c.b16 %v4475, %v4468
  %v4721 = vpack.c.b16 %v4476, %v4469
  %v4722 = vpack.c.b16 %v4484, %v4477
  %v4723 = vpack.c.b16 %v4485, %v4478
  %v4724 = vpack.c.b16 %v4486, %v4479
  %v4725 = vpack.c.b16 %v4487, %v4480
  %v4726 = vpack.c.b16 %v4488, %v4481
  %v4727 = vpack.c.b16 %v4489, %v4482
  %v4728 = vpack.c.b16 %v4490, %v4483
  %v4729 = vpack.c.b16 %v4498, %v4491
  %v4730 = vpack.c.b16 %v4499, %v4492
  %v4731 = vpack.c.b16 %v4500, %v4493
  %v4732 = vpack.c.b16 %v4501, %v4494
  %v4733 = vpack.c.b16 %v4502, %v4495
  %v4734 = vpack.c.b16 %v4503, %v4496
  %v4735 = vpack.c.b16 %v4504, %v4497
  %v4736 = vpack.c.b16 %v4512, %v4505
  %v4737 = vpack.c.b16 %v4513, %v4506
  %v4738 = vpack.c.b16 %v4514, %v4507
  %v4739 = vpack.c.b16 %v4515, %v4508
  %v4740 = vpack.c.b16 %v4516, %v4509
  %v4741 = vpack.c.b16 %v4517, %v4510
  %v4742 = vpack.c.b16 %v4518, %v4511
  %v4743 = vpack.c.b16 %v4526, %v4519
  %v4744 = vpack.c.b16 %v4527, %v4520
  %v4745 = vpack.c.b16 %v4528, %v4521
  %v4746 = vpack.c.b16 %v4529, %v4522
  %v4747 = vpack.c.b16 %v4530, %v4523
  %v4748 = vpack.c.b16 %v4531, %v4524
  %v4749 = vpack.c.b16 %v4532, %v4525
  %v4961 = vsel %vm3158, %v3565, 0
  %v4964 = vsel %vm3162, %v4743, 0
  %v4967 = vsel %vm3162, %v4744, 0
  %v4970 = vsel %vm3162, %v4745, 0
  %v4973 = vsel %vm3162, %v4746, 0
  %v4976 = vsel %vm3162, %v4747, 0
  %v4979 = vsel %vm3162, %v4748, 0
  %v4982 = vsel %vm3162, %v4749, 0
  %4984 = vmatprep.subr.bf16.mxu0 %v4534
  %4985 = vmatpush1.bf16.msra.mxu0 %v4533
  %4986 = vmatprep.subr.bf16.mxu0 %v4541
  %4987 = vmatpush1.bf16.msra.mxu0 %v4540
  %4988 = vmatprep.subr.bf16.mxu0 %v4548
  %4989 = vmatpush1.bf16.msra.mxu0 %v4547
  %4990 = vmatprep.subr.bf16.mxu0 %v4555
  %4991 = vmatpush1.bf16.msra.mxu0 %v4554
  %4992 = vmatprep.subr.bf16.mxu0 %v4562
  %4993 = vmatpush1.bf16.msra.mxu0 %v4561
  %4994 = vmatprep.subr.bf16.mxu0 %v4569
  %4995 = vmatpush1.bf16.msra.mxu0 %v4568
  %4996 = vmatprep.subr.bf16.mxu0 %v4576
  %4997 = vmatpush1.bf16.msra.mxu0 %v4575
  %4998 = vmatprep.subr.bf16.mxu0 %v4583
  %4999 = vmatpush1.bf16.msra.mxu0 %v4582
  %5000 = vmatprep.subr.bf16.mxu0 %v4590
  %5001 = vmatpush1.bf16.msra.mxu0 %v4589
  %5002 = vmatprep.subr.bf16.mxu0 %v4597
  %5003 = vmatpush1.bf16.msra.mxu0 %v4596
  %5004 = vmatprep.subr.bf16.mxu0 %v4604
  %5005 = vmatpush1.bf16.msra.mxu0 %v4603
  %5006 = vmatprep.subr.bf16.mxu0 %v4611
  %5007 = vmatpush1.bf16.msra.mxu0 %v4610
  %5008 = vmatprep.subr.bf16.mxu0 %v4618
  %5009 = vmatpush1.bf16.msra.mxu0 %v4617
  %5010 = vmatprep.subr.bf16.mxu0 %v4625
  %5011 = vmatpush1.bf16.msra.mxu0 %v4624
  %5012 = vmatprep.subr.bf16.mxu0 %v4632
  %5013 = vmatpush1.bf16.msra.mxu0 %v4631
  %5014 = vmatprep.subr.bf16.mxu0 %v4639
  %5015 = vmatpush1.bf16.msra.mxu0 %v4638
  %5016 = vmatprep.mubr.bf16.mxu0 %v3563
  %5017 = vmatmul.mubr.bf16.gmra.mrb[0].mxu0 %v3562
  %v5018 = vpop.f32.mrb[0].mxu0
  %v5019 = vadd.f32 %v3819, %v5018
  %v5020 = vpop.f32.mrb[0].mxu0
  %v5021 = vadd.f32 %v3823, %v5020
  %v5022 = vpop.f32.mrb[0].mxu0
  %v5023 = vadd.f32 %v3819, %v5022
  %v5024 = vpop.f32.mrb[0].mxu0
  %v5025 = vadd.f32 %v3823, %v5024
  %5026 = vdwg.mxu0
  %5027 = vmatprep.subr.bf16.mxu0 %v4646
  %5028 = vmatpush1.bf16.msra.mxu0 %v4645
  %5029 = vmatprep.subr.bf16.mxu0 %v4653
  %5030 = vmatpush1.bf16.msra.mxu0 %v4652
  %5031 = vmatprep.subr.bf16.mxu0 %v4660
  %5032 = vmatpush1.bf16.msra.mxu0 %v4659
  %5033 = vmatprep.subr.bf16.mxu0 %v4667
  %5034 = vmatpush1.bf16.msra.mxu0 %v4666
  %5035 = vmatprep.subr.bf16.mxu0 %v4674
  %5036 = vmatpush1.bf16.msra.mxu0 %v4673
  %5037 = vmatprep.subr.bf16.mxu0 %v4681
  %5038 = vmatpush1.bf16.msra.mxu0 %v4680
  %5039 = vmatprep.subr.bf16.mxu0 %v4688
  %5040 = vmatpush1.bf16.msra.mxu0 %v4687
  %5041 = vmatprep.subr.bf16.mxu0 %v4695
  %5042 = vmatpush1.bf16.msra.mxu0 %v4694
  %5043 = vmatprep.subr.bf16.mxu0 %v4702
  %5044 = vmatpush1.bf16.msra.mxu0 %v4701
  %5045 = vmatprep.subr.bf16.mxu0 %v4709
  %5046 = vmatpush1.bf16.msra.mxu0 %v4708
  %5047 = vmatprep.subr.bf16.mxu0 %v4716
  %5048 = vmatpush1.bf16.msra.mxu0 %v4715
  %5049 = vmatprep.subr.bf16.mxu0 %v4723
  %5050 = vmatpush1.bf16.msra.mxu0 %v4722
  %5051 = vmatprep.subr.bf16.mxu0 %v4730
  %5052 = vmatpush1.bf16.msra.mxu0 %v4729
  %5053 = vmatprep.subr.bf16.mxu0 %v4737
  %5054 = vmatpush1.bf16.msra.mxu0 %v4736
  %5055 = vmatprep.subr.bf16.mxu0 %v4967
  %5056 = vmatpush1.bf16.msra.mxu0 %v4964
  %5057 = vmatprep.subr.bf16.mxu0 0
  %5058 = vmatpush1.bf16.msra.mxu0 0
  %5059 = vmatprep.mubr.bf16.mxu0 %v4961
  %5060 = vmatmul.mubr.bf16.gmra.mrb[0].mxu0 %v3564
  %v5061 = vpop.f32.mrb[0].mxu0
  %v5062 = vadd.f32 %v5019, %v5061
  %v5063 = vpop.f32.mrb[0].mxu0
  %v5064 = vadd.f32 %v5021, %v5063
  %v5065 = vpop.f32.mrb[0].mxu0
  %v5066 = vadd.f32 %v5023, %v5065
  %v5067 = vpop.f32.mrb[0].mxu0
  %v5068 = vadd.f32 %v5025, %v5067
  %5069 = vdwg.mxu0
  %5070 = vmatprep.subr.bf16.mxu0 %v4536
  %5071 = vmatpush1.bf16.msra.mxu0 %v4535
  %5072 = vmatprep.subr.bf16.mxu0 %v4543
  %5073 = vmatpush1.bf16.msra.mxu0 %v4542
  %5074 = vmatprep.subr.bf16.mxu0 %v4550
  %5075 = vmatpush1.bf16.msra.mxu0 %v4549
  %5076 = vmatprep.subr.bf16.mxu0 %v4557
  %5077 = vmatpush1.bf16.msra.mxu0 %v4556
  %5078 = vmatprep.subr.bf16.mxu0 %v4564
  %5079 = vmatpush1.bf16.msra.mxu0 %v4563
  %5080 = vmatprep.subr.bf16.mxu0 %v4571
  %5081 = vmatpush1.bf16.msra.mxu0 %v4570
  %5082 = vmatprep.subr.bf16.mxu0 %v4578
  %5083 = vmatpush1.bf16.msra.mxu0 %v4577
  %5084 = vmatprep.subr.bf16.mxu0 %v4585
  %5085 = vmatpush1.bf16.msra.mxu0 %v4584
  %5086 = vmatprep.subr.bf16.mxu0 %v4592
  %5087 = vmatpush1.bf16.msra.mxu0 %v4591
  %5088 = vmatprep.subr.bf16.mxu0 %v4599
  %5089 = vmatpush1.bf16.msra.mxu0 %v4598
  %5090 = vmatprep.subr.bf16.mxu0 %v4606
  %5091 = vmatpush1.bf16.msra.mxu0 %v4605
  %5092 = vmatprep.subr.bf16.mxu0 %v4613
  %5093 = vmatpush1.bf16.msra.mxu0 %v4612
  %5094 = vmatprep.subr.bf16.mxu0 %v4620
  %5095 = vmatpush1.bf16.msra.mxu0 %v4619
  %5096 = vmatprep.subr.bf16.mxu0 %v4627
  %5097 = vmatpush1.bf16.msra.mxu0 %v4626
  %5098 = vmatprep.subr.bf16.mxu0 %v4634
  %5099 = vmatpush1.bf16.msra.mxu0 %v4633
  %5100 = vmatprep.subr.bf16.mxu0 %v4641
  %5101 = vmatpush1.bf16.msra.mxu0 %v4640
  %5102 = vmatprep.mubr.bf16.mxu0 %v3563
  %5103 = vmatmul.mubr.bf16.gmra.mrb[0].mxu0 %v3562
  %v5104 = vpop.f32.mrb[0].mxu0
  %v5105 = vadd.f32 %v3827, %v5104
  %v5106 = vpop.f32.mrb[0].mxu0
  %v5107 = vadd.f32 %v3831, %v5106
  %v5108 = vpop.f32.mrb[0].mxu0
  %v5109 = vadd.f32 %v3827, %v5108
  %v5110 = vpop.f32.mrb[0].mxu0
  %v5111 = vadd.f32 %v3831, %v5110
  %5112 = vdwg.mxu0
  %5113 = vmatprep.subr.bf16.mxu0 %v4648
  %5114 = vmatpush1.bf16.msra.mxu0 %v4647
  %5115 = vmatprep.subr.bf16.mxu0 %v4655
  %5116 = vmatpush1.bf16.msra.mxu0 %v4654
  %5117 = vmatprep.subr.bf16.mxu0 %v4662
  %5118 = vmatpush1.bf16.msra.mxu0 %v4661
  %5119 = vmatprep.subr.bf16.mxu0 %v4669
  %5120 = vmatpush1.bf16.msra.mxu0 %v4668
  %5121 = vmatprep.subr.bf16.mxu0 %v4676
  %5122 = vmatpush1.bf16.msra.mxu0 %v4675
  %5123 = vmatprep.subr.bf16.mxu0 %v4683
  %5124 = vmatpush1.bf16.msra.mxu0 %v4682
  %5125 = vmatprep.subr.bf16.mxu0 %v4690
  %5126 = vmatpush1.bf16.msra.mxu0 %v4689
  %5127 = vmatprep.subr.bf16.mxu0 %v4697
  %5128 = vmatpush1.bf16.msra.mxu0 %v4696
  %5129 = vmatprep.subr.bf16.mxu0 %v4704
  %5130 = vmatpush1.bf16.msra.mxu0 %v4703
  %5131 = vmatprep.subr.bf16.mxu0 %v4711
  %5132 = vmatpush1.bf16.msra.mxu0 %v4710
  %5133 = vmatprep.subr.bf16.mxu0 %v4718
  %5134 = vmatpush1.bf16.msra.mxu0 %v4717
  %5135 = vmatprep.subr.bf16.mxu0 %v4725
  %5136 = vmatpush1.bf16.msra.mxu0 %v4724
  %5137 = vmatprep.subr.bf16.mxu0 %v4732
  %5138 = vmatpush1.bf16.msra.mxu0 %v4731
  %5139 = vmatprep.subr.bf16.mxu0 %v4739
  %5140 = vmatpush1.bf16.msra.mxu0 %v4738
  %5141 = vmatprep.subr.bf16.mxu0 %v4973
  %5142 = vmatpush1.bf16.msra.mxu0 %v4970
  %5143 = vmatprep.subr.bf16.mxu0 0
  %5144 = vmatpush1.bf16.msra.mxu0 0
  %5145 = vmatprep.mubr.bf16.mxu0 %v4961
  %5146 = vmatmul.mubr.bf16.gmra.mrb[0].mxu0 %v3564
  %v5147 = vpop.f32.mrb[0].mxu0
  %v5148 = vadd.f32 %v5105, %v5147
  %v5149 = vpop.f32.mrb[0].mxu0
  %v5150 = vadd.f32 %v5107, %v5149
  %v5151 = vpop.f32.mrb[0].mxu0
  %v5152 = vadd.f32 %v5109, %v5151
  %v5153 = vpop.f32.mrb[0].mxu0
  %v5154 = vadd.f32 %v5111, %v5153
  %5155 = vdwg.mxu0
  %5156 = vmatprep.subr.bf16.mxu0 %v4538
  %5157 = vmatpush1.bf16.msra.mxu0 %v4537
  %5158 = vmatprep.subr.bf16.mxu0 %v4545
  %5159 = vmatpush1.bf16.msra.mxu0 %v4544
  %5160 = vmatprep.subr.bf16.mxu0 %v4552
  %5161 = vmatpush1.bf16.msra.mxu0 %v4551
  %5162 = vmatprep.subr.bf16.mxu0 %v4559
  %5163 = vmatpush1.bf16.msra.mxu0 %v4558
  %5164 = vmatprep.subr.bf16.mxu0 %v4566
  %5165 = vmatpush1.bf16.msra.mxu0 %v4565
  %5166 = vmatprep.subr.bf16.mxu0 %v4573
  %5167 = vmatpush1.bf16.msra.mxu0 %v4572
  %5168 = vmatprep.subr.bf16.mxu0 %v4580
  %5169 = vmatpush1.bf16.msra.mxu0 %v4579
  %5170 = vmatprep.subr.bf16.mxu0 %v4587
  %5171 = vmatpush1.bf16.msra.mxu0 %v4586
  %5172 = vmatprep.subr.bf16.mxu0 %v4594
  %5173 = vmatpush1.bf16.msra.mxu0 %v4593
  %5174 = vmatprep.subr.bf16.mxu0 %v4601
  %5175 = vmatpush1.bf16.msra.mxu0 %v4600
  %5176 = vmatprep.subr.bf16.mxu0 %v4608
  %5177 = vmatpush1.bf16.msra.mxu0 %v4607
  %5178 = vmatprep.subr.bf16.mxu0 %v4615
  %5179 = vmatpush1.bf16.msra.mxu0 %v4614
  %5180 = vmatprep.subr.bf16.mxu0 %v4622
  %5181 = vmatpush1.bf16.msra.mxu0 %v4621
  %5182 = vmatprep.subr.bf16.mxu0 %v4629
  %5183 = vmatpush1.bf16.msra.mxu0 %v4628
  %5184 = vmatprep.subr.bf16.mxu0 %v4636
  %5185 = vmatpush1.bf16.msra.mxu0 %v4635
  %5186 = vmatprep.subr.bf16.mxu0 %v4643
  %5187 = vmatpush1.bf16.msra.mxu0 %v4642
  %5188 = vmatprep.mubr.bf16.mxu0 %v3563
  %5189 = vmatmul.mubr.bf16.gmra.mrb[0].mxu0 %v3562
  %v5190 = vpop.f32.mrb[0].mxu0
  %v5191 = vadd.f32 %v3835, %v5190
  %v5192 = vpop.f32.mrb[0].mxu0
  %v5193 = vadd.f32 %v3839, %v5192
  %v5194 = vpop.f32.mrb[0].mxu0
  %v5195 = vadd.f32 %v3835, %v5194
  %v5196 = vpop.f32.mrb[0].mxu0
  %v5197 = vadd.f32 %v3839, %v5196
  %5198 = vdwg.mxu0
  %5199 = vmatprep.subr.bf16.mxu0 %v4650
  %5200 = vmatpush1.bf16.msra.mxu0 %v4649
  %5201 = vmatprep.subr.bf16.mxu0 %v4657
  %5202 = vmatpush1.bf16.msra.mxu0 %v4656
  %5203 = vmatprep.subr.bf16.mxu0 %v4664
  %5204 = vmatpush1.bf16.msra.mxu0 %v4663
  %5205 = vmatprep.subr.bf16.mxu0 %v4671
  %5206 = vmatpush1.bf16.msra.mxu0 %v4670
  %5207 = vmatprep.subr.bf16.mxu0 %v4678
  %5208 = vmatpush1.bf16.msra.mxu0 %v4677
  %5209 = vmatprep.subr.bf16.mxu0 %v4685
  %5210 = vmatpush1.bf16.msra.mxu0 %v4684
  %5211 = vmatprep.subr.bf16.mxu0 %v4692
  %5212 = vmatpush1.bf16.msra.mxu0 %v4691
  %5213 = vmatprep.subr.bf16.mxu0 %v4699
  %5214 = vmatpush1.bf16.msra.mxu0 %v4698
  %5215 = vmatprep.subr.bf16.mxu0 %v4706
  %5216 = vmatpush1.bf16.msra.mxu0 %v4705
  %5217 = vmatprep.subr.bf16.mxu0 %v4713
  %5218 = vmatpush1.bf16.msra.mxu0 %v4712
  %5219 = vmatprep.subr.bf16.mxu0 %v4720
  %5220 = vmatpush1.bf16.msra.mxu0 %v4719
  %5221 = vmatprep.subr.bf16.mxu0 %v4727
  %5222 = vmatpush1.bf16.msra.mxu0 %v4726
  %5223 = vmatprep.subr.bf16.mxu0 %v4734
  %5224 = vmatpush1.bf16.msra.mxu0 %v4733
  %5225 = vmatprep.subr.bf16.mxu0 %v4741
  %5226 = vmatpush1.bf16.msra.mxu0 %v4740
  %5227 = vmatprep.subr.bf16.mxu0 %v4979
  %5228 = vmatpush1.bf16.msra.mxu0 %v4976
  %5229 = vmatprep.subr.bf16.mxu0 0
  %5230 = vmatpush1.bf16.msra.mxu0 0
  %5231 = vmatprep.mubr.bf16.mxu0 %v4961
  %5232 = vmatmul.mubr.bf16.gmra.mrb[0].mxu0 %v3564
  %v5233 = vpop.f32.mrb[0].mxu0
  %v5234 = vadd.f32 %v5191, %v5233
  %v5235 = vpop.f32.mrb[0].mxu0
  %v5236 = vadd.f32 %v5193, %v5235
  %v5237 = vpop.f32.mrb[0].mxu0
  %v5238 = vadd.f32 %v5195, %v5237
  %v5239 = vpop.f32.mrb[0].mxu0
  %v5240 = vadd.f32 %v5197, %v5239
  %5241 = vdwg.mxu0
  %5242 = vmatprep.subr.bf16.mxu0 0
  %5243 = vmatpush1.bf16.msra.mxu0 %v4539
  %5244 = vmatprep.subr.bf16.mxu0 0
  %5245 = vmatpush1.bf16.msra.mxu0 %v4546
  %5246 = vmatprep.subr.bf16.mxu0 0
  %5247 = vmatpush1.bf16.msra.mxu0 %v4553
  %5248 = vmatprep.subr.bf16.mxu0 0
  %5249 = vmatpush1.bf16.msra.mxu0 %v4560
  %5250 = vmatprep.subr.bf16.mxu0 0
  %5251 = vmatpush1.bf16.msra.mxu0 %v4567
  %5252 = vmatprep.subr.bf16.mxu0 0
  %5253 = vmatpush1.bf16.msra.mxu0 %v4574
  %5254 = vmatprep.subr.bf16.mxu0 0
  %5255 = vmatpush1.bf16.msra.mxu0 %v4581
  %5256 = vmatprep.subr.bf16.mxu0 0
  %5257 = vmatpush1.bf16.msra.mxu0 %v4588
  %5258 = vmatprep.subr.bf16.mxu0 0
  %5259 = vmatpush1.bf16.msra.mxu0 %v4595
  %5260 = vmatprep.subr.bf16.mxu0 0
  %5261 = vmatpush1.bf16.msra.mxu0 %v4602
  %5262 = vmatprep.subr.bf16.mxu0 0
  %5263 = vmatpush1.bf16.msra.mxu0 %v4609
  %5264 = vmatprep.subr.bf16.mxu0 0
  %5265 = vmatpush1.bf16.msra.mxu0 %v4616
  %5266 = vmatprep.subr.bf16.mxu0 0
  %5267 = vmatpush1.bf16.msra.mxu0 %v4623
  %5268 = vmatprep.subr.bf16.mxu0 0
  %5269 = vmatpush1.bf16.msra.mxu0 %v4630
  %5270 = vmatprep.subr.bf16.mxu0 0
  %5271 = vmatpush1.bf16.msra.mxu0 %v4637
  %5272 = vmatprep.subr.bf16.mxu0 0
  %5273 = vmatpush1.bf16.msra.mxu0 %v4644
  %5274 = vmatprep.mubr.bf16.mxu0 %v3563
  %5275 = vmatmul.mubr.bf16.gmra.mrb[0].mxu0 %v3562
  %v5276 = vpop.f32.mrb[0].mxu0
  %v5277 = vadd.f32 %v3843, %v5276
  %v5278 = vpop.f32.mrb[0].mxu0
  %v5279 = vpop.f32.mrb[0].mxu0
  %v5280 = vadd.f32 %v3843, %v5279
  %v5281 = vpop.f32.mrb[0].mxu0
  %5282 = vdwg.mxu0
  %5283 = vmatprep.subr.bf16.mxu0 0
  %5284 = vmatpush1.bf16.msra.mxu0 %v4651
  %5285 = vmatprep.subr.bf16.mxu0 0
  %5286 = vmatpush1.bf16.msra.mxu0 %v4658
  %5287 = vmatprep.subr.bf16.mxu0 0
  %5288 = vmatpush1.bf16.msra.mxu0 %v4665
  %5289 = vmatprep.subr.bf16.mxu0 0
  %5290 = vmatpush1.bf16.msra.mxu0 %v4672
  %5291 = vmatprep.subr.bf16.mxu0 0
  %5292 = vmatpush1.bf16.msra.mxu0 %v4679
  %5293 = vmatprep.subr.bf16.mxu0 0
  %5294 = vmatpush1.bf16.msra.mxu0 %v4686
  %5295 = vmatprep.subr.bf16.mxu0 0
  %5296 = vmatpush1.bf16.msra.mxu0 %v4693
  %5297 = vmatprep.subr.bf16.mxu0 0
  %5298 = vmatpush1.bf16.msra.mxu0 %v4700
  %5299 = vmatprep.subr.bf16.mxu0 0
  %5300 = vmatpush1.bf16.msra.mxu0 %v4707
  %5301 = vmatprep.subr.bf16.mxu0 0
  %5302 = vmatpush1.bf16.msra.mxu0 %v4714
  %5303 = vmatprep.subr.bf16.mxu0 0
  %5304 = vmatpush1.bf16.msra.mxu0 %v4721
  %5305 = vmatprep.subr.bf16.mxu0 0
  %5306 = vmatpush1.bf16.msra.mxu0 %v4728
  %5307 = vmatprep.subr.bf16.mxu0 0
  %5308 = vmatpush1.bf16.msra.mxu0 %v4735
  %5309 = vmatprep.subr.bf16.mxu0 0
  %5310 = vmatpush1.bf16.msra.mxu0 %v4742
  %5311 = vmatprep.subr.bf16.mxu0 0
  %5312 = vmatpush1.bf16.msra.mxu0 %v4982
  %5313 = vmatprep.subr.bf16.mxu0 0
  %5314 = vmatpush1.bf16.msra.mxu0 0
  %5315 = vmatprep.mubr.bf16.mxu0 %v4961
  %5316 = vmatmul.mubr.bf16.gmra.mrb[0].mxu0 %v3564
  %v5317 = vpop.f32.mrb[0].mxu0
  %v5318 = vadd.f32 %v5277, %v5317
  %v5319 = vpop.f32.mrb[0].mxu0
  %v5320 = vpop.f32.mrb[0].mxu0
  %v5321 = vadd.f32 %v5280, %v5320
  %v5322 = vpop.f32.mrb[0].mxu0
  %5323 = vdwg.mxu0
  %v5324 = vsub.f32 0.0, %v5062
  %v5325 = vsub.f32 0.0, %v5064
  %v5326 = vsub.f32 0.0, %v5148
  %v5327 = vsub.f32 0.0, %v5150
  %v5328 = vsub.f32 0.0, %v5234
  %v5329 = vsub.f32 0.0, %v5236
  %v5330 = vsub.f32 0.0, %v5318
  %v5331 = vsub.f32 0.0, %v5066
  %v5332 = vsub.f32 0.0, %v5068
  %v5333 = vsub.f32 0.0, %v5152
  %v5334 = vsub.f32 0.0, %v5154
  %v5335 = vsub.f32 0.0, %v5238
  %v5336 = vsub.f32 0.0, %v5240
  %v5337 = vsub.f32 0.0, %v5321
  %v5338 = vmul.f32 %v5324, 1.442695
  %v5339 = vpow.pop %v5338
  %v5340 = vmul.f32 %v5325, 1.442695
  %v5341 = vpow.pop %v5340
  %v5342 = vmul.f32 %v5326, 1.442695
  %v5343 = vpow.pop %v5342
  %v5344 = vmul.f32 %v5327, 1.442695
  %v5345 = vpow.pop %v5344
  %v5346 = vmul.f32 %v5328, 1.442695
  %v5347 = vpow.pop %v5346
  %v5348 = vmul.f32 %v5329, 1.442695
  %v5349 = vpow.pop %v5348
  %v5350 = vmul.f32 %v5330, 1.442695
  %v5351 = vpow.pop %v5350
  %v5352 = vmul.f32 %v5331, 1.442695
  %v5353 = vpow.pop %v5352
  %v5354 = vmul.f32 %v5332, 1.442695
  %v5355 = vpow.pop %v5354
  %v5356 = vmul.f32 %v5333, 1.442695
  %v5357 = vpow.pop %v5356
  %v5358 = vmul.f32 %v5334, 1.442695
  %v5359 = vpow.pop %v5358
  %v5360 = vmul.f32 %v5335, 1.442695
  %v5361 = vpow.pop %v5360
  %v5362 = vmul.f32 %v5336, 1.442695
  %v5363 = vpow.pop %v5362
  %v5364 = vmul.f32 %v5337, 1.442695
  %v5365 = vpow.pop %v5364
  %v5366 = vadd.f32 %v5339, 1.0
  %v5367 = vadd.f32 %v5341, 1.0
  %v5368 = vadd.f32 %v5343, 1.0
  %v5369 = vadd.f32 %v5345, 1.0
  %v5370 = vadd.f32 %v5347, 1.0
  %v5371 = vadd.f32 %v5349, 1.0
  %v5372 = vadd.f32 %v5351, 1.0
  %v5373 = vadd.f32 %v5353, 1.0
  %v5374 = vadd.f32 %v5355, 1.0
  %v5375 = vadd.f32 %v5357, 1.0
  %v5376 = vadd.f32 %v5359, 1.0
  %v5377 = vadd.f32 %v5361, 1.0
  %v5378 = vadd.f32 %v5363, 1.0
  %v5379 = vadd.f32 %v5365, 1.0
  %v5380 = vrcp.pop %v5366
  %v5381 = vrcp.pop %v5367
  %v5382 = vrcp.pop %v5368
  %v5383 = vrcp.pop %v5369
  %v5384 = vrcp.pop %v5370
  %v5385 = vrcp.pop %v5371
  %v5386 = vrcp.pop %v5372
  %v5387 = vrcp.pop %v5373
  %v5388 = vrcp.pop %v5374
  %v5389 = vrcp.pop %v5375
  %v5390 = vrcp.pop %v5376
  %v5391 = vrcp.pop %v5377
  %v5392 = vrcp.pop %v5378
  %v5393 = vrcp.pop %v5379
  %v5394 = vpack.c.bf16 %v5387, %v5380
  %v5395 = vpack.c.bf16 %v5388, %v5381
  %v5396 = vpack.c.bf16 %v5389, %v5382
  %v5397 = vpack.c.bf16 %v5390, %v5383
  %v5398 = vpack.c.bf16 %v5391, %v5384
  %v5399 = vpack.c.bf16 %v5392, %v5385
  %v5400 = vpack.c.bf16 %v5393, %v5386
  %v5401 = vld [vmem:[%s16] sm:$0xff]
  %v5402 = vld [vmem:[%s16 + $0x8] sm:$0xff]
  %v5403 = vld [vmem:[%s16 + $0x10] sm:$0xff]
  %v5404 = vld [vmem:[%s16 + $0x18] sm:$0xff]
  %v5405 = vld [vmem:[%s16 + $0x20] sm:$0xff]
  %v5406 = vld [vmem:[%s16 + $0x28] sm:$0xff]
  %v5407 = vld [vmem:[%s16 + $0x30] sm:$0xff]
  %v5408 = vld [vmem:[%s16 + $0x38] sm:$0xff]
  %v5409 = vld [vmem:[%s16 + $0x40] sm:$0xff]
  %v5410 = vld [vmem:[%s16 + $0x48] sm:$0xff]
  %v5411 = vld [vmem:[%s16 + $0x50] sm:$0xff]
  %v5412 = vld [vmem:[%s16 + $0x58] sm:$0xff]
  %v5413 = vld [vmem:[%s16 + $0x60] sm:$0xff]
  %v5414 = vld [vmem:[%s16 + $0x68] sm:$0xff]
  %v5415 = vld [vmem:[%s16 + $0x70] sm:$0xff]
  %v5416 = vld [vmem:[%s16 + $0x78] sm:$0xff]
  %v5417 = vld [vmem:[%s16 + $0x80] sm:$0xff]
  %v5418 = vld [vmem:[%s16 + $0x88] sm:$0xff]
  %v5419 = vld [vmem:[%s16 + $0x90] sm:$0xff]
  %v5420 = vld [vmem:[%s16 + $0x98] sm:$0xff]
  %v5421 = vld [vmem:[%s16 + $0xa0] sm:$0xff]
  %v5422 = vld [vmem:[%s16 + $0xa8] sm:$0xff]
  %v5423 = vld [vmem:[%s16 + $0xb0] sm:$0xff]
  %v5424 = vld [vmem:[%s16 + $0xb8] sm:$0xff]
  %v5425 = vld [vmem:[%s16 + $0xc0] sm:$0xff]
  %v5426 = vld [vmem:[%s16 + $0xc8] sm:$0xff]
  %v5427 = vld [vmem:[%s16 + $0xd0] sm:$0xff]
  %v5428 = vld [vmem:[%s16 + $0xd8] sm:$0xff]
  %v5429 = vld [vmem:[%s16 + $0xe0] sm:$0xff]
  %v5430 = vld [vmem:[%s16 + $0xe8] sm:$0xff]
  %v5431 = vld [vmem:[%s16 + $0xf0] sm:$0xff]
  %v5432 = vld [vmem:[%s16 + $0xf8] sm:$0xff]
  %v5433 = vld [vmem:[%s16 + $0x100] sm:$0xff]
  %v5434 = vld [vmem:[%s16 + $0x108] sm:$0xff]
  %v5435 = vld [vmem:[%s16 + $0x110] sm:$0xff]
  %v5436 = vld [vmem:[%s16 + $0x118] sm:$0xff]
  %v5437 = vld [vmem:[%s16 + $0x120] sm:$0xff]
  %v5438 = vld [vmem:[%s16 + $0x128] sm:$0xff]
  %v5439 = vld [vmem:[%s16 + $0x130] sm:$0xff]
  %v5440 = vld [vmem:[%s16 + $0x138] sm:$0xff]
  %v5441 = vld [vmem:[%s16 + $0x140] sm:$0xff]
  %v5442 = vld [vmem:[%s16 + $0x148] sm:$0xff]
  %v5443 = vld [vmem:[%s16 + $0x150] sm:$0xff]
  %v5444 = vld [vmem:[%s16 + $0x158] sm:$0xff]
  %v5445 = vld [vmem:[%s16 + $0x160] sm:$0xff]
  %v5446 = vld [vmem:[%s16 + $0x168] sm:$0xff]
  %v5447 = vld [vmem:[%s16 + $0x170] sm:$0xff]
  %v5448 = vld [vmem:[%s16 + $0x178] sm:$0xff]
  %v5449 = vld [vmem:[%s16 + $0x180] sm:$0xff]
  %v5450 = vld [vmem:[%s16 + $0x188] sm:$0xff]
  %v5451 = vld [vmem:[%s16 + $0x190] sm:$0xff]
  %v5452 = vld [vmem:[%s16 + $0x198] sm:$0xff]
  %v5453 = vld [vmem:[%s16 + $0x1a0] sm:$0xff]
  %v5454 = vld [vmem:[%s16 + $0x1a8] sm:$0xff]
  %v5455 = vld [vmem:[%s16 + $0x1b0] sm:$0xff]
  %v5456 = vld [vmem:[%s16 + $0x1b8] sm:$0xff]
  %v5457 = vld [vmem:[%s16 + $0x1c0] sm:$0xff]
  %v5458 = vld [vmem:[%s16 + $0x1c8] sm:$0xff]
  %v5459 = vld [vmem:[%s16 + $0x1d0] sm:$0xff]
  %v5460 = vld [vmem:[%s16 + $0x1d8] sm:$0xff]
  %v5461 = vld [vmem:[%s16 + $0x1e0] sm:$0xff]
  %v5462 = vld [vmem:[%s16 + $0x1e8] sm:$0xff]
  %v5463 = vld [vmem:[%s16 + $0x1f0] sm:$0xff]
  %v5464 = vld [vmem:[%s16 + $0x1f8] sm:$0xff]
  %v5465 = vld [vmem:[%s16 + $0x200] sm:$0xff]
  %v5466 = vld [vmem:[%s16 + $0x208] sm:$0xff]
  %v5467 = vld [vmem:[%s16 + $0x210] sm:$0xff]
  %v5468 = vld [vmem:[%s16 + $0x218] sm:$0xff]
  %v5469 = vld [vmem:[%s16 + $0x220] sm:$0xff]
  %v5470 = vld [vmem:[%s16 + $0x228] sm:$0xff]
  %v5471 = vld [vmem:[%s16 + $0x230] sm:$0xff]
  %v5472 = vld [vmem:[%s16 + $0x238] sm:$0xff]
  %v5473 = vld [vmem:[%s16 + $0x240] sm:$0xff]
  %v5474 = vld [vmem:[%s16 + $0x248] sm:$0xff]
  %v5475 = vld [vmem:[%s16 + $0x250] sm:$0xff]
  %v5476 = vld [vmem:[%s16 + $0x258] sm:$0xff]
  %v5477 = vld [vmem:[%s16 + $0x260] sm:$0xff]
  %v5478 = vld [vmem:[%s16 + $0x268] sm:$0xff]
  %v5479 = vld [vmem:[%s16 + $0x270] sm:$0xff]
  %v5480 = vld [vmem:[%s16 + $0x278] sm:$0xff]
  %v5481 = vld [vmem:[%s16 + $0x280] sm:$0xff]
  %v5482 = vld [vmem:[%s16 + $0x288] sm:$0xff]
  %v5483 = vld [vmem:[%s16 + $0x290] sm:$0xff]
  %v5484 = vld [vmem:[%s16 + $0x298] sm:$0xff]
  %v5485 = vld [vmem:[%s16 + $0x2a0] sm:$0xff]
  %v5486 = vld [vmem:[%s16 + $0x2a8] sm:$0xff]
  %v5487 = vld [vmem:[%s16 + $0x2b0] sm:$0xff]
  %v5488 = vld [vmem:[%s16 + $0x2b8] sm:$0xff]
  %v5489 = vld [vmem:[%s16 + $0x2c0] sm:$0xff]
  %v5490 = vld [vmem:[%s16 + $0x2c8] sm:$0xff]
  %v5491 = vld [vmem:[%s16 + $0x2d0] sm:$0xff]
  %v5492 = vld [vmem:[%s16 + $0x2d8] sm:$0xff]
  %v5493 = vld [vmem:[%s16 + $0x2e0] sm:$0xff]
  %v5494 = vld [vmem:[%s16 + $0x2e8] sm:$0xff]
  %v5495 = vld [vmem:[%s16 + $0x2f0] sm:$0xff]
  %v5496 = vld [vmem:[%s16 + $0x2f8] sm:$0xff]
  %v5497 = vld [vmem:[%s16 + $0x300] sm:$0xff]
  %v5498 = vld [vmem:[%s16 + $0x308] sm:$0xff]
  %v5499 = vld [vmem:[%s16 + $0x310] sm:$0xff]
  %v5500 = vld [vmem:[%s16 + $0x318] sm:$0xff]
  %v5501 = vld [vmem:[%s16 + $0x320] sm:$0xff]
  %v5502 = vld [vmem:[%s16 + $0x328] sm:$0xff]
  %v5503 = vld [vmem:[%s16 + $0x330] sm:$0xff]
  %v5504 = vld [vmem:[%s16 + $0x338] sm:$0xff]
  %v5505 = vld [vmem:[%s16 + $0x340] sm:$0xff]
  %v5506 = vld [vmem:[%s16 + $0x348] sm:$0x77]
  %v5507 = vld [vmem:[%s17] sm:$0x3]
  %v5509 = vlaneseq
  %v5510 = vshrl.u32 %v5509, 7
  %v5511 = vsub.s32 0, %v5510
  %v5512 = vrot.slane %v5507, %v5511
  %v5513 = vlaneseq
  %v5514 = vshrl.u32 %v5513, 7
  %v5515 = vsub.s32 1, %v5514
  %v5516 = vrot.slane %v5507, %v5515
  %v5625 = vunpack.c.l.b16 %v5401
  %v5626 = vunpack.c.h.b16 %v5401
  %v5627 = vunpack.c.l.b16 %v5402
  %v5628 = vunpack.c.h.b16 %v5402
  %v5629 = vunpack.c.l.b16 %v5403
  %v5630 = vunpack.c.h.b16 %v5403
  %v5631 = vunpack.c.l.b16 %v5404
  %v5632 = vunpack.c.h.b16 %v5404
  %v5633 = vunpack.c.l.b16 %v5405
  %v5634 = vunpack.c.h.b16 %v5405
  %v5635 = vunpack.c.l.b16 %v5406
  %v5636 = vunpack.c.h.b16 %v5406
  %v5637 = vunpack.c.l.b16 %v5407
  %v5638 = vunpack.c.h.b16 %v5407
  %v5639 = vunpack.c.l.b16 %v5408
  %v5640 = vunpack.c.h.b16 %v5408
  %v5641 = vunpack.c.l.b16 %v5409
  %v5642 = vunpack.c.h.b16 %v5409
  %v5643 = vunpack.c.l.b16 %v5410
  %v5644 = vunpack.c.h.b16 %v5410
  %v5645 = vunpack.c.l.b16 %v5411
  %v5646 = vunpack.c.h.b16 %v5411
  %v5647 = vunpack.c.l.b16 %v5412
  %v5648 = vunpack.c.h.b16 %v5412
  %v5649 = vunpack.c.l.b16 %v5413
  %v5650 = vunpack.c.h.b16 %v5413
  %v5651 = vunpack.c.l.b16 %v5414
  %v5652 = vunpack.c.h.b16 %v5414
  %v5653 = vunpack.c.l.b16 %v5415
  %v5654 = vunpack.c.h.b16 %v5415
  %v5655 = vunpack.c.l.b16 %v5416
  %v5656 = vunpack.c.h.b16 %v5416
  %v5657 = vunpack.c.l.b16 %v5417
  %v5658 = vunpack.c.h.b16 %v5417
  %v5659 = vunpack.c.l.b16 %v5418
  %v5660 = vunpack.c.h.b16 %v5418
  %v5661 = vunpack.c.l.b16 %v5419
  %v5662 = vunpack.c.h.b16 %v5419
  %v5663 = vunpack.c.l.b16 %v5420
  %v5664 = vunpack.c.h.b16 %v5420
  %v5665 = vunpack.c.l.b16 %v5421
  %v5666 = vunpack.c.h.b16 %v5421
  %v5667 = vunpack.c.l.b16 %v5422
  %v5668 = vunpack.c.h.b16 %v5422
  %v5669 = vunpack.c.l.b16 %v5423
  %v5670 = vunpack.c.h.b16 %v5423
  %v5671 = vunpack.c.l.b16 %v5424
  %v5672 = vunpack.c.h.b16 %v5424
  %v5673 = vunpack.c.l.b16 %v5425
  %v5674 = vunpack.c.h.b16 %v5425
  %v5675 = vunpack.c.l.b16 %v5426
  %v5676 = vunpack.c.h.b16 %v5426
  %v5677 = vunpack.c.l.b16 %v5427
  %v5678 = vunpack.c.h.b16 %v5427
  %v5679 = vunpack.c.l.b16 %v5428
  %v5680 = vunpack.c.h.b16 %v5428
  %v5681 = vunpack.c.l.b16 %v5429
  %v5682 = vunpack.c.h.b16 %v5429
  %v5683 = vunpack.c.l.b16 %v5430
  %v5684 = vunpack.c.h.b16 %v5430
  %v5685 = vunpack.c.l.b16 %v5431
  %v5686 = vunpack.c.h.b16 %v5431
  %v5687 = vunpack.c.l.b16 %v5432
  %v5688 = vunpack.c.h.b16 %v5432
  %v5689 = vunpack.c.l.b16 %v5433
  %v5690 = vunpack.c.h.b16 %v5433
  %v5691 = vunpack.c.l.b16 %v5434
  %v5692 = vunpack.c.h.b16 %v5434
  %v5693 = vunpack.c.l.b16 %v5435
  %v5694 = vunpack.c.h.b16 %v5435
  %v5695 = vunpack.c.l.b16 %v5436
  %v5696 = vunpack.c.h.b16 %v5436
  %v5697 = vunpack.c.l.b16 %v5437
  %v5698 = vunpack.c.h.b16 %v5437
  %v5699 = vunpack.c.l.b16 %v5438
  %v5700 = vunpack.c.h.b16 %v5438
  %v5701 = vunpack.c.l.b16 %v5439
  %v5702 = vunpack.c.h.b16 %v5439
  %v5703 = vunpack.c.l.b16 %v5440
  %v5704 = vunpack.c.h.b16 %v5440
  %v5705 = vunpack.c.l.b16 %v5441
  %v5706 = vunpack.c.h.b16 %v5441
  %v5707 = vunpack.c.l.b16 %v5442
  %v5708 = vunpack.c.h.b16 %v5442
  %v5709 = vunpack.c.l.b16 %v5443
  %v5710 = vunpack.c.h.b16 %v5443
  %v5711 = vunpack.c.l.b16 %v5444
  %v5712 = vunpack.c.h.b16 %v5444
  %v5713 = vunpack.c.l.b16 %v5445
  %v5714 = vunpack.c.h.b16 %v5445
  %v5715 = vunpack.c.l.b16 %v5446
  %v5716 = vunpack.c.h.b16 %v5446
  %v5717 = vunpack.c.l.b16 %v5447
  %v5718 = vunpack.c.h.b16 %v5447
  %v5719 = vunpack.c.l.b16 %v5448
  %v5720 = vunpack.c.h.b16 %v5448
  %v5721 = vunpack.c.l.b16 %v5449
  %v5722 = vunpack.c.h.b16 %v5449
  %v5723 = vunpack.c.l.b16 %v5450
  %v5724 = vunpack.c.h.b16 %v5450
  %v5725 = vunpack.c.l.b16 %v5451
  %v5726 = vunpack.c.h.b16 %v5451
  %v5727 = vunpack.c.l.b16 %v5452
  %v5728 = vunpack.c.h.b16 %v5452
  %v5729 = vunpack.c.l.b16 %v5453
  %v5730 = vunpack.c.h.b16 %v5453
  %v5731 = vunpack.c.l.b16 %v5454
  %v5732 = vunpack.c.h.b16 %v5454
  %v5733 = vunpack.c.l.b16 %v5455
  %v5734 = vunpack.c.h.b16 %v5455
  %v5735 = vunpack.c.l.b16 %v5456
  %v5736 = vunpack.c.h.b16 %v5456
  %v5737 = vunpack.c.l.b16 %v5457
  %v5738 = vunpack.c.h.b16 %v5457
  %v5739 = vunpack.c.l.b16 %v5458
  %v5740 = vunpack.c.h.b16 %v5458
  %v5741 = vunpack.c.l.b16 %v5459
  %v5742 = vunpack.c.h.b16 %v5459
  %v5743 = vunpack.c.l.b16 %v5460
  %v5744 = vunpack.c.h.b16 %v5460
  %v5745 = vunpack.c.l.b16 %v5461
  %v5746 = vunpack.c.h.b16 %v5461
  %v5747 = vunpack.c.l.b16 %v5462
  %v5748 = vunpack.c.h.b16 %v5462
  %v5749 = vunpack.c.l.b16 %v5463
  %v5750 = vunpack.c.h.b16 %v5463
  %v5751 = vunpack.c.l.b16 %v5464
  %v5752 = vunpack.c.h.b16 %v5464
  %v5753 = vunpack.c.l.b16 %v5465
  %v5754 = vunpack.c.h.b16 %v5465
  %v5755 = vunpack.c.l.b16 %v5466
  %v5756 = vunpack.c.h.b16 %v5466
  %v5757 = vunpack.c.l.b16 %v5467
  %v5758 = vunpack.c.h.b16 %v5467
  %v5759 = vunpack.c.l.b16 %v5468
  %v5760 = vunpack.c.h.b16 %v5468
  %v5761 = vunpack.c.l.b16 %v5469
  %v5762 = vunpack.c.h.b16 %v5469
  %v5763 = vunpack.c.l.b16 %v5470
  %v5764 = vunpack.c.h.b16 %v5470
  %v5765 = vunpack.c.l.b16 %v5471
  %v5766 = vunpack.c.h.b16 %v5471
  %v5767 = vunpack.c.l.b16 %v5472
  %v5768 = vunpack.c.h.b16 %v5472
  %v5769 = vunpack.c.l.b16 %v5473
  %v5770 = vunpack.c.h.b16 %v5473
  %v5771 = vunpack.c.l.b16 %v5474
  %v5772 = vunpack.c.h.b16 %v5474
  %v5773 = vunpack.c.l.b16 %v5475
  %v5774 = vunpack.c.h.b16 %v5475
  %v5775 = vunpack.c.l.b16 %v5476
  %v5776 = vunpack.c.h.b16 %v5476
  %v5777 = vunpack.c.l.b16 %v5477
  %v5778 = vunpack.c.h.b16 %v5477
  %v5779 = vunpack.c.l.b16 %v5478
  %v5780 = vunpack.c.h.b16 %v5478
  %v5781 = vunpack.c.l.b16 %v5479
  %v5782 = vunpack.c.h.b16 %v5479
  %v5783 = vunpack.c.l.b16 %v5480
  %v5784 = vunpack.c.h.b16 %v5480
  %v5785 = vunpack.c.l.b16 %v5481
  %v5786 = vunpack.c.h.b16 %v5481
  %v5787 = vunpack.c.l.b16 %v5482
  %v5788 = vunpack.c.h.b16 %v5482
  %v5789 = vunpack.c.l.b16 %v5483
  %v5790 = vunpack.c.h.b16 %v5483
  %v5791 = vunpack.c.l.b16 %v5484
  %v5792 = vunpack.c.h.b16 %v5484
  %v5793 = vunpack.c.l.b16 %v5485
  %v5794 = vunpack.c.h.b16 %v5485
  %v5795 = vunpack.c.l.b16 %v5486
  %v5796 = vunpack.c.h.b16 %v5486
  %v5797 = vunpack.c.l.b16 %v5487
  %v5798 = vunpack.c.h.b16 %v5487
  %v5799 = vunpack.c.l.b16 %v5488
  %v5800 = vunpack.c.h.b16 %v5488
  %v5801 = vunpack.c.l.b16 %v5489
  %v5802 = vunpack.c.h.b16 %v5489
  %v5803 = vunpack.c.l.b16 %v5490
  %v5804 = vunpack.c.h.b16 %v5490
  %v5805 = vunpack.c.l.b16 %v5491
  %v5806 = vunpack.c.h.b16 %v5491
  %v5807 = vunpack.c.l.b16 %v5492
  %v5808 = vunpack.c.h.b16 %v5492
  %v5809 = vunpack.c.l.b16 %v5493
  %v5810 = vunpack.c.h.b16 %v5493
  %v5811 = vunpack.c.l.b16 %v5494
  %v5812 = vunpack.c.h.b16 %v5494
  %v5813 = vunpack.c.l.b16 %v5495
  %v5814 = vunpack.c.h.b16 %v5495
  %v5815 = vunpack.c.l.b16 %v5496
  %v5816 = vunpack.c.h.b16 %v5496
  %v5817 = vunpack.c.l.b16 %v5497
  %v5818 = vunpack.c.h.b16 %v5497
  %v5819 = vunpack.c.l.b16 %v5498
  %v5820 = vunpack.c.h.b16 %v5498
  %v5821 = vunpack.c.l.b16 %v5499
  %v5822 = vunpack.c.h.b16 %v5499
  %v5823 = vunpack.c.l.b16 %v5500
  %v5824 = vunpack.c.h.b16 %v5500
  %v5825 = vunpack.c.l.b16 %v5501
  %v5826 = vunpack.c.h.b16 %v5501
  %v5827 = vunpack.c.l.b16 %v5502
  %v5828 = vunpack.c.h.b16 %v5502
  %v5829 = vunpack.c.l.b16 %v5503
  %v5830 = vunpack.c.h.b16 %v5503
  %v5831 = vunpack.c.l.b16 %v5504
  %v5832 = vunpack.c.h.b16 %v5504
  %v5833 = vunpack.c.l.b16 %v5505
  %v5834 = vunpack.c.h.b16 %v5505
  %v5835 = vunpack.c.l.b16 %v5506
  %v5836 = vunpack.c.h.b16 %v5506
  %v5837 = vpack.c.b16 %v5627, %v5625
  %v5838 = vpack.c.b16 %v5628, %v5626
  %v5839 = vpack.c.b16 %v5631, %v5629
  %v5840 = vpack.c.b16 %v5632, %v5630
  %v5841 = vpack.c.b16 %v5635, %v5633
  %v5842 = vpack.c.b16 %v5636, %v5634
  %v5843 = vpack.c.b16 %v5639, %v5637
  %v5844 = vpack.c.b16 %v5640, %v5638
  %v5845 = vpack.c.b16 %v5643, %v5641
  %v5846 = vpack.c.b16 %v5644, %v5642
  %v5847 = vpack.c.b16 %v5647, %v5645
  %v5848 = vpack.c.b16 %v5648, %v5646
  %v5849 = vpack.c.b16 %v5651, %v5649
  %v5850 = vpack.c.b16 %v5652, %v5650
  %v5851 = vpack.c.b16 %v5655, %v5653
  %v5852 = vpack.c.b16 %v5656, %v5654
  %v5853 = vpack.c.b16 %v5659, %v5657
  %v5854 = vpack.c.b16 %v5660, %v5658
  %v5855 = vpack.c.b16 %v5663, %v5661
  %v5856 = vpack.c.b16 %v5664, %v5662
  %v5857 = vpack.c.b16 %v5667, %v5665
  %v5858 = vpack.c.b16 %v5668, %v5666
  %v5859 = vpack.c.b16 %v5671, %v5669
  %v5860 = vpack.c.b16 %v5672, %v5670
  %v5861 = vpack.c.b16 %v5675, %v5673
  %v5862 = vpack.c.b16 %v5676, %v5674
  %v5863 = vpack.c.b16 %v5679, %v5677
  %v5864 = vpack.c.b16 %v5680, %v5678
  %v5865 = vpack.c.b16 %v5683, %v5681
  %v5866 = vpack.c.b16 %v5684, %v5682
  %v5867 = vpack.c.b16 %v5687, %v5685
  %v5868 = vpack.c.b16 %v5688, %v5686
  %v5869 = vpack.c.b16 %v5691, %v5689
  %v5870 = vpack.c.b16 %v5692, %v5690
  %v5871 = vpack.c.b16 %v5695, %v5693
  %v5872 = vpack.c.b16 %v5696, %v5694
  %v5873 = vpack.c.b16 %v5699, %v5697
  %v5874 = vpack.c.b16 %v5700, %v5698
  %v5875 = vpack.c.b16 %v5703, %v5701
  %v5876 = vpack.c.b16 %v5704, %v5702
  %v5877 = vpack.c.b16 %v5707, %v5705
  %v5878 = vpack.c.b16 %v5708, %v5706
  %v5879 = vpack.c.b16 %v5711, %v5709
  %v5880 = vpack.c.b16 %v5712, %v5710
  %v5881 = vpack.c.b16 %v5715, %v5713
  %v5882 = vpack.c.b16 %v5716, %v5714
  %v5883 = vpack.c.b16 %v5719, %v5717
  %v5884 = vpack.c.b16 %v5720, %v5718
  %v5885 = vpack.c.b16 %v5723, %v5721
  %v5886 = vpack.c.b16 %v5724, %v5722
  %v5887 = vpack.c.b16 %v5727, %v5725
  %v5888 = vpack.c.b16 %v5728, %v5726
  %v5889 = vpack.c.b16 %v5731, %v5729
  %v5890 = vpack.c.b16 %v5732, %v5730
  %v5891 = vpack.c.b16 %v5735, %v5733
  %v5892 = vpack.c.b16 %v5736, %v5734
  %v5893 = vpack.c.b16 %v5739, %v5737
  %v5894 = vpack.c.b16 %v5740, %v5738
  %v5895 = vpack.c.b16 %v5743, %v5741
  %v5896 = vpack.c.b16 %v5744, %v5742
  %v5897 = vpack.c.b16 %v5747, %v5745
  %v5898 = vpack.c.b16 %v5748, %v5746
  %v5899 = vpack.c.b16 %v5751, %v5749
  %v5900 = vpack.c.b16 %v5752, %v5750
  %v5901 = vpack.c.b16 %v5755, %v5753
  %v5902 = vpack.c.b16 %v5756, %v5754
  %v5903 = vpack.c.b16 %v5759, %v5757
  %v5904 = vpack.c.b16 %v5760, %v5758
  %v5905 = vpack.c.b16 %v5763, %v5761
  %v5906 = vpack.c.b16 %v5764, %v5762
  %v5907 = vpack.c.b16 %v5767, %v5765
  %v5908 = vpack.c.b16 %v5768, %v5766
  %v5909 = vpack.c.b16 %v5771, %v5769
  %v5910 = vpack.c.b16 %v5772, %v5770
  %v5911 = vpack.c.b16 %v5775, %v5773
  %v5912 = vpack.c.b16 %v5776, %v5774
  %v5913 = vpack.c.b16 %v5779, %v5777
  %v5914 = vpack.c.b16 %v5780, %v5778
  %v5915 = vpack.c.b16 %v5783, %v5781
  %v5916 = vpack.c.b16 %v5784, %v5782
  %v5917 = vpack.c.b16 %v5787, %v5785
  %v5918 = vpack.c.b16 %v5788, %v5786
  %v5919 = vpack.c.b16 %v5791, %v5789
  %v5920 = vpack.c.b16 %v5792, %v5790
  %v5921 = vpack.c.b16 %v5795, %v5793
  %v5922 = vpack.c.b16 %v5796, %v5794
  %v5923 = vpack.c.b16 %v5799, %v5797
  %v5924 = vpack.c.b16 %v5800, %v5798
  %v5925 = vpack.c.b16 %v5803, %v5801
  %v5926 = vpack.c.b16 %v5804, %v5802
  %v5927 = vpack.c.b16 %v5807, %v5805
  %v5928 = vpack.c.b16 %v5808, %v5806
  %v5929 = vpack.c.b16 %v5811, %v5809
  %v5930 = vpack.c.b16 %v5812, %v5810
  %v5931 = vpack.c.b16 %v5815, %v5813
  %v5932 = vpack.c.b16 %v5816, %v5814
  %v5933 = vpack.c.b16 %v5819, %v5817
  %v5934 = vpack.c.b16 %v5820, %v5818
  %v5935 = vpack.c.b16 %v5823, %v5821
  %v5936 = vpack.c.b16 %v5824, %v5822
  %v5937 = vpack.c.b16 %v5827, %v5825
  %v5938 = vpack.c.b16 %v5828, %v5826
  %v5939 = vpack.c.b16 %v5831, %v5829
  %v5940 = vpack.c.b16 %v5832, %v5830
  %v5941 = vpack.c.b16 %v5835, %v5833
  %v5942 = vpack.c.b16 %v5836, %v5834
  %vm6047 = vcmask 629760
  %v6049 = vsel %vm6047, %v5400, 0
  %vm6051 = vcmask 1045504
  %vm6052 = vcmask 1046528
  %v6053 = vsel %vm6051, 4294967295, 65535
  %v6054 = vsel %vm6052, %v6053, 0
  %v6056 = vand.u32 %v5941, %v6054
  %v6059 = vand.u32 %v5942, %v6054
  %6061 = vmatprep.subr.bf16.mxu0 %v5838
  %6062 = vmatpush1.bf16.msra.mxu0 %v5837
  %6063 = vmatprep.subr.bf16.mxu0 %v5840
  %6064 = vmatpush1.bf16.msra.mxu0 %v5839
  %6065 = vmatprep.subr.bf16.mxu0 %v5842
  %6066 = vmatpush1.bf16.msra.mxu0 %v5841
  %6067 = vmatprep.subr.bf16.mxu0 %v5844
  %6068 = vmatpush1.bf16.msra.mxu0 %v5843
  %6069 = vmatprep.subr.bf16.mxu0 %v5846
  %6070 = vmatpush1.bf16.msra.mxu0 %v5845
  %6071 = vmatprep.subr.bf16.mxu0 %v5848
  %6072 = vmatpush1.bf16.msra.mxu0 %v5847
  %6073 = vmatprep.subr.bf16.mxu0 %v5850
  %6074 = vmatpush1.bf16.msra.mxu0 %v5849
  %6075 = vmatprep.subr.bf16.mxu0 %v5852
  %6076 = vmatpush1.bf16.msra.mxu0 %v5851
  %6077 = vmatprep.subr.bf16.mxu0 %v5854
  %6078 = vmatpush1.bf16.msra.mxu0 %v5853
  %6079 = vmatprep.subr.bf16.mxu0 %v5856
  %6080 = vmatpush1.bf16.msra.mxu0 %v5855
  %6081 = vmatprep.subr.bf16.mxu0 %v5858
  %6082 = vmatpush1.bf16.msra.mxu0 %v5857
  %6083 = vmatprep.subr.bf16.mxu0 %v5860
  %6084 = vmatpush1.bf16.msra.mxu0 %v5859
  %6085 = vmatprep.subr.bf16.mxu0 %v5862
  %6086 = vmatpush1.bf16.msra.mxu0 %v5861
  %6087 = vmatprep.subr.bf16.mxu0 %v5864
  %6088 = vmatpush1.bf16.msra.mxu0 %v5863
  %6089 = vmatprep.subr.bf16.mxu0 %v5866
  %6090 = vmatpush1.bf16.msra.mxu0 %v5865
  %6091 = vmatprep.subr.bf16.mxu0 %v5868
  %6092 = vmatpush1.bf16.msra.mxu0 %v5867
  %6093 = vmatprep.mubr.bf16.mxu0 %v5395
  %6094 = vmatmul.mubr.bf16.gmra.mrb[0].mxu0 %v5394
  %v6095 = vpop.f32.mrb[0].mxu0
  %v6096 = vadd.f32 %v5512, %v6095
  %v6097 = vpop.f32.mrb[0].mxu0
  %v6098 = vadd.f32 %v5516, %v6097
  %v6099 = vpop.f32.mrb[0].mxu0
  %v6100 = vadd.f32 %v5512, %v6099
  %v6101 = vpop.f32.mrb[0].mxu0
  %v6102 = vadd.f32 %v5516, %v6101
  %6103 = vdwg.mxu0
  %6104 = vmatprep.subr.bf16.mxu0 %v5870
  %6105 = vmatpush1.bf16.msra.mxu0 %v5869
  %6106 = vmatprep.subr.bf16.mxu0 %v5872
  %6107 = vmatpush1.bf16.msra.mxu0 %v5871
  %6108 = vmatprep.subr.bf16.mxu0 %v5874
  %6109 = vmatpush1.bf16.msra.mxu0 %v5873
  %6110 = vmatprep.subr.bf16.mxu0 %v5876
  %6111 = vmatpush1.bf16.msra.mxu0 %v5875
  %6112 = vmatprep.subr.bf16.mxu0 %v5878
  %6113 = vmatpush1.bf16.msra.mxu0 %v5877
  %6114 = vmatprep.subr.bf16.mxu0 %v5880
  %6115 = vmatpush1.bf16.msra.mxu0 %v5879
  %6116 = vmatprep.subr.bf16.mxu0 %v5882
  %6117 = vmatpush1.bf16.msra.mxu0 %v5881
  %6118 = vmatprep.subr.bf16.mxu0 %v5884
  %6119 = vmatpush1.bf16.msra.mxu0 %v5883
  %6120 = vmatprep.subr.bf16.mxu0 %v5886
  %6121 = vmatpush1.bf16.msra.mxu0 %v5885
  %6122 = vmatprep.subr.bf16.mxu0 %v5888
  %6123 = vmatpush1.bf16.msra.mxu0 %v5887
  %6124 = vmatprep.subr.bf16.mxu0 %v5890
  %6125 = vmatpush1.bf16.msra.mxu0 %v5889
  %6126 = vmatprep.subr.bf16.mxu0 %v5892
  %6127 = vmatpush1.bf16.msra.mxu0 %v5891
  %6128 = vmatprep.subr.bf16.mxu0 %v5894
  %6129 = vmatpush1.bf16.msra.mxu0 %v5893
  %6130 = vmatprep.subr.bf16.mxu0 %v5896
  %6131 = vmatpush1.bf16.msra.mxu0 %v5895
  %6132 = vmatprep.subr.bf16.mxu0 %v5898
  %6133 = vmatpush1.bf16.msra.mxu0 %v5897
  %6134 = vmatprep.subr.bf16.mxu0 %v5900
  %6135 = vmatpush1.bf16.msra.mxu0 %v5899
  %6136 = vmatprep.mubr.bf16.mxu0 %v5397
  %6137 = vmatmul.mubr.bf16.gmra.mrb[0].mxu0 %v5396
  %v6138 = vpop.f32.mrb[0].mxu0
  %v6139 = vadd.f32 %v6096, %v6138
  %v6140 = vpop.f32.mrb[0].mxu0
  %v6141 = vadd.f32 %v6098, %v6140
  %v6142 = vpop.f32.mrb[0].mxu0
  %v6143 = vadd.f32 %v6100, %v6142
  %v6144 = vpop.f32.mrb[0].mxu0
  %v6145 = vadd.f32 %v6102, %v6144
  %6146 = vdwg.mxu0
  %6147 = vmatprep.subr.bf16.mxu0 %v5902
  %6148 = vmatpush1.bf16.msra.mxu0 %v5901
  %6149 = vmatprep.subr.bf16.mxu0 %v5904
  %6150 = vmatpush1.bf16.msra.mxu0 %v5903
  %6151 = vmatprep.subr.bf16.mxu0 %v5906
  %6152 = vmatpush1.bf16.msra.mxu0 %v5905
  %6153 = vmatprep.subr.bf16.mxu0 %v5908
  %6154 = vmatpush1.bf16.msra.mxu0 %v5907
  %6155 = vmatprep.subr.bf16.mxu0 %v5910
  %6156 = vmatpush1.bf16.msra.mxu0 %v5909
  %6157 = vmatprep.subr.bf16.mxu0 %v5912
  %6158 = vmatpush1.bf16.msra.mxu0 %v5911
  %6159 = vmatprep.subr.bf16.mxu0 %v5914
  %6160 = vmatpush1.bf16.msra.mxu0 %v5913
  %6161 = vmatprep.subr.bf16.mxu0 %v5916
  %6162 = vmatpush1.bf16.msra.mxu0 %v5915
  %6163 = vmatprep.subr.bf16.mxu0 %v5918
  %6164 = vmatpush1.bf16.msra.mxu0 %v5917
  %6165 = vmatprep.subr.bf16.mxu0 %v5920
  %6166 = vmatpush1.bf16.msra.mxu0 %v5919
  %6167 = vmatprep.subr.bf16.mxu0 %v5922
  %6168 = vmatpush1.bf16.msra.mxu0 %v5921
  %6169 = vmatprep.subr.bf16.mxu0 %v5924
  %6170 = vmatpush1.bf16.msra.mxu0 %v5923
  %6171 = vmatprep.subr.bf16.mxu0 %v5926
  %6172 = vmatpush1.bf16.msra.mxu0 %v5925
  %6173 = vmatprep.subr.bf16.mxu0 %v5928
  %6174 = vmatpush1.bf16.msra.mxu0 %v5927
  %6175 = vmatprep.subr.bf16.mxu0 %v5930
  %6176 = vmatpush1.bf16.msra.mxu0 %v5929
  %6177 = vmatprep.subr.bf16.mxu0 %v5932
  %6178 = vmatpush1.bf16.msra.mxu0 %v5931
  %6179 = vmatprep.mubr.bf16.mxu0 %v5399
  %6180 = vmatmul.mubr.bf16.gmra.mrb[0].mxu0 %v5398
  %v6181 = vpop.f32.mrb[0].mxu0
  %v6182 = vadd.f32 %v6139, %v6181
  %v6183 = vpop.f32.mrb[0].mxu0
  %v6184 = vadd.f32 %v6141, %v6183
  %v6185 = vpop.f32.mrb[0].mxu0
  %v6186 = vadd.f32 %v6143, %v6185
  %v6187 = vpop.f32.mrb[0].mxu0
  %v6188 = vadd.f32 %v6145, %v6187
  %6189 = vdwg.mxu0
  %6190 = vmatprep.subr.bf16.mxu0 %v5934
  %6191 = vmatpush1.bf16.msra.mxu0 %v5933
  %6192 = vmatprep.subr.bf16.mxu0 %v5936
  %6193 = vmatpush1.bf16.msra.mxu0 %v5935
  %6194 = vmatprep.subr.bf16.mxu0 %v5938
  %6195 = vmatpush1.bf16.msra.mxu0 %v5937
  %6196 = vmatprep.subr.bf16.mxu0 %v5940
  %6197 = vmatpush1.bf16.msra.mxu0 %v5939
  %6198 = vmatprep.subr.bf16.mxu0 %v6059
  %6199 = vmatpush1.bf16.msra.mxu0 %v6056
  %6200 = vmatprep.subr.bf16.mxu0 0
  %6201 = vmatpush1.bf16.msra.mxu0 0
  %6202 = vmatprep.subr.bf16.mxu0 0
  %6203 = vmatpush1.bf16.msra.mxu0 0
  %6204 = vmatprep.subr.bf16.mxu0 0
  %6205 = vmatpush1.bf16.msra.mxu0 0
  %6206 = vmatprep.subr.bf16.mxu0 0
  %6207 = vmatpush1.bf16.msra.mxu0 0
  %6208 = vmatprep.subr.bf16.mxu0 0
  %6209 = vmatpush1.bf16.msra.mxu0 0
  %6210 = vmatprep.subr.bf16.mxu0 0
  %6211 = vmatpush1.bf16.msra.mxu0 0
  %6212 = vmatprep.subr.bf16.mxu0 0
  %6213 = vmatpush1.bf16.msra.mxu0 0
  %6214 = vmatprep.subr.bf16.mxu0 0
  %6215 = vmatpush1.bf16.msra.mxu0 0
  %6216 = vmatprep.subr.bf16.mxu0 0
  %6217 = vmatpush1.bf16.msra.mxu0 0
  %6218 = vmatprep.subr.bf16.mxu0 0
  %6219 = vmatpush1.bf16.msra.mxu0 0
  %6220 = vmatprep.subr.bf16.mxu0 0
  %6221 = vmatpush1.bf16.msra.mxu0 0
  %6222 = vmatprep.mubr.bf16.mxu0 0
  %6223 = vmatmul.mubr.bf16.gmra.mrb[0].mxu0 %v6049
  %v6224 = vpop.f32.mrb[0].mxu0
  %v6225 = vadd.f32 %v6182, %v6224
  %v6226 = vpop.f32.mrb[0].mxu0
  %v6227 = vadd.f32 %v6184, %v6226
  %v6228 = vpop.f32.mrb[0].mxu0
  %v6229 = vadd.f32 %v6186, %v6228
  %v6230 = vpop.f32.mrb[0].mxu0
  %v6231 = vadd.f32 %v6188, %v6230
  %6232 = vdwg.mxu0
  %v6233 = vsub.f32 0.0, %v6225
  %v6234 = vsub.f32 0.0, %v6227
  %v6235 = vsub.f32 0.0, %v6229
  %v6236 = vsub.f32 0.0, %v6231
  %v6237 = vmul.f32 %v6233, 1.442695
  %v6238 = vpow.pop %v6237
  %v6239 = vmul.f32 %v6234, 1.442695
  %v6240 = vpow.pop %v6239
  %v6241 = vmul.f32 %v6235, 1.442695
  %v6242 = vpow.pop %v6241
  %v6243 = vmul.f32 %v6236, 1.442695
  %v6244 = vpow.pop %v6243
  %v6245 = vadd.f32 %v6238, 1.0
  %v6246 = vadd.f32 %v6240, 1.0
  %v6247 = vadd.f32 %v6242, 1.0
  %v6248 = vadd.f32 %v6244, 1.0
  %v6249 = vrcp.pop %v6245
  %v6250 = vrcp.pop %v6246
  %v6251 = vrcp.pop %v6247
  %v6252 = vrcp.pop %v6248
  %v6253 = vpack.c.bf16 %v6251, %v6249
  %v6254 = vpack.c.bf16 %v6252, %v6250
  %v6257 = vunpack.c.l.b16 %v6253
  %v6258 = vunpack.c.l.b16 %v6254
  %v6259 = vunpack.c.h.b16 %v6253
  %v6260 = vunpack.c.h.b16 %v6254
  %v6261 = vpack.c.b16 %v6258, %v6257
  %v6262 = vpack.c.b16 %v6260, %v6259
  %vm6265 = vcmask 1043456
  %vm6266 = vcmask 556036
  %vm6267 = vmor %vm6266, %vm6265
  %6268 = vst.msk [vmem:[%s18] sm:$0xff] %vm6267, %v6261
  %6269 = vst.msk [vmem:[%s18 + $0x8] sm:$0xff] %vm6267, %v6262
  // Predicated region
  $region74: #{net_forward.1} parent=0 // pred_check
    _
  $region75: #{net_forward.1} parent=0 // pred_check_branch
    %6271 = sbr.rel (0) target = $region77
  $region76: #{net_forward.1} parent=0 // pred_region
    _
  $region77: #{net_forward.1} parent=0 // pred_fallthru
    _
  // Predicated region
  $region78: #{net_forward.1} parent=0 // pred_check
    _
  $region79: #{net_forward.1} parent=0 // pred_check_branch
    %6273 = sbr.rel (0) target = $region81
  $region80: #{net_forward.1} parent=0 // pred_region
    _
  $region81: #{net_forward.1} parent=0 // pred_fallthru
    _

</llo_original>
